<compile_context>
chip_gen: v7x
topology: tpu7x:2x2x1
jax: 0.10.0
libtpu: 0.0.40
codegen_flags: <defaults>
</compile_context>

<pallas_src>
import numpy as np

import jax
import jax.numpy as jnp
from jax import lax
from jax.experimental import pallas as pl
from jax.experimental.pallas import tpu as pltpu


# ---------------------------------------------------------------------------
# Kernels
# ---------------------------------------------------------------------------
def kan_hw_kernel(x_ref, w1_ref, b1_ref, w2_ref, hw_ref):
    """hw = sin(x @ W1 + b1) @ W2 for one (large) row tile; weights resident."""
    h1 = jnp.sin(
        jnp.dot(x_ref[...], w1_ref[...], preferred_element_type=jnp.float32)
        + b1_ref[...]
    )
    hw = jnp.dot(h1.astype(jnp.bfloat16), w2_ref[...],
                 preferred_element_type=jnp.float32)
    hw_ref[...] = hw.astype(hw_ref.dtype)


def make_gcn_cls_kernel(tk, max_nnz):
    """Block-sparse A_hat @ hw with hw fully VMEM-resident; fused epilogue."""

    def gcn_cls_kernel(cols_ref, valid_ref, adj_ref, hw_ref, b2_ref, w3_ref,
                       b3_ref, out_ref, acc_ref):
        i = pl.program_id(0)
        j = pl.program_id(1)
        flat = i * max_nnz + j

        @pl.when(j == 0)
        def _():
            acc_ref[...] = jnp.zeros_like(acc_ref)

        # Only accumulate for genuinely nonzero adjacency blocks.
        @pl.when(valid_ref[flat] == 1)
        def _():
            start = pl.multiple_of(cols_ref[flat] * tk, tk)
            hw_blk = hw_ref[pl.ds(start, tk), :]
            acc_ref[...] += jnp.dot(adj_ref[...], hw_blk,
                                    preferred_element_type=jnp.float32)

        @pl.when(j == pl.num_programs(1) - 1)
        def _():
            h2 = jnp.maximum(acc_ref[...] + b2_ref[...], 0.0)
            out_ref[...] = (
                jnp.dot(h2.astype(jnp.bfloat16), w3_ref[...],
                        preferred_element_type=jnp.float32)
                + b3_ref[...]
            ).astype(out_ref.dtype)

    return gcn_cls_kernel


# ---------------------------------------------------------------------------
# Glue (plain JAX / host-side setup)
# ---------------------------------------------------------------------------
def _round_up(x, m):
    return (x + m - 1) // m * m


def _pick_tile(n_pad, candidates, min_tiles=1):
    for c in candidates:
        if c <= n_pad and n_pad % c == 0 and n_pad // c >= min_tiles:
            return c
    return n_pad


def _vmem_limit_bytes():
    """Generation-aware scoped-VMEM limit (v7x: 64 MiB/TC, v5e/v6e: 128 MiB)."""
    try:
        cap = pltpu.get_tpu_info().vmem_capacity_bytes
        if cap:
            return int(min(cap - 8 * 1024 * 1024, 100 * 1024 * 1024))
    except Exception:
        pass
    return 48 * 1024 * 1024  # safe fallback on every generation


def build_norm_adj_padded(edge_index, num_nodes, n_pad):
    """D^{-1/2}(A+I)D^{-1/2}, built directly into the padded bf16 buffer."""
    src = edge_index[0]
    dst = edge_index[1]
    loop = jnp.arange(num_nodes, dtype=edge_index.dtype)
    src = jnp.concatenate([src, loop])
    dst = jnp.concatenate([dst, loop])
    deg = jnp.zeros((n_pad,), jnp.float32).at[dst].add(1.0)
    dinv = jnp.where(deg > 0, lax.rsqrt(deg), 0.0)
    w = (dinv[dst] * dinv[src]).astype(jnp.bfloat16)
    # Messages flow source -> target: A_hat[dst, src] = dinv[dst] * dinv[src]
    return jnp.zeros((n_pad, n_pad), jnp.bfloat16).at[dst, src].add(w)


def build_block_structure(edge_index, num_nodes, n_pad, tm, tk):
    """Host-side (concrete) nonzero-block list per row tile, built from edges."""
    src = np.asarray(edge_index[0])
    dst = np.asarray(edge_index[1])
    nodes = np.arange(num_nodes)
    rows = np.concatenate([dst, nodes]) // tm          # targets (+ self loops)
    cols = np.concatenate([src, nodes]) // tk          # sources (+ self loops)
    n_r, n_k = n_pad // tm, n_pad // tk
    nz = np.zeros((n_r, n_k), dtype=bool)
    nz[rows, cols] = True
    max_nnz = max(1, int(nz.sum(axis=1).max()))
    blk_cols = np.zeros((n_r, max_nnz), np.int32)
    blk_valid = np.zeros((n_r, max_nnz), np.int32)
    for i in range(n_r):
        c = np.nonzero(nz[i])[0]
        if c.size:
            blk_cols[i, :c.size] = c
            blk_valid[i, :c.size] = 1
            blk_cols[i, c.size:] = c[-1]   # repeat last -> pipeline skips re-fetch
    nnz = int(blk_valid.sum())
    return (jnp.asarray(blk_cols.reshape(-1)),
            jnp.asarray(blk_valid.reshape(-1)),
            max_nnz, nnz)


def kanguard_forward(x, edge_index, params):
    # NOTE: not jittable end-to-end — the block-sparsity structure is computed
    # on the host from concrete edge_index values (standard for graph kernels).
    n, in_f = x.shape
    hidden = params["w1"].shape[1]
    out_f = params["w3"].shape[1]

    h_pad = _round_up(max(hidden, 1), 128)
    o_pad = _round_up(max(out_f, 1), 128)
    n_pad = _round_up(n, 128)

    # Tile selection: >=256 where possible (256-wide MXU on v6e/v7x), but keep
    # >=2 row tiles so both v7x TensorCores get work on small graphs.
    tm = _pick_tile(n_pad, (512, 256, 128), min_tiles=2)
    tk = _pick_tile(n_pad, (2048, 1024, 512, 256, 128), min_tiles=1)
    tm1 = _pick_tile(n_pad, (1024, 512, 256, 128), min_tiles=1)
    n_row_tiles = n_pad // tm

    vmem_limit = _vmem_limit_bytes()

    adj_p = build_norm_adj_padded(edge_index, n, n_pad)
    blk_cols, blk_valid, max_nnz, nnz_blocks = build_block_structure(
        edge_index, n, n_pad, tm, tk)

    # Zero padding is inert: sin(0)=0, zero weight rows/cols and zero adjacency
    # rows/cols contribute nothing to the un-padded outputs we slice out.
    x_p = jnp.zeros((n_pad, in_f), jnp.bfloat16).at[:n].set(x.astype(jnp.bfloat16))
    w1 = jnp.zeros((in_f, h_pad), jnp.bfloat16).at[:, :hidden].set(
        params["w1"].astype(jnp.bfloat16))
    b1 = jnp.zeros((1, h_pad), jnp.float32).at[:, :hidden].set(params["b1"])
    w2 = jnp.zeros((h_pad, h_pad), jnp.bfloat16).at[:hidden, :hidden].set(
        params["w2"].astype(jnp.bfloat16))
    b2 = jnp.zeros((1, h_pad), jnp.float32).at[:, :hidden].set(params["b2"])
    w3 = jnp.zeros((h_pad, o_pad), jnp.bfloat16).at[:hidden, :out_f].set(
        params["w3"].astype(jnp.bfloat16))
    b3 = jnp.zeros((1, o_pad), jnp.float32).at[:, :out_f].set(params["b3"])

    # --- Phase 1: hw = sin(x @ W1 + b1) @ W2, a few large row tiles ---------
    flops1 = 2 * n_pad * in_f * h_pad + 2 * n_pad * h_pad * h_pad
    bytes1 = (n_pad * in_f * 2 + in_f * h_pad * 2 + h_pad * 4
              + h_pad * h_pad * 2 + n_pad * h_pad * 2)
    hw = pl.pallas_call(
        kan_hw_kernel,
        out_shape=jax.ShapeDtypeStruct((n_pad, h_pad), jnp.bfloat16),
        grid_spec=pltpu.PrefetchScalarGridSpec(
            num_scalar_prefetch=0,
            grid=(n_pad // tm1,),
            in_specs=[
                pl.BlockSpec((tm1, in_f), lambda i: (i, 0)),
                pl.BlockSpec((in_f, h_pad), lambda i: (0, 0)),
                pl.BlockSpec((1, h_pad), lambda i: (0, 0)),
                pl.BlockSpec((h_pad, h_pad), lambda i: (0, 0)),
            ],
            out_specs=pl.BlockSpec((tm1, h_pad), lambda i: (i, 0)),
        ),
        compiler_params=pltpu.CompilerParams(
            dimension_semantics=("parallel",),
            vmem_limit_bytes=vmem_limit),
        cost_estimate=pl.CostEstimate(
            flops=flops1, transcendentals=n_pad * h_pad, bytes_accessed=bytes1),
    )(x_p, w1, b1, w2)

    # --- Phase 2: block-sparse A_hat @ hw (+b2, ReLU, classifier fused) -----
    flops2 = 2 * nnz_blocks * tm * tk * h_pad + 2 * n_pad * h_pad * o_pad
    bytes2 = (nnz_blocks * tm * tk * 2        # only nonzero adjacency blocks
              + n_pad * h_pad * 2             # hw streamed once (VMEM-resident)
              + h_pad * o_pad * 2 + o_pad * 4 + h_pad * 4
              + n_pad * o_pad * 4)            # output
    out_pad = pl.pallas_call(
        make_gcn_cls_kernel(tk, max_nnz),
        out_shape=jax.ShapeDtypeStruct((n_pad, o_pad), jnp.float32),
        grid_spec=pltpu.PrefetchScalarGridSpec(
            num_scalar_prefetch=2,
            grid=(n_row_tiles, max_nnz),
            in_specs=[
                # nonzero adjacency block (i, blk_cols[i, j])
                pl.BlockSpec((tm, tk),
                             lambda i, j, cols, valid: (i, cols[i * max_nnz + j])),
                # hw fully VMEM-resident across the whole grid
                pl.BlockSpec((n_pad, h_pad), lambda i, j, cols, valid: (0, 0)),
                pl.BlockSpec((1, h_pad), lambda i, j, cols, valid: (0, 0)),
                pl.BlockSpec((h_pad, o_pad), lambda i, j, cols, valid: (0, 0)),
                pl.BlockSpec((1, o_pad), lambda i, j, cols, valid: (0, 0)),
            ],
            out_specs=pl.BlockSpec((tm, o_pad), lambda i, j, cols, valid: (i, 0)),
            scratch_shapes=[pltpu.VMEM((tm, h_pad), jnp.float32)],
        ),
        compiler_params=pltpu.CompilerParams(
            dimension_semantics=("parallel", "arbitrary"),
            vmem_limit_bytes=vmem_limit),
        cost_estimate=pl.CostEstimate(
            flops=flops2, transcendentals=0, bytes_accessed=bytes2),
    )(blk_cols, blk_valid, adj_p, hw, b2, w3, b3)

    logits = out_pad[:n, :out_f]
    # .squeeze() from the PyTorch module
    return jnp.squeeze(logits)


def init_params(key, in_features, hidden_dim, out_features):
    ks = jax.random.split(key, 6)
    # Stored as [in, out] (i.e. transpose of PyTorch Linear weight)
    return {
        "w1": jax.random.normal(ks[0], (in_features, hidden_dim), jnp.float32) * 0.1,
        "b1": jax.random.normal(ks[1], (1, hidden_dim), jnp.float32) * 0.1,
        "w2": jax.random.normal(ks[2], (hidden_dim, hidden_dim), jnp.float32) * 0.1,
        "b2": jax.random.normal(ks[3], (1, hidden_dim), jnp.float32) * 0.1,
        "w3": jax.random.normal(ks[4], (hidden_dim, out_features), jnp.float32) * 0.1,
        "b3": jax.random.normal(ks[5], (1, out_features), jnp.float32) * 0.1,
    }


if __name__ == "__main__":
    N = 256          # graph nodes (2 row tiles of 128 -> exercises megacore path)
    IN_F = 16        # in_features
    HIDDEN = 32      # hidden_dim (padded to 128 lanes inside the wrapper)
    OUT_F = 1        # out_features (classifier -> squeeze)

    key = jax.random.PRNGKey(0)
    kx, kp = jax.random.split(key)
    x = jax.random.normal(kx, (N, IN_F), jnp.float32)

    # Deterministic bidirectional ring graph on N nodes: edge_index is [2, E]
    src = jnp.arange(N, dtype=jnp.int32)
    dst = (src + 1) % N
    edge_index = jnp.stack(
        [jnp.concatenate([src, dst]), jnp.concatenate([dst, src])], axis=0
    )

    params = init_params(kp, IN_F, HIDDEN, OUT_F)

    out = kanguard_forward(x, edge_index, params)
    jax.block_until_ready(out)
    assert out.shape == (N,), out.shape
    print("KERNEL_OK")
</pallas_src>

<mosaic_0001>
module attributes {stable_mosaic.version = 11 : i64} {
  func.func @kan_hw_kernel(%arg0: i32, %arg1: memref<256x16xbf16, #tpu.memory_space<vmem>>, %arg2: memref<16x128xbf16, #tpu.memory_space<vmem>>, %arg3: memref<1x128xf32, #tpu.memory_space<vmem>>, %arg4: memref<128x128xbf16, #tpu.memory_space<vmem>>, %arg5: memref<256x128xbf16, #tpu.memory_space<vmem>>) attributes {dimension_semantics = [#tpu.dimension_semantics<parallel>], iteration_bounds = array<i64: 1>, scalar_prefetch = 0 : i64, scratch_operands = 0 : i64, tpu.core_type = #tpu.core_type<tc>, window_params = [{transform_indices = @transform_0, window_bounds = array<i64: 256, 16>}, {pipeline_mode = #tpu.pipeline_mode<synchronous>, transform_indices = @transform_1, window_bounds = array<i64: 16, 128>}, {pipeline_mode = #tpu.pipeline_mode<synchronous>, transform_indices = @transform_2, window_bounds = array<i64: 1, 128>}, {pipeline_mode = #tpu.pipeline_mode<synchronous>, transform_indices = @transform_3, window_bounds = array<i64: 128, 128>}, {transform_indices = @transform_4, window_bounds = array<i64: 256, 128>}]} {
    %c0 = arith.constant 0 : index
    %c0_0 = arith.constant 0 : index
    %0 = vector.load %arg1[%c0, %c0_0] : memref<256x16xbf16, #tpu.memory_space<vmem>>, vector<256x16xbf16>
    %c0_1 = arith.constant 0 : index
    %c0_2 = arith.constant 0 : index
    %1 = vector.load %arg2[%c0_1, %c0_2] : memref<16x128xbf16, #tpu.memory_space<vmem>>, vector<16x128xbf16>
    %cst = arith.constant dense<0.000000e+00> : vector<256x128xf32>
    %2 = tpu.matmul %0, %1, %cst {dimension_numbers = #tpu.dot_dimension_numbers<[1], [0], [0], [1], [0, 0, 1, 1], [], []>} : vector<256x16xbf16>, vector<16x128xbf16>, vector<256x128xf32> -> vector<256x128xf32>
    %c0_3 = arith.constant 0 : index
    %c0_4 = arith.constant 0 : index
    %3 = vector.load %arg3[%c0_3, %c0_4] : memref<1x128xf32, #tpu.memory_space<vmem>>, vector<1x128xf32>
    %4 = vector.broadcast %3 : vector<1x128xf32> to vector<256x128xf32>
    %5 = arith.addf %2, %4 : vector<256x128xf32>
    %6 = math.sin %5 : vector<256x128xf32>
    %7 = arith.truncf %6 : vector<256x128xf32> to vector<256x128xbf16>
    %c0_5 = arith.constant 0 : index
    %c0_6 = arith.constant 0 : index
    %8 = vector.load %arg4[%c0_5, %c0_6] : memref<128x128xbf16, #tpu.memory_space<vmem>>, vector<128x128xbf16>
    %cst_7 = arith.constant dense<0.000000e+00> : vector<256x128xf32>
    %9 = tpu.matmul %7, %8, %cst_7 {dimension_numbers = #tpu.dot_dimension_numbers<[1], [0], [0], [1], [0, 0, 1, 1], [], []>} : vector<256x128xbf16>, vector<128x128xbf16>, vector<256x128xf32> -> vector<256x128xf32>
    %10 = arith.truncf %9 : vector<256x128xf32> to vector<256x128xbf16>
    %c0_8 = arith.constant 0 : index
    %c0_9 = arith.constant 0 : index
    %11 = vector.load %arg5[%c0_8, %c0_9] : memref<256x128xbf16, #tpu.memory_space<vmem>>, vector<256x128xbf16>
    tpu.vector_store %arg5[%c0_8, %c0_9], %10 {strides = array<i32>} : memref<256x128xbf16, #tpu.memory_space<vmem>>, vector<256x128xbf16>,
    return
  }
  func.func @transform_0(%arg0: i32) -> (i32, i32) {
    %c0_i32 = arith.constant 0 : i32
    %c0_i32_0 = arith.constant 0 : i32
    return %arg0, %c0_i32 : i32, i32
  }
  func.func @transform_1(%arg0: i32) -> (i32, i32) {
    %c0_i32 = arith.constant 0 : i32
    %c0_i32_0 = arith.constant 0 : i32
    %c0_i32_1 = arith.constant 0 : i32
    return %c0_i32, %c0_i32_0 : i32, i32
  }
  func.func @transform_2(%arg0: i32) -> (i32, i32) {
    %c0_i32 = arith.constant 0 : i32
    %c0_i32_0 = arith.constant 0 : i32
    %c0_i32_1 = arith.constant 0 : i32
    return %c0_i32, %c0_i32_0 : i32, i32
  }
  func.func @transform_3(%arg0: i32) -> (i32, i32) {
    %c0_i32 = arith.constant 0 : i32
    %c0_i32_0 = arith.constant 0 : i32
    %c0_i32_1 = arith.constant 0 : i32
    return %c0_i32, %c0_i32_0 : i32, i32
  }
  func.func @transform_4(%arg0: i32) -> (i32, i32) {
    %c0_i32 = arith.constant 0 : i32
    %c0_i32_0 = arith.constant 0 : i32
    return %arg0, %c0_i32 : i32, i32
  }
}

</mosaic_0001>

<llo_original>
// kernel: tpu_custom_call.1
$region0: #{tpu_custom_call.1}
  #allocation0 [shape = 'u32[]', space=smem, size = 0x4, offset = 0x4, fixed_abs, tag = 'smem constant byte address 0x4 - core index']
  #allocation1 [shape = 'u32[144,128]{1,0:T(1,128)}', space=vmem, size = 0x12000, scoped, tag = 'internal scratch']
  %s0 = inlined_call_operand.vmem [shape: bf16[256,16], index: 0, kind: input, shape index: {}]
  %s1 = inlined_call_operand.vmem [shape: bf16[16,128], index: 1, kind: input, shape index: {}]
  %s2 = inlined_call_operand.vmem [shape: f32[1,128], index: 2, kind: input, shape index: {}]
  %s3 = inlined_call_operand.vmem [shape: bf16[128,128], index: 3, kind: input, shape index: {}]
  %s4 = inlined_call_operand.hbm [shape: bf16[256,128], index: 4, kind: output, shape index: {}]
  %s5 = sld [smem:[#allocation0]]
  $region26: #{tpu_custom_call.1} parent=0
    _
  %s7 = ssub.s32 1, %s5
  %s8 = scalar_select 0, %s7, %s5
  $region1: #{tpu_custom_call.1} parent=0
    #allocation2 [shape = 'u8[65536]{0}', space=vmem, size = 0x10000, scoped, tag = 'output window, operand 0, single buffered']
    #allocation3 [shape = 's32[1]{0}', space=sflag, size = 0x4, scoped, tag = 'scoped memory for tpu_custom_call.1']
    %9 = vsyncpa [#allocation3], 0
    // Predicated region
    $region2: #{tpu_custom_call.1} parent=1 // pred_check
      _
    $region3: #{tpu_custom_call.1} parent=1 // pred_check_branch
      %11 = sbr.rel (0) target = $region5
    $region4: #{tpu_custom_call.1} parent=1 // pred_region
      _
    $region5: #{tpu_custom_call.1} parent=1 // pred_fallthru
      _
    // Predicated region
    $region6: #{tpu_custom_call.1} parent=1 // pred_check
      _
    $region7: #{tpu_custom_call.1} parent=1 // pred_check_branch
      %13 = sbr.rel (0) target = $region9
    $region8: #{tpu_custom_call.1} parent=1 // pred_region
      _
    $region9: #{tpu_custom_call.1} parent=1 // pred_fallthru
      _
    // Predicated region
    $region10: #{tpu_custom_call.1} parent=1 // pred_check
      _
    $region11: #{tpu_custom_call.1} parent=1 // pred_check_branch
      %15 = sbr.rel (0) target = $region13
    $region12: #{tpu_custom_call.1} parent=1 // pred_region
      _
    $region13: #{tpu_custom_call.1} parent=1 // pred_fallthru
      _
    // Predicated region
    $region14: #{tpu_custom_call.1} parent=1 // pred_check
      _
    $region15: #{tpu_custom_call.1} parent=1 // pred_check_branch
      %17 = sbr.rel (0) target = $region17
    $region16: #{tpu_custom_call.1} parent=1 // pred_region
      _
    $region17: #{tpu_custom_call.1} parent=1 // pred_fallthru
      _
    %v19 = vld [vmem:[%s0] sm:$0xf]
    %v20 = vld [vmem:[%s0 + $0x4] sm:$0xf]
    %v21 = vld [vmem:[%s0 + $0x8] sm:$0xf]
    %v22 = vld [vmem:[%s0 + $0xc] sm:$0xf]
    %v23 = vld [vmem:[%s0 + $0x10] sm:$0xf]
    %v24 = vld [vmem:[%s0 + $0x14] sm:$0xf]
    %v25 = vld [vmem:[%s0 + $0x18] sm:$0xf]
    %v26 = vld [vmem:[%s0 + $0x1c] sm:$0xf]
    %v27 = vld [vmem:[%s0 + $0x20] sm:$0xf]
    %v28 = vld [vmem:[%s0 + $0x24] sm:$0xf]
    %v29 = vld [vmem:[%s0 + $0x28] sm:$0xf]
    %v30 = vld [vmem:[%s0 + $0x2c] sm:$0xf]
    %v31 = vld [vmem:[%s0 + $0x30] sm:$0xf]
    %v32 = vld [vmem:[%s0 + $0x34] sm:$0xf]
    %v33 = vld [vmem:[%s0 + $0x38] sm:$0xf]
    %v34 = vld [vmem:[%s0 + $0x3c] sm:$0xf]
    %v35 = vld [vmem:[%s0 + $0x40] sm:$0xf]
    %v36 = vld [vmem:[%s0 + $0x44] sm:$0xf]
    %v37 = vld [vmem:[%s0 + $0x48] sm:$0xf]
    %v38 = vld [vmem:[%s0 + $0x4c] sm:$0xf]
    %v39 = vld [vmem:[%s0 + $0x50] sm:$0xf]
    %v40 = vld [vmem:[%s0 + $0x54] sm:$0xf]
    %v41 = vld [vmem:[%s0 + $0x58] sm:$0xf]
    %v42 = vld [vmem:[%s0 + $0x5c] sm:$0xf]
    %v43 = vld [vmem:[%s0 + $0x60] sm:$0xf]
    %v44 = vld [vmem:[%s0 + $0x64] sm:$0xf]
    %v45 = vld [vmem:[%s0 + $0x68] sm:$0xf]
    %v46 = vld [vmem:[%s0 + $0x6c] sm:$0xf]
    %v47 = vld [vmem:[%s0 + $0x70] sm:$0xf]
    %v48 = vld [vmem:[%s0 + $0x74] sm:$0xf]
    %v49 = vld [vmem:[%s0 + $0x78] sm:$0xf]
    %v50 = vld [vmem:[%s0 + $0x7c] sm:$0xf]
    %v51 = vld [vmem:[%s1] sm:$0xf]
    %v52 = vld [vmem:[%s1 + $0x4] sm:$0xf]
    %v53 = vld [vmem:[%s2] sm:$0x1]
    %v55 = vlaneseq
    %v56 = vshrl.u32 %v55, 7
    %v57 = vsub.s32 0, %v56
    %v58 = vrot.slane %v53, %v57
    %v92 = vunpack.c.l.b16 %v19
    %v93 = vunpack.c.l.b16 %v20
    %v94 = vunpack.c.l.b16 %v21
    %v95 = vunpack.c.l.b16 %v22
    %v96 = vunpack.c.l.b16 %v23
    %v97 = vunpack.c.l.b16 %v24
    %v98 = vunpack.c.l.b16 %v25
    %v99 = vunpack.c.l.b16 %v26
    %v100 = vunpack.c.l.b16 %v27
    %v101 = vunpack.c.l.b16 %v28
    %v102 = vunpack.c.l.b16 %v29
    %v103 = vunpack.c.l.b16 %v30
    %v104 = vunpack.c.l.b16 %v31
    %v105 = vunpack.c.l.b16 %v32
    %v106 = vunpack.c.l.b16 %v33
    %v107 = vunpack.c.l.b16 %v34
    %v108 = vunpack.c.l.b16 %v35
    %v109 = vunpack.c.l.b16 %v36
    %v110 = vunpack.c.l.b16 %v37
    %v111 = vunpack.c.l.b16 %v38
    %v112 = vunpack.c.l.b16 %v39
    %v113 = vunpack.c.l.b16 %v40
    %v114 = vunpack.c.l.b16 %v41
    %v115 = vunpack.c.l.b16 %v42
    %v116 = vunpack.c.l.b16 %v43
    %v117 = vunpack.c.l.b16 %v44
    %v118 = vunpack.c.l.b16 %v45
    %v119 = vunpack.c.l.b16 %v46
    %v120 = vunpack.c.l.b16 %v47
    %v121 = vunpack.c.l.b16 %v48
    %v122 = vunpack.c.l.b16 %v49
    %v123 = vunpack.c.l.b16 %v50
    %v124 = vpack.c.b16 %v93, %v92
    %v125 = vpack.c.b16 %v95, %v94
    %v126 = vpack.c.b16 %v97, %v96
    %v127 = vpack.c.b16 %v99, %v98
    %v128 = vpack.c.b16 %v101, %v100
    %v129 = vpack.c.b16 %v103, %v102
    %v130 = vpack.c.b16 %v105, %v104
    %v131 = vpack.c.b16 %v107, %v106
    %v132 = vpack.c.b16 %v109, %v108
    %v133 = vpack.c.b16 %v111, %v110
    %v134 = vpack.c.b16 %v113, %v112
    %v135 = vpack.c.b16 %v115, %v114
    %v136 = vpack.c.b16 %v117, %v116
    %v137 = vpack.c.b16 %v119, %v118
    %v138 = vpack.c.b16 %v121, %v120
    %v139 = vpack.c.b16 %v123, %v122
    %v142 = vunpack.c.l.b16 %v51
    %v143 = vunpack.c.l.b16 %v52
    %v144 = vpack.c.b16 %v143, %v142
    %vm146 = vcmask 130048
    %v148 = vsel %vm146, %v124, 0
    %v151 = vsel %vm146, %v125, 0
    %v154 = vsel %vm146, %v126, 0
    %v157 = vsel %vm146, %v127, 0
    %v160 = vsel %vm146, %v128, 0
    %v163 = vsel %vm146, %v129, 0
    %v166 = vsel %vm146, %v130, 0
    %v169 = vsel %vm146, %v131, 0
    %v172 = vsel %vm146, %v132, 0
    %v175 = vsel %vm146, %v133, 0
    %v178 = vsel %vm146, %v134, 0
    %v181 = vsel %vm146, %v135, 0
    %v184 = vsel %vm146, %v136, 0
    %v187 = vsel %vm146, %v137, 0
    %v190 = vsel %vm146, %v138, 0
    %v193 = vsel %vm146, %v139, 0
    %195 = vmatprep.subr.bf16.mxu0 0
    %196 = vmatpush1.bf16.msra.mxu0 %v144
    %197 = vmatprep.subr.bf16.mxu0 0
    %198 = vmatpush1.bf16.msra.mxu0 0
    %199 = vmatprep.subr.bf16.mxu0 0
    %200 = vmatpush1.bf16.msra.mxu0 0
    %201 = vmatprep.subr.bf16.mxu0 0
    %202 = vmatpush1.bf16.msra.mxu0 0
    %203 = vmatprep.subr.bf16.mxu0 0
    %204 = vmatpush1.bf16.msra.mxu0 0
    %205 = vmatprep.subr.bf16.mxu0 0
    %206 = vmatpush1.bf16.msra.mxu0 0
    %207 = vmatprep.subr.bf16.mxu0 0
    %208 = vmatpush1.bf16.msra.mxu0 0
    %209 = vmatprep.subr.bf16.mxu0 0
    %210 = vmatpush1.bf16.msra.mxu0 0
    %211 = vmatprep.subr.bf16.mxu0 0
    %212 = vmatpush1.bf16.msra.mxu0 0
    %213 = vmatprep.subr.bf16.mxu0 0
    %214 = vmatpush1.bf16.msra.mxu0 0
    %215 = vmatprep.subr.bf16.mxu0 0
    %216 = vmatpush1.bf16.msra.mxu0 0
    %217 = vmatprep.subr.bf16.mxu0 0
    %218 = vmatpush1.bf16.msra.mxu0 0
    %219 = vmatprep.subr.bf16.mxu0 0
    %220 = vmatpush1.bf16.msra.mxu0 0
    %221 = vmatprep.subr.bf16.mxu0 0
    %222 = vmatpush1.bf16.msra.mxu0 0
    %223 = vmatprep.subr.bf16.mxu0 0
    %224 = vmatpush1.bf16.msra.mxu0 0
    %225 = vmatprep.subr.bf16.mxu0 0
    %226 = vmatpush1.bf16.msra.mxu0 0
    %227 = vmatprep.mubr.bf16.mxu0 0
    %228 = vmatmul.mubr.bf16.gmra.mrb[0].mxu0 %v148
    %v229 = vpop.f32.mrb[0].mxu0
    %v230 = vadd.f32 %v58, %v229
    %v231 = vpop.f32.mrb[0].mxu0
    %v232 = vpop.f32.mrb[0].mxu0
    %v233 = vadd.f32 %v58, %v232
    %v234 = vpop.f32.mrb[0].mxu0
    %235 = vmatprep.mubr.bf16.mxu0 0
    %236 = vmatmul.mubr.bf16.gmra.mrb[0].mxu0 %v151
    %v237 = vpop.f32.mrb[0].mxu0
    %v238 = vadd.f32 %v58, %v237
    %v239 = vpop.f32.mrb[0].mxu0
    %v240 = vpop.f32.mrb[0].mxu0
    %v241 = vadd.f32 %v58, %v240
    %v242 = vpop.f32.mrb[0].mxu0
    %243 = vmatprep.mubr.bf16.mxu0 0
    %244 = vmatmul.mubr.bf16.gmra.mrb[0].mxu0 %v154
    %v245 = vpop.f32.mrb[0].mxu0
    %v246 = vadd.f32 %v58, %v245
    %v247 = vpop.f32.mrb[0].mxu0
    %v248 = vpop.f32.mrb[0].mxu0
    %v249 = vadd.f32 %v58, %v248
    %v250 = vpop.f32.mrb[0].mxu0
    %251 = vmatprep.mubr.bf16.mxu0 0
    %252 = vmatmul.mubr.bf16.gmra.mrb[0].mxu0 %v157
    %v253 = vpop.f32.mrb[0].mxu0
    %v254 = vadd.f32 %v58, %v253
    %v255 = vpop.f32.mrb[0].mxu0
    %v256 = vpop.f32.mrb[0].mxu0
    %v257 = vadd.f32 %v58, %v256
    %v258 = vpop.f32.mrb[0].mxu0
    %259 = vmatprep.mubr.bf16.mxu0 0
    %260 = vmatmul.mubr.bf16.gmra.mrb[0].mxu0 %v160
    %v261 = vpop.f32.mrb[0].mxu0
    %v262 = vadd.f32 %v58, %v261
    %v263 = vpop.f32.mrb[0].mxu0
    %v264 = vpop.f32.mrb[0].mxu0
    %v265 = vadd.f32 %v58, %v264
    %v266 = vpop.f32.mrb[0].mxu0
    %267 = vmatprep.mubr.bf16.mxu0 0
    %268 = vmatmul.mubr.bf16.gmra.mrb[0].mxu0 %v163
    %v269 = vpop.f32.mrb[0].mxu0
    %v270 = vadd.f32 %v58, %v269
    %v271 = vpop.f32.mrb[0].mxu0
    %v272 = vpop.f32.mrb[0].mxu0
    %v273 = vadd.f32 %v58, %v272
    %v274 = vpop.f32.mrb[0].mxu0
    %275 = vmatprep.mubr.bf16.mxu0 0
    %276 = vmatmul.mubr.bf16.gmra.mrb[0].mxu0 %v166
    %v277 = vpop.f32.mrb[0].mxu0
    %v278 = vadd.f32 %v58, %v277
    %v279 = vpop.f32.mrb[0].mxu0
    %v280 = vpop.f32.mrb[0].mxu0
    %v281 = vadd.f32 %v58, %v280
    %v282 = vpop.f32.mrb[0].mxu0
    %283 = vmatprep.mubr.bf16.mxu0 0
    %284 = vmatmul.mubr.bf16.gmra.mrb[0].mxu0 %v169
    %v285 = vpop.f32.mrb[0].mxu0
    %v286 = vadd.f32 %v58, %v285
    %v287 = vpop.f32.mrb[0].mxu0
    %v288 = vpop.f32.mrb[0].mxu0
    %v289 = vadd.f32 %v58, %v288
    %v290 = vpop.f32.mrb[0].mxu0
    %291 = vmatprep.mubr.bf16.mxu0 0
    %292 = vmatmul.mubr.bf16.gmra.mrb[0].mxu0 %v172
    %v293 = vpop.f32.mrb[0].mxu0
    %v294 = vadd.f32 %v58, %v293
    %v295 = vpop.f32.mrb[0].mxu0
    %v296 = vpop.f32.mrb[0].mxu0
    %v297 = vadd.f32 %v58, %v296
    %v298 = vpop.f32.mrb[0].mxu0
    %299 = vmatprep.mubr.bf16.mxu0 0
    %300 = vmatmul.mubr.bf16.gmra.mrb[0].mxu0 %v175
    %v301 = vpop.f32.mrb[0].mxu0
    %v302 = vadd.f32 %v58, %v301
    %v303 = vpop.f32.mrb[0].mxu0
    %v304 = vpop.f32.mrb[0].mxu0
    %v305 = vadd.f32 %v58, %v304
    %v306 = vpop.f32.mrb[0].mxu0
    %307 = vmatprep.mubr.bf16.mxu0 0
    %308 = vmatmul.mubr.bf16.gmra.mrb[0].mxu0 %v178
    %v309 = vpop.f32.mrb[0].mxu0
    %v310 = vadd.f32 %v58, %v309
    %v311 = vpop.f32.mrb[0].mxu0
    %v312 = vpop.f32.mrb[0].mxu0
    %v313 = vadd.f32 %v58, %v312
    %v314 = vpop.f32.mrb[0].mxu0
    %315 = vmatprep.mubr.bf16.mxu0 0
    %316 = vmatmul.mubr.bf16.gmra.mrb[0].mxu0 %v181
    %v317 = vpop.f32.mrb[0].mxu0
    %v318 = vadd.f32 %v58, %v317
    %v319 = vpop.f32.mrb[0].mxu0
    %v320 = vpop.f32.mrb[0].mxu0
    %v321 = vadd.f32 %v58, %v320
    %v322 = vpop.f32.mrb[0].mxu0
    %323 = vmatprep.mubr.bf16.mxu0 0
    %324 = vmatmul.mubr.bf16.gmra.mrb[0].mxu0 %v184
    %v325 = vpop.f32.mrb[0].mxu0
    %v326 = vadd.f32 %v58, %v325
    %v327 = vpop.f32.mrb[0].mxu0
    %v328 = vpop.f32.mrb[0].mxu0
    %v329 = vadd.f32 %v58, %v328
    %v330 = vpop.f32.mrb[0].mxu0
    %331 = vmatprep.mubr.bf16.mxu0 0
    %332 = vmatmul.mubr.bf16.gmra.mrb[0].mxu0 %v187
    %v333 = vpop.f32.mrb[0].mxu0
    %v334 = vadd.f32 %v58, %v333
    %v335 = vpop.f32.mrb[0].mxu0
    %v336 = vpop.f32.mrb[0].mxu0
    %v337 = vadd.f32 %v58, %v336
    %v338 = vpop.f32.mrb[0].mxu0
    %339 = vmatprep.mubr.bf16.mxu0 0
    %340 = vmatmul.mubr.bf16.gmra.mrb[0].mxu0 %v190
    %v341 = vpop.f32.mrb[0].mxu0
    %v342 = vadd.f32 %v58, %v341
    %v343 = vpop.f32.mrb[0].mxu0
    %v344 = vpop.f32.mrb[0].mxu0
    %v345 = vadd.f32 %v58, %v344
    %v346 = vpop.f32.mrb[0].mxu0
    %347 = vmatprep.mubr.bf16.mxu0 0
    %348 = vmatmul.mubr.bf16.gmra.mrb[0].mxu0 %v193
    %v349 = vpop.f32.mrb[0].mxu0
    %v350 = vadd.f32 %v58, %v349
    %v351 = vpop.f32.mrb[0].mxu0
    %v352 = vpop.f32.mrb[0].mxu0
    %v353 = vadd.f32 %v58, %v352
    %v354 = vpop.f32.mrb[0].mxu0
    %355 = vdwg.mxu0
    %v356 = vand.u32 2147483647, %v230
    %vm357 = vcmp.le.f32.partialorder %v356, 0.7853982
    %vm358 = vcmp.lt.s32.totalorder %v230, 0
    %v359 = vand.u32 %v230, 2139095040
    %v360 = vshrl.u32 %v359, 23
    %v361 = vsub.s32 %v360, 127
    %v362 = vand.u32 2147483647, %v230
    %v363 = vand.u32 %v362, 8388607
    %v364 = vor.u32 %v363, 8388608
    %v365 = vsub.s32 0, %v364
    %v366 = vadd.s32 %v361, 1
    %vm367 = vcmp.gt.s32.totalorder %v366, 0
    %v368 = vsel %vm367, %v366, 0
    %v369 = vshrl.u32 %v368, 5
    %v370 = vand.u32 %v368, 31
    %v371 = vsub.s32 32, %v370
    %v372 = vshrl.u32 683565275, %v371
    %v373 = vshll.u32 683565275, %v370
    %v374 = vshrl.u32 2475754826, %v371
    %v375 = vor.u32 %v373, %v374
    %v376 = vshll.u32 2475754826, %v370
    %v377 = vshrl.u32 2131351028, %v371
    %v378 = vor.u32 %v376, %v377
    %v379 = vshll.u32 2131351028, %v370
    %v380 = vshrl.u32 2102212464, %v371
    %v381 = vor.u32 %v379, %v380
    %v382 = vshll.u32 2102212464, %v370
    %v383 = vshrl.u32 920167782, %v371
    %v384 = vor.u32 %v382, %v383
    %v385 = vshll.u32 920167782, %v370
    %v386 = vshrl.u32 1326507024, %v371
    %v387 = vor.u32 %v385, %v386
    %vm388 = vcmp.lt.s32.totalorder %v369, 1
    %vm389 = vcmp.lt.s32.totalorder %v369, 2
    %vm390 = vcmp.lt.s32.totalorder %v369, 3
    %vm391 = vcmp.lt.s32.totalorder %v369, 4
    %v392 = vsel %vm388, %v372, %v375
    %v393 = vsel %vm391, %v381, 2102212464
    %v394 = vsel %vm390, %v378, %v393
    %v395 = vsel %vm389, %v392, %v394
    %v396 = vsel %vm388, %v375, %v378
    %v397 = vsel %vm391, %v384, 920167782
    %v398 = vsel %vm390, %v381, %v397
    %v399 = vsel %vm389, %v396, %v398
    %v400 = vsel %vm388, %v378, %v381
    %v401 = vsel %vm391, %v387, 1326507024
    %v402 = vsel %vm390, %v384, %v401
    %v403 = vsel %vm389, %v400, %v402
    %v404 = vshll.u32 %v364, 8
    %v405 = vmul.u32.u64.compose %v404, %v403
    %v406 = vextract.low.u32 %v405
    %v407 = vextract.high.u32 %v405
    %v408 = vmul.u32.u64.compose %v404, %v399
    %v409 = vextract.low.u32 %v408
    %v410 = vextract.high.u32 %v408
    %v411 = vmul.u32 %v404, %v395
    %v412 = vadd.s32 %v407, %v409
    %vm413 = vc.u32 %v407, %v409
    %v414 = vadd.s32 %v410, 1
    %v415 = vsel %vm413, %v414, %v410
    %v416 = vadd.s32 %v411, %v415
    %v417 = vadd.s32 %v416, 536870912
    %v418 = vshrl.u32 %v417, 30
    %v419 = vshll.u32 %v418, 30
    %v420 = vsub.s32 %v416, %v419
    %vm421 = vcmp.lt.s32.totalorder %v420, 0
    %v422 = vsub.s32 0, %v420
    %v423 = vsel %vm421, %v422, %v420
    %v424 = vclz %v423
    %v425 = vsub.s32 %v424, 2
    %vm426 = vcmp.gt.s32.totalorder 0, %v425
    %v427 = vsel %vm426, 0, %v425
    %v428 = vsub.s32 32, %v427
    %v429 = vshll.u32 %v420, %v427
    %v430 = vshrl.u32 %v412, %v428
    %v431 = vor.u32 %v429, %v430
    %v432 = vsub.s32 4294967266, %v427
    %v433 = vadd.s32 %v432, 127
    %v434 = vshll.u32 %v433, 23
    %v435 = vor.u32 4788187, %v434
    %v436 = vand.u32 2147483647, %v435
    %v438 = vcvt.s32.f32 %v431
    %v439 = vmul.f32 %v438, %v436
    %v440 = vxor.u32 %v439, 2147483648
    %v441 = vsel %vm358, %v440, %v439
    %v442 = vsub.s32 4, %v418
    %v443 = vsel %vm358, %v442, %v418
    %v444 = vsel %vm357, %v230, %v441
    %v445 = vsel %vm357, 0, %v443
    %v446 = vcosq.f32.pop %v444
    %v447 = vsinq.f32.pop %v444
    %vm448 = vweird.f32 %v230
    %v449 = vadd.s32 %v445, 3
    %v450 = vand.u32 %v449, 3
    %vm451 = vcmp.lt.s32.totalorder %v450, 2
    %vm452 = vcmp.eq.s32.totalorder %v450, 0
    %v453 = vxor.u32 %v447, 2147483648
    %v454 = vsel %vm452, %v446, %v453
    %vm455 = vcmp.eq.s32.totalorder %v450, 2
    %v456 = vxor.u32 %v446, 2147483648
    %v457 = vsel %vm455, %v456, %v447
    %v458 = vsel %vm451, %v454, %v457
    %v459 = vsel %vm448, nan, %v458
    %v460 = vand.u32 2147483647, %v233
    %vm461 = vcmp.le.f32.partialorder %v460, 0.7853982
    %vm462 = vcmp.lt.s32.totalorder %v233, 0
    %v463 = vand.u32 %v233, 2139095040
    %v464 = vshrl.u32 %v463, 23
    %v465 = vsub.s32 %v464, 127
    %v466 = vand.u32 2147483647, %v233
    %v467 = vand.u32 %v466, 8388607
    %v468 = vor.u32 %v467, 8388608
    %v469 = vsub.s32 0, %v468
    %v470 = vadd.s32 %v465, 1
    %vm471 = vcmp.gt.s32.totalorder %v470, 0
    %v472 = vsel %vm471, %v470, 0
    %v473 = vshrl.u32 %v472, 5
    %v474 = vand.u32 %v472, 31
    %v475 = vsub.s32 32, %v474
    %v476 = vshrl.u32 683565275, %v475
    %v477 = vshll.u32 683565275, %v474
    %v478 = vshrl.u32 2475754826, %v475
    %v479 = vor.u32 %v477, %v478
    %v480 = vshll.u32 2475754826, %v474
    %v481 = vshrl.u32 2131351028, %v475
    %v482 = vor.u32 %v480, %v481
    %v483 = vshll.u32 2131351028, %v474
    %v484 = vshrl.u32 2102212464, %v475
    %v485 = vor.u32 %v483, %v484
    %v486 = vshll.u32 2102212464, %v474
    %v487 = vshrl.u32 920167782, %v475
    %v488 = vor.u32 %v486, %v487
    %v489 = vshll.u32 920167782, %v474
    %v490 = vshrl.u32 1326507024, %v475
    %v491 = vor.u32 %v489, %v490
    %vm492 = vcmp.lt.s32.totalorder %v473, 1
    %vm493 = vcmp.lt.s32.totalorder %v473, 2
    %vm494 = vcmp.lt.s32.totalorder %v473, 3
    %vm495 = vcmp.lt.s32.totalorder %v473, 4
    %v496 = vsel %vm492, %v476, %v479
    %v497 = vsel %vm495, %v485, 2102212464
    %v498 = vsel %vm494, %v482, %v497
    %v499 = vsel %vm493, %v496, %v498
    %v500 = vsel %vm492, %v479, %v482
    %v501 = vsel %vm495, %v488, 920167782
    %v502 = vsel %vm494, %v485, %v501
    %v503 = vsel %vm493, %v500, %v502
    %v504 = vsel %vm492, %v482, %v485
    %v505 = vsel %vm495, %v491, 1326507024
    %v506 = vsel %vm494, %v488, %v505
    %v507 = vsel %vm493, %v504, %v506
    %v508 = vshll.u32 %v468, 8
    %v509 = vmul.u32.u64.compose %v508, %v507
    %v510 = vextract.low.u32 %v509
    %v511 = vextract.high.u32 %v509
    %v512 = vmul.u32.u64.compose %v508, %v503
    %v513 = vextract.low.u32 %v512
    %v514 = vextract.high.u32 %v512
    %v515 = vmul.u32 %v508, %v499
    %v516 = vadd.s32 %v511, %v513
    %vm517 = vc.u32 %v511, %v513
    %v518 = vadd.s32 %v514, 1
    %v519 = vsel %vm517, %v518, %v514
    %v520 = vadd.s32 %v515, %v519
    %v521 = vadd.s32 %v520, 536870912
    %v522 = vshrl.u32 %v521, 30
    %v523 = vshll.u32 %v522, 30
    %v524 = vsub.s32 %v520, %v523
    %vm525 = vcmp.lt.s32.totalorder %v524, 0
    %v526 = vsub.s32 0, %v524
    %v527 = vsel %vm525, %v526, %v524
    %v528 = vclz %v527
    %v529 = vsub.s32 %v528, 2
    %vm530 = vcmp.gt.s32.totalorder 0, %v529
    %v531 = vsel %vm530, 0, %v529
    %v532 = vsub.s32 32, %v531
    %v533 = vshll.u32 %v524, %v531
    %v534 = vshrl.u32 %v516, %v532
    %v535 = vor.u32 %v533, %v534
    %v536 = vsub.s32 4294967266, %v531
    %v537 = vadd.s32 %v536, 127
    %v538 = vshll.u32 %v537, 23
    %v539 = vor.u32 4788187, %v538
    %v540 = vand.u32 2147483647, %v539
    %v542 = vcvt.s32.f32 %v535
    %v543 = vmul.f32 %v542, %v540
    %v544 = vxor.u32 %v543, 2147483648
    %v545 = vsel %vm462, %v544, %v543
    %v546 = vsub.s32 4, %v522
    %v547 = vsel %vm462, %v546, %v522
    %v548 = vsel %vm461, %v233, %v545
    %v549 = vsel %vm461, 0, %v547
    %v550 = vcosq.f32.pop %v548
    %v551 = vsinq.f32.pop %v548
    %vm552 = vweird.f32 %v233
    %v553 = vadd.s32 %v549, 3
    %v554 = vand.u32 %v553, 3
    %vm555 = vcmp.lt.s32.totalorder %v554, 2
    %vm556 = vcmp.eq.s32.totalorder %v554, 0
    %v557 = vxor.u32 %v551, 2147483648
    %v558 = vsel %vm556, %v550, %v557
    %vm559 = vcmp.eq.s32.totalorder %v554, 2
    %v560 = vxor.u32 %v550, 2147483648
    %v561 = vsel %vm559, %v560, %v551
    %v562 = vsel %vm555, %v558, %v561
    %v563 = vsel %vm552, nan, %v562
    %v564 = vand.u32 2147483647, %v238
    %vm565 = vcmp.le.f32.partialorder %v564, 0.7853982
    %vm566 = vcmp.lt.s32.totalorder %v238, 0
    %v567 = vand.u32 %v238, 2139095040
    %v568 = vshrl.u32 %v567, 23
    %v569 = vsub.s32 %v568, 127
    %v570 = vand.u32 2147483647, %v238
    %v571 = vand.u32 %v570, 8388607
    %v572 = vor.u32 %v571, 8388608
    %v573 = vsub.s32 0, %v572
    %v574 = vadd.s32 %v569, 1
    %vm575 = vcmp.gt.s32.totalorder %v574, 0
    %v576 = vsel %vm575, %v574, 0
    %v577 = vshrl.u32 %v576, 5
    %v578 = vand.u32 %v576, 31
    %v579 = vsub.s32 32, %v578
    %v580 = vshrl.u32 683565275, %v579
    %v581 = vshll.u32 683565275, %v578
    %v582 = vshrl.u32 2475754826, %v579
    %v583 = vor.u32 %v581, %v582
    %v584 = vshll.u32 2475754826, %v578
    %v585 = vshrl.u32 2131351028, %v579
    %v586 = vor.u32 %v584, %v585
    %v587 = vshll.u32 2131351028, %v578
    %v588 = vshrl.u32 2102212464, %v579
    %v589 = vor.u32 %v587, %v588
    %v590 = vshll.u32 2102212464, %v578
    %v591 = vshrl.u32 920167782, %v579
    %v592 = vor.u32 %v590, %v591
    %v593 = vshll.u32 920167782, %v578
    %v594 = vshrl.u32 1326507024, %v579
    %v595 = vor.u32 %v593, %v594
    %vm596 = vcmp.lt.s32.totalorder %v577, 1
    %vm597 = vcmp.lt.s32.totalorder %v577, 2
    %vm598 = vcmp.lt.s32.totalorder %v577, 3
    %vm599 = vcmp.lt.s32.totalorder %v577, 4
    %v600 = vsel %vm596, %v580, %v583
    %v601 = vsel %vm599, %v589, 2102212464
    %v602 = vsel %vm598, %v586, %v601
    %v603 = vsel %vm597, %v600, %v602
    %v604 = vsel %vm596, %v583, %v586
    %v605 = vsel %vm599, %v592, 920167782
    %v606 = vsel %vm598, %v589, %v605
    %v607 = vsel %vm597, %v604, %v606
    %v608 = vsel %vm596, %v586, %v589
    %v609 = vsel %vm599, %v595, 1326507024
    %v610 = vsel %vm598, %v592, %v609
    %v611 = vsel %vm597, %v608, %v610
    %v612 = vshll.u32 %v572, 8
    %v613 = vmul.u32.u64.compose %v612, %v611
    %v614 = vextract.low.u32 %v613
    %v615 = vextract.high.u32 %v613
    %v616 = vmul.u32.u64.compose %v612, %v607
    %v617 = vextract.low.u32 %v616
    %v618 = vextract.high.u32 %v616
    %v619 = vmul.u32 %v612, %v603
    %v620 = vadd.s32 %v615, %v617
    %vm621 = vc.u32 %v615, %v617
    %v622 = vadd.s32 %v618, 1
    %v623 = vsel %vm621, %v622, %v618
    %v624 = vadd.s32 %v619, %v623
    %v625 = vadd.s32 %v624, 536870912
    %v626 = vshrl.u32 %v625, 30
    %v627 = vshll.u32 %v626, 30
    %v628 = vsub.s32 %v624, %v627
    %vm629 = vcmp.lt.s32.totalorder %v628, 0
    %v630 = vsub.s32 0, %v628
    %v631 = vsel %vm629, %v630, %v628
    %v632 = vclz %v631
    %v633 = vsub.s32 %v632, 2
    %vm634 = vcmp.gt.s32.totalorder 0, %v633
    %v635 = vsel %vm634, 0, %v633
    %v636 = vsub.s32 32, %v635
    %v637 = vshll.u32 %v628, %v635
    %v638 = vshrl.u32 %v620, %v636
    %v639 = vor.u32 %v637, %v638
    %v640 = vsub.s32 4294967266, %v635
    %v641 = vadd.s32 %v640, 127
    %v642 = vshll.u32 %v641, 23
    %v643 = vor.u32 4788187, %v642
    %v644 = vand.u32 2147483647, %v643
    %v646 = vcvt.s32.f32 %v639
    %v647 = vmul.f32 %v646, %v644
    %v648 = vxor.u32 %v647, 2147483648
    %v649 = vsel %vm566, %v648, %v647
    %v650 = vsub.s32 4, %v626
    %v651 = vsel %vm566, %v650, %v626
    %v652 = vsel %vm565, %v238, %v649
    %v653 = vsel %vm565, 0, %v651
    %v654 = vcosq.f32.pop %v652
    %v655 = vsinq.f32.pop %v652
    %vm656 = vweird.f32 %v238
    %v657 = vadd.s32 %v653, 3
    %v658 = vand.u32 %v657, 3
    %vm659 = vcmp.lt.s32.totalorder %v658, 2
    %vm660 = vcmp.eq.s32.totalorder %v658, 0
    %v661 = vxor.u32 %v655, 2147483648
    %v662 = vsel %vm660, %v654, %v661
    %vm663 = vcmp.eq.s32.totalorder %v658, 2
    %v664 = vxor.u32 %v654, 2147483648
    %v665 = vsel %vm663, %v664, %v655
    %v666 = vsel %vm659, %v662, %v665
    %v667 = vsel %vm656, nan, %v666
    %v668 = vand.u32 2147483647, %v241
    %vm669 = vcmp.le.f32.partialorder %v668, 0.7853982
    %vm670 = vcmp.lt.s32.totalorder %v241, 0
    %v671 = vand.u32 %v241, 2139095040
    %v672 = vshrl.u32 %v671, 23
    %v673 = vsub.s32 %v672, 127
    %v674 = vand.u32 2147483647, %v241
    %v675 = vand.u32 %v674, 8388607
    %v676 = vor.u32 %v675, 8388608
    %v677 = vsub.s32 0, %v676
    %v678 = vadd.s32 %v673, 1
    %vm679 = vcmp.gt.s32.totalorder %v678, 0
    %v680 = vsel %vm679, %v678, 0
    %v681 = vshrl.u32 %v680, 5
    %v682 = vand.u32 %v680, 31
    %v683 = vsub.s32 32, %v682
    %v684 = vshrl.u32 683565275, %v683
    %v685 = vshll.u32 683565275, %v682
    %v686 = vshrl.u32 2475754826, %v683
    %v687 = vor.u32 %v685, %v686
    %v688 = vshll.u32 2475754826, %v682
    %v689 = vshrl.u32 2131351028, %v683
    %v690 = vor.u32 %v688, %v689
    %v691 = vshll.u32 2131351028, %v682
    %v692 = vshrl.u32 2102212464, %v683
    %v693 = vor.u32 %v691, %v692
    %v694 = vshll.u32 2102212464, %v682
    %v695 = vshrl.u32 920167782, %v683
    %v696 = vor.u32 %v694, %v695
    %v697 = vshll.u32 920167782, %v682
    %v698 = vshrl.u32 1326507024, %v683
    %v699 = vor.u32 %v697, %v698
    %vm700 = vcmp.lt.s32.totalorder %v681, 1
    %vm701 = vcmp.lt.s32.totalorder %v681, 2
    %vm702 = vcmp.lt.s32.totalorder %v681, 3
    %vm703 = vcmp.lt.s32.totalorder %v681, 4
    %v704 = vsel %vm700, %v684, %v687
    %v705 = vsel %vm703, %v693, 2102212464
    %v706 = vsel %vm702, %v690, %v705
    %v707 = vsel %vm701, %v704, %v706
    %v708 = vsel %vm700, %v687, %v690
    %v709 = vsel %vm703, %v696, 920167782
    %v710 = vsel %vm702, %v693, %v709
    %v711 = vsel %vm701, %v708, %v710
    %v712 = vsel %vm700, %v690, %v693
    %v713 = vsel %vm703, %v699, 1326507024
    %v714 = vsel %vm702, %v696, %v713
    %v715 = vsel %vm701, %v712, %v714
    %v716 = vshll.u32 %v676, 8
    %v717 = vmul.u32.u64.compose %v716, %v715
    %v718 = vextract.low.u32 %v717
    %v719 = vextract.high.u32 %v717
    %v720 = vmul.u32.u64.compose %v716, %v711
    %v721 = vextract.low.u32 %v720
    %v722 = vextract.high.u32 %v720
    %v723 = vmul.u32 %v716, %v707
    %v724 = vadd.s32 %v719, %v721
    %vm725 = vc.u32 %v719, %v721
    %v726 = vadd.s32 %v722, 1
    %v727 = vsel %vm725, %v726, %v722
    %v728 = vadd.s32 %v723, %v727
    %v729 = vadd.s32 %v728, 536870912
    %v730 = vshrl.u32 %v729, 30
    %v731 = vshll.u32 %v730, 30
    %v732 = vsub.s32 %v728, %v731
    %vm733 = vcmp.lt.s32.totalorder %v732, 0
    %v734 = vsub.s32 0, %v732
    %v735 = vsel %vm733, %v734, %v732
    %v736 = vclz %v735
    %v737 = vsub.s32 %v736, 2
    %vm738 = vcmp.gt.s32.totalorder 0, %v737
    %v739 = vsel %vm738, 0, %v737
    %v740 = vsub.s32 32, %v739
    %v741 = vshll.u32 %v732, %v739
    %v742 = vshrl.u32 %v724, %v740
    %v743 = vor.u32 %v741, %v742
    %v744 = vsub.s32 4294967266, %v739
    %v745 = vadd.s32 %v744, 127
    %v746 = vshll.u32 %v745, 23
    %v747 = vor.u32 4788187, %v746
    %v748 = vand.u32 2147483647, %v747
    %v750 = vcvt.s32.f32 %v743
    %v751 = vmul.f32 %v750, %v748
    %v752 = vxor.u32 %v751, 2147483648
    %v753 = vsel %vm670, %v752, %v751
    %v754 = vsub.s32 4, %v730
    %v755 = vsel %vm670, %v754, %v730
    %v756 = vsel %vm669, %v241, %v753
    %v757 = vsel %vm669, 0, %v755
    %v758 = vcosq.f32.pop %v756
    %v759 = vsinq.f32.pop %v756
    %vm760 = vweird.f32 %v241
    %v761 = vadd.s32 %v757, 3
    %v762 = vand.u32 %v761, 3
    %vm763 = vcmp.lt.s32.totalorder %v762, 2
    %vm764 = vcmp.eq.s32.totalorder %v762, 0
    %v765 = vxor.u32 %v759, 2147483648
    %v766 = vsel %vm764, %v758, %v765
    %vm767 = vcmp.eq.s32.totalorder %v762, 2
    %v768 = vxor.u32 %v758, 2147483648
    %v769 = vsel %vm767, %v768, %v759
    %v770 = vsel %vm763, %v766, %v769
    %v771 = vsel %vm760, nan, %v770
    %v772 = vand.u32 2147483647, %v246
    %vm773 = vcmp.le.f32.partialorder %v772, 0.7853982
    %vm774 = vcmp.lt.s32.totalorder %v246, 0
    %v775 = vand.u32 %v246, 2139095040
    %v776 = vshrl.u32 %v775, 23
    %v777 = vsub.s32 %v776, 127
    %v778 = vand.u32 2147483647, %v246
    %v779 = vand.u32 %v778, 8388607
    %v780 = vor.u32 %v779, 8388608
    %v781 = vsub.s32 0, %v780
    %v782 = vadd.s32 %v777, 1
    %vm783 = vcmp.gt.s32.totalorder %v782, 0
    %v784 = vsel %vm783, %v782, 0
    %v785 = vshrl.u32 %v784, 5
    %v786 = vand.u32 %v784, 31
    %v787 = vsub.s32 32, %v786
    %v788 = vshrl.u32 683565275, %v787
    %v789 = vshll.u32 683565275, %v786
    %v790 = vshrl.u32 2475754826, %v787
    %v791 = vor.u32 %v789, %v790
    %v792 = vshll.u32 2475754826, %v786
    %v793 = vshrl.u32 2131351028, %v787
    %v794 = vor.u32 %v792, %v793
    %v795 = vshll.u32 2131351028, %v786
    %v796 = vshrl.u32 2102212464, %v787
    %v797 = vor.u32 %v795, %v796
    %v798 = vshll.u32 2102212464, %v786
    %v799 = vshrl.u32 920167782, %v787
    %v800 = vor.u32 %v798, %v799
    %v801 = vshll.u32 920167782, %v786
    %v802 = vshrl.u32 1326507024, %v787
    %v803 = vor.u32 %v801, %v802
    %vm804 = vcmp.lt.s32.totalorder %v785, 1
    %vm805 = vcmp.lt.s32.totalorder %v785, 2
    %vm806 = vcmp.lt.s32.totalorder %v785, 3
    %vm807 = vcmp.lt.s32.totalorder %v785, 4
    %v808 = vsel %vm804, %v788, %v791
    %v809 = vsel %vm807, %v797, 2102212464
    %v810 = vsel %vm806, %v794, %v809
    %v811 = vsel %vm805, %v808, %v810
    %v812 = vsel %vm804, %v791, %v794
    %v813 = vsel %vm807, %v800, 920167782
    %v814 = vsel %vm806, %v797, %v813
    %v815 = vsel %vm805, %v812, %v814
    %v816 = vsel %vm804, %v794, %v797
    %v817 = vsel %vm807, %v803, 1326507024
    %v818 = vsel %vm806, %v800, %v817
    %v819 = vsel %vm805, %v816, %v818
    %v820 = vshll.u32 %v780, 8
    %v821 = vmul.u32.u64.compose %v820, %v819
    %v822 = vextract.low.u32 %v821
    %v823 = vextract.high.u32 %v821
    %v824 = vmul.u32.u64.compose %v820, %v815
    %v825 = vextract.low.u32 %v824
    %v826 = vextract.high.u32 %v824
    %v827 = vmul.u32 %v820, %v811
    %v828 = vadd.s32 %v823, %v825
    %vm829 = vc.u32 %v823, %v825
    %v830 = vadd.s32 %v826, 1
    %v831 = vsel %vm829, %v830, %v826
    %v832 = vadd.s32 %v827, %v831
    %v833 = vadd.s32 %v832, 536870912
    %v834 = vshrl.u32 %v833, 30
    %v835 = vshll.u32 %v834, 30
    %v836 = vsub.s32 %v832, %v835
    %vm837 = vcmp.lt.s32.totalorder %v836, 0
    %v838 = vsub.s32 0, %v836
    %v839 = vsel %vm837, %v838, %v836
    %v840 = vclz %v839
    %v841 = vsub.s32 %v840, 2
    %vm842 = vcmp.gt.s32.totalorder 0, %v841
    %v843 = vsel %vm842, 0, %v841
    %v844 = vsub.s32 32, %v843
    %v845 = vshll.u32 %v836, %v843
    %v846 = vshrl.u32 %v828, %v844
    %v847 = vor.u32 %v845, %v846
    %v848 = vsub.s32 4294967266, %v843
    %v849 = vadd.s32 %v848, 127
    %v850 = vshll.u32 %v849, 23
    %v851 = vor.u32 4788187, %v850
    %v852 = vand.u32 2147483647, %v851
    %v854 = vcvt.s32.f32 %v847
    %v855 = vmul.f32 %v854, %v852
    %v856 = vxor.u32 %v855, 2147483648
    %v857 = vsel %vm774, %v856, %v855
    %v858 = vsub.s32 4, %v834
    %v859 = vsel %vm774, %v858, %v834
    %v860 = vsel %vm773, %v246, %v857
    %v861 = vsel %vm773, 0, %v859
    %v862 = vcosq.f32.pop %v860
    %v863 = vsinq.f32.pop %v860
    %vm864 = vweird.f32 %v246
    %v865 = vadd.s32 %v861, 3
    %v866 = vand.u32 %v865, 3
    %vm867 = vcmp.lt.s32.totalorder %v866, 2
    %vm868 = vcmp.eq.s32.totalorder %v866, 0
    %v869 = vxor.u32 %v863, 2147483648
    %v870 = vsel %vm868, %v862, %v869
    %vm871 = vcmp.eq.s32.totalorder %v866, 2
    %v872 = vxor.u32 %v862, 2147483648
    %v873 = vsel %vm871, %v872, %v863
    %v874 = vsel %vm867, %v870, %v873
    %v875 = vsel %vm864, nan, %v874
    %v876 = vand.u32 2147483647, %v249
    %vm877 = vcmp.le.f32.partialorder %v876, 0.7853982
    %vm878 = vcmp.lt.s32.totalorder %v249, 0
    %v879 = vand.u32 %v249, 2139095040
    %v880 = vshrl.u32 %v879, 23
    %v881 = vsub.s32 %v880, 127
    %v882 = vand.u32 2147483647, %v249
    %v883 = vand.u32 %v882, 8388607
    %v884 = vor.u32 %v883, 8388608
    %v885 = vsub.s32 0, %v884
    %v886 = vadd.s32 %v881, 1
    %vm887 = vcmp.gt.s32.totalorder %v886, 0
    %v888 = vsel %vm887, %v886, 0
    %v889 = vshrl.u32 %v888, 5
    %v890 = vand.u32 %v888, 31
    %v891 = vsub.s32 32, %v890
    %v892 = vshrl.u32 683565275, %v891
    %v893 = vshll.u32 683565275, %v890
    %v894 = vshrl.u32 2475754826, %v891
    %v895 = vor.u32 %v893, %v894
    %v896 = vshll.u32 2475754826, %v890
    %v897 = vshrl.u32 2131351028, %v891
    %v898 = vor.u32 %v896, %v897
    %v899 = vshll.u32 2131351028, %v890
    %v900 = vshrl.u32 2102212464, %v891
    %v901 = vor.u32 %v899, %v900
    %v902 = vshll.u32 2102212464, %v890
    %v903 = vshrl.u32 920167782, %v891
    %v904 = vor.u32 %v902, %v903
    %v905 = vshll.u32 920167782, %v890
    %v906 = vshrl.u32 1326507024, %v891
    %v907 = vor.u32 %v905, %v906
    %vm908 = vcmp.lt.s32.totalorder %v889, 1
    %vm909 = vcmp.lt.s32.totalorder %v889, 2
    %vm910 = vcmp.lt.s32.totalorder %v889, 3
    %vm911 = vcmp.lt.s32.totalorder %v889, 4
    %v912 = vsel %vm908, %v892, %v895
    %v913 = vsel %vm911, %v901, 2102212464
    %v914 = vsel %vm910, %v898, %v913
    %v915 = vsel %vm909, %v912, %v914
    %v916 = vsel %vm908, %v895, %v898
    %v917 = vsel %vm911, %v904, 920167782
    %v918 = vsel %vm910, %v901, %v917
    %v919 = vsel %vm909, %v916, %v918
    %v920 = vsel %vm908, %v898, %v901
    %v921 = vsel %vm911, %v907, 1326507024
    %v922 = vsel %vm910, %v904, %v921
    %v923 = vsel %vm909, %v920, %v922
    %v924 = vshll.u32 %v884, 8
    %v925 = vmul.u32.u64.compose %v924, %v923
    %v926 = vextract.low.u32 %v925
    %v927 = vextract.high.u32 %v925
    %v928 = vmul.u32.u64.compose %v924, %v919
    %v929 = vextract.low.u32 %v928
    %v930 = vextract.high.u32 %v928
    %v931 = vmul.u32 %v924, %v915
    %v932 = vadd.s32 %v927, %v929
    %vm933 = vc.u32 %v927, %v929
    %v934 = vadd.s32 %v930, 1
    %v935 = vsel %vm933, %v934, %v930
    %v936 = vadd.s32 %v931, %v935
    %v937 = vadd.s32 %v936, 536870912
    %v938 = vshrl.u32 %v937, 30
    %v939 = vshll.u32 %v938, 30
    %v940 = vsub.s32 %v936, %v939
    %vm941 = vcmp.lt.s32.totalorder %v940, 0
    %v942 = vsub.s32 0, %v940
    %v943 = vsel %vm941, %v942, %v940
    %v944 = vclz %v943
    %v945 = vsub.s32 %v944, 2
    %vm946 = vcmp.gt.s32.totalorder 0, %v945
    %v947 = vsel %vm946, 0, %v945
    %v948 = vsub.s32 32, %v947
    %v949 = vshll.u32 %v940, %v947
    %v950 = vshrl.u32 %v932, %v948
    %v951 = vor.u32 %v949, %v950
    %v952 = vsub.s32 4294967266, %v947
    %v953 = vadd.s32 %v952, 127
    %v954 = vshll.u32 %v953, 23
    %v955 = vor.u32 4788187, %v954
    %v956 = vand.u32 2147483647, %v955
    %v958 = vcvt.s32.f32 %v951
    %v959 = vmul.f32 %v958, %v956
    %v960 = vxor.u32 %v959, 2147483648
    %v961 = vsel %vm878, %v960, %v959
    %v962 = vsub.s32 4, %v938
    %v963 = vsel %vm878, %v962, %v938
    %v964 = vsel %vm877, %v249, %v961
    %v965 = vsel %vm877, 0, %v963
    %v966 = vcosq.f32.pop %v964
    %v967 = vsinq.f32.pop %v964
    %vm968 = vweird.f32 %v249
    %v969 = vadd.s32 %v965, 3
    %v970 = vand.u32 %v969, 3
    %vm971 = vcmp.lt.s32.totalorder %v970, 2
    %vm972 = vcmp.eq.s32.totalorder %v970, 0
    %v973 = vxor.u32 %v967, 2147483648
    %v974 = vsel %vm972, %v966, %v973
    %vm975 = vcmp.eq.s32.totalorder %v970, 2
    %v976 = vxor.u32 %v966, 2147483648
    %v977 = vsel %vm975, %v976, %v967
    %v978 = vsel %vm971, %v974, %v977
    %v979 = vsel %vm968, nan, %v978
    %v980 = vand.u32 2147483647, %v254
    %vm981 = vcmp.le.f32.partialorder %v980, 0.7853982
    %vm982 = vcmp.lt.s32.totalorder %v254, 0
    %v983 = vand.u32 %v254, 2139095040
    %v984 = vshrl.u32 %v983, 23
    %v985 = vsub.s32 %v984, 127
    %v986 = vand.u32 2147483647, %v254
    %v987 = vand.u32 %v986, 8388607
    %v988 = vor.u32 %v987, 8388608
    %v989 = vsub.s32 0, %v988
    %v990 = vadd.s32 %v985, 1
    %vm991 = vcmp.gt.s32.totalorder %v990, 0
    %v992 = vsel %vm991, %v990, 0
    %v993 = vshrl.u32 %v992, 5
    %v994 = vand.u32 %v992, 31
    %v995 = vsub.s32 32, %v994
    %v996 = vshrl.u32 683565275, %v995
    %v997 = vshll.u32 683565275, %v994
    %v998 = vshrl.u32 2475754826, %v995
    %v999 = vor.u32 %v997, %v998
    %v1000 = vshll.u32 2475754826, %v994
    %v1001 = vshrl.u32 2131351028, %v995
    %v1002 = vor.u32 %v1000, %v1001
    %v1003 = vshll.u32 2131351028, %v994
    %v1004 = vshrl.u32 2102212464, %v995
    %v1005 = vor.u32 %v1003, %v1004
    %v1006 = vshll.u32 2102212464, %v994
    %v1007 = vshrl.u32 920167782, %v995
    %v1008 = vor.u32 %v1006, %v1007
    %v1009 = vshll.u32 920167782, %v994
    %v1010 = vshrl.u32 1326507024, %v995
    %v1011 = vor.u32 %v1009, %v1010
    %vm1012 = vcmp.lt.s32.totalorder %v993, 1
    %vm1013 = vcmp.lt.s32.totalorder %v993, 2
    %vm1014 = vcmp.lt.s32.totalorder %v993, 3
    %vm1015 = vcmp.lt.s32.totalorder %v993, 4
    %v1016 = vsel %vm1012, %v996, %v999
    %v1017 = vsel %vm1015, %v1005, 2102212464
    %v1018 = vsel %vm1014, %v1002, %v1017
    %v1019 = vsel %vm1013, %v1016, %v1018
    %v1020 = vsel %vm1012, %v999, %v1002
    %v1021 = vsel %vm1015, %v1008, 920167782
    %v1022 = vsel %vm1014, %v1005, %v1021
    %v1023 = vsel %vm1013, %v1020, %v1022
    %v1024 = vsel %vm1012, %v1002, %v1005
    %v1025 = vsel %vm1015, %v1011, 1326507024
    %v1026 = vsel %vm1014, %v1008, %v1025
    %v1027 = vsel %vm1013, %v1024, %v1026
    %v1028 = vshll.u32 %v988, 8
    %v1029 = vmul.u32.u64.compose %v1028, %v1027
    %v1030 = vextract.low.u32 %v1029
    %v1031 = vextract.high.u32 %v1029
    %v1032 = vmul.u32.u64.compose %v1028, %v1023
    %v1033 = vextract.low.u32 %v1032
    %v1034 = vextract.high.u32 %v1032
    %v1035 = vmul.u32 %v1028, %v1019
    %v1036 = vadd.s32 %v1031, %v1033
    %vm1037 = vc.u32 %v1031, %v1033
    %v1038 = vadd.s32 %v1034, 1
    %v1039 = vsel %vm1037, %v1038, %v1034
    %v1040 = vadd.s32 %v1035, %v1039
    %v1041 = vadd.s32 %v1040, 536870912
    %v1042 = vshrl.u32 %v1041, 30
    %v1043 = vshll.u32 %v1042, 30
    %v1044 = vsub.s32 %v1040, %v1043
    %vm1045 = vcmp.lt.s32.totalorder %v1044, 0
    %v1046 = vsub.s32 0, %v1044
    %v1047 = vsel %vm1045, %v1046, %v1044
    %v1048 = vclz %v1047
    %v1049 = vsub.s32 %v1048, 2
    %vm1050 = vcmp.gt.s32.totalorder 0, %v1049
    %v1051 = vsel %vm1050, 0, %v1049
    %v1052 = vsub.s32 32, %v1051
    %v1053 = vshll.u32 %v1044, %v1051
    %v1054 = vshrl.u32 %v1036, %v1052
    %v1055 = vor.u32 %v1053, %v1054
    %v1056 = vsub.s32 4294967266, %v1051
    %v1057 = vadd.s32 %v1056, 127
    %v1058 = vshll.u32 %v1057, 23
    %v1059 = vor.u32 4788187, %v1058
    %v1060 = vand.u32 2147483647, %v1059
    %v1062 = vcvt.s32.f32 %v1055
    %v1063 = vmul.f32 %v1062, %v1060
    %v1064 = vxor.u32 %v1063, 2147483648
    %v1065 = vsel %vm982, %v1064, %v1063
    %v1066 = vsub.s32 4, %v1042
    %v1067 = vsel %vm982, %v1066, %v1042
    %v1068 = vsel %vm981, %v254, %v1065
    %v1069 = vsel %vm981, 0, %v1067
    %v1070 = vcosq.f32.pop %v1068
    %v1071 = vsinq.f32.pop %v1068
    %vm1072 = vweird.f32 %v254
    %v1073 = vadd.s32 %v1069, 3
    %v1074 = vand.u32 %v1073, 3
    %vm1075 = vcmp.lt.s32.totalorder %v1074, 2
    %vm1076 = vcmp.eq.s32.totalorder %v1074, 0
    %v1077 = vxor.u32 %v1071, 2147483648
    %v1078 = vsel %vm1076, %v1070, %v1077
    %vm1079 = vcmp.eq.s32.totalorder %v1074, 2
    %v1080 = vxor.u32 %v1070, 2147483648
    %v1081 = vsel %vm1079, %v1080, %v1071
    %v1082 = vsel %vm1075, %v1078, %v1081
    %v1083 = vsel %vm1072, nan, %v1082
    %v1084 = vand.u32 2147483647, %v257
    %vm1085 = vcmp.le.f32.partialorder %v1084, 0.7853982
    %vm1086 = vcmp.lt.s32.totalorder %v257, 0
    %v1087 = vand.u32 %v257, 2139095040
    %v1088 = vshrl.u32 %v1087, 23
    %v1089 = vsub.s32 %v1088, 127
    %v1090 = vand.u32 2147483647, %v257
    %v1091 = vand.u32 %v1090, 8388607
    %v1092 = vor.u32 %v1091, 8388608
    %v1093 = vsub.s32 0, %v1092
    %v1094 = vadd.s32 %v1089, 1
    %vm1095 = vcmp.gt.s32.totalorder %v1094, 0
    %v1096 = vsel %vm1095, %v1094, 0
    %v1097 = vshrl.u32 %v1096, 5
    %v1098 = vand.u32 %v1096, 31
    %v1099 = vsub.s32 32, %v1098
    %v1100 = vshrl.u32 683565275, %v1099
    %v1101 = vshll.u32 683565275, %v1098
    %v1102 = vshrl.u32 2475754826, %v1099
    %v1103 = vor.u32 %v1101, %v1102
    %v1104 = vshll.u32 2475754826, %v1098
    %v1105 = vshrl.u32 2131351028, %v1099
    %v1106 = vor.u32 %v1104, %v1105
    %v1107 = vshll.u32 2131351028, %v1098
    %v1108 = vshrl.u32 2102212464, %v1099
    %v1109 = vor.u32 %v1107, %v1108
    %v1110 = vshll.u32 2102212464, %v1098
    %v1111 = vshrl.u32 920167782, %v1099
    %v1112 = vor.u32 %v1110, %v1111
    %v1113 = vshll.u32 920167782, %v1098
    %v1114 = vshrl.u32 1326507024, %v1099
    %v1115 = vor.u32 %v1113, %v1114
    %vm1116 = vcmp.lt.s32.totalorder %v1097, 1
    %vm1117 = vcmp.lt.s32.totalorder %v1097, 2
    %vm1118 = vcmp.lt.s32.totalorder %v1097, 3
    %vm1119 = vcmp.lt.s32.totalorder %v1097, 4
    %v1120 = vsel %vm1116, %v1100, %v1103
    %v1121 = vsel %vm1119, %v1109, 2102212464
    %v1122 = vsel %vm1118, %v1106, %v1121
    %v1123 = vsel %vm1117, %v1120, %v1122
    %v1124 = vsel %vm1116, %v1103, %v1106
    %v1125 = vsel %vm1119, %v1112, 920167782
    %v1126 = vsel %vm1118, %v1109, %v1125
    %v1127 = vsel %vm1117, %v1124, %v1126
    %v1128 = vsel %vm1116, %v1106, %v1109
    %v1129 = vsel %vm1119, %v1115, 1326507024
    %v1130 = vsel %vm1118, %v1112, %v1129
    %v1131 = vsel %vm1117, %v1128, %v1130
    %v1132 = vshll.u32 %v1092, 8
    %v1133 = vmul.u32.u64.compose %v1132, %v1131
    %v1134 = vextract.low.u32 %v1133
    %v1135 = vextract.high.u32 %v1133
    %v1136 = vmul.u32.u64.compose %v1132, %v1127
    %v1137 = vextract.low.u32 %v1136
    %v1138 = vextract.high.u32 %v1136
    %v1139 = vmul.u32 %v1132, %v1123
    %v1140 = vadd.s32 %v1135, %v1137
    %vm1141 = vc.u32 %v1135, %v1137
    %v1142 = vadd.s32 %v1138, 1
    %v1143 = vsel %vm1141, %v1142, %v1138
    %v1144 = vadd.s32 %v1139, %v1143
    %v1145 = vadd.s32 %v1144, 536870912
    %v1146 = vshrl.u32 %v1145, 30
    %v1147 = vshll.u32 %v1146, 30
    %v1148 = vsub.s32 %v1144, %v1147
    %vm1149 = vcmp.lt.s32.totalorder %v1148, 0
    %v1150 = vsub.s32 0, %v1148
    %v1151 = vsel %vm1149, %v1150, %v1148
    %v1152 = vclz %v1151
    %v1153 = vsub.s32 %v1152, 2
    %vm1154 = vcmp.gt.s32.totalorder 0, %v1153
    %v1155 = vsel %vm1154, 0, %v1153
    %v1156 = vsub.s32 32, %v1155
    %v1157 = vshll.u32 %v1148, %v1155
    %v1158 = vshrl.u32 %v1140, %v1156
    %v1159 = vor.u32 %v1157, %v1158
    %v1160 = vsub.s32 4294967266, %v1155
    %v1161 = vadd.s32 %v1160, 127
    %v1162 = vshll.u32 %v1161, 23
    %v1163 = vor.u32 4788187, %v1162
    %v1164 = vand.u32 2147483647, %v1163
    %v1166 = vcvt.s32.f32 %v1159
    %v1167 = vmul.f32 %v1166, %v1164
    %v1168 = vxor.u32 %v1167, 2147483648
    %v1169 = vsel %vm1086, %v1168, %v1167
    %v1170 = vsub.s32 4, %v1146
    %v1171 = vsel %vm1086, %v1170, %v1146
    %v1172 = vsel %vm1085, %v257, %v1169
    %v1173 = vsel %vm1085, 0, %v1171
    %v1174 = vcosq.f32.pop %v1172
    %v1175 = vsinq.f32.pop %v1172
    %vm1176 = vweird.f32 %v257
    %v1177 = vadd.s32 %v1173, 3
    %v1178 = vand.u32 %v1177, 3
    %vm1179 = vcmp.lt.s32.totalorder %v1178, 2
    %vm1180 = vcmp.eq.s32.totalorder %v1178, 0
    %v1181 = vxor.u32 %v1175, 2147483648
    %v1182 = vsel %vm1180, %v1174, %v1181
    %vm1183 = vcmp.eq.s32.totalorder %v1178, 2
    %v1184 = vxor.u32 %v1174, 2147483648
    %v1185 = vsel %vm1183, %v1184, %v1175
    %v1186 = vsel %vm1179, %v1182, %v1185
    %v1187 = vsel %vm1176, nan, %v1186
    %v1188 = vand.u32 2147483647, %v262
    %vm1189 = vcmp.le.f32.partialorder %v1188, 0.7853982
    %vm1190 = vcmp.lt.s32.totalorder %v262, 0
    %v1191 = vand.u32 %v262, 2139095040
    %v1192 = vshrl.u32 %v1191, 23
    %v1193 = vsub.s32 %v1192, 127
    %v1194 = vand.u32 2147483647, %v262
    %v1195 = vand.u32 %v1194, 8388607
    %v1196 = vor.u32 %v1195, 8388608
    %v1197 = vsub.s32 0, %v1196
    %v1198 = vadd.s32 %v1193, 1
    %vm1199 = vcmp.gt.s32.totalorder %v1198, 0
    %v1200 = vsel %vm1199, %v1198, 0
    %v1201 = vshrl.u32 %v1200, 5
    %v1202 = vand.u32 %v1200, 31
    %v1203 = vsub.s32 32, %v1202
    %v1204 = vshrl.u32 683565275, %v1203
    %v1205 = vshll.u32 683565275, %v1202
    %v1206 = vshrl.u32 2475754826, %v1203
    %v1207 = vor.u32 %v1205, %v1206
    %v1208 = vshll.u32 2475754826, %v1202
    %v1209 = vshrl.u32 2131351028, %v1203
    %v1210 = vor.u32 %v1208, %v1209
    %v1211 = vshll.u32 2131351028, %v1202
    %v1212 = vshrl.u32 2102212464, %v1203
    %v1213 = vor.u32 %v1211, %v1212
    %v1214 = vshll.u32 2102212464, %v1202
    %v1215 = vshrl.u32 920167782, %v1203
    %v1216 = vor.u32 %v1214, %v1215
    %v1217 = vshll.u32 920167782, %v1202
    %v1218 = vshrl.u32 1326507024, %v1203
    %v1219 = vor.u32 %v1217, %v1218
    %vm1220 = vcmp.lt.s32.totalorder %v1201, 1
    %vm1221 = vcmp.lt.s32.totalorder %v1201, 2
    %vm1222 = vcmp.lt.s32.totalorder %v1201, 3
    %vm1223 = vcmp.lt.s32.totalorder %v1201, 4
    %v1224 = vsel %vm1220, %v1204, %v1207
    %v1225 = vsel %vm1223, %v1213, 2102212464
    %v1226 = vsel %vm1222, %v1210, %v1225
    %v1227 = vsel %vm1221, %v1224, %v1226
    %v1228 = vsel %vm1220, %v1207, %v1210
    %v1229 = vsel %vm1223, %v1216, 920167782
    %v1230 = vsel %vm1222, %v1213, %v1229
    %v1231 = vsel %vm1221, %v1228, %v1230
    %v1232 = vsel %vm1220, %v1210, %v1213
    %v1233 = vsel %vm1223, %v1219, 1326507024
    %v1234 = vsel %vm1222, %v1216, %v1233
    %v1235 = vsel %vm1221, %v1232, %v1234
    %v1236 = vshll.u32 %v1196, 8
    %v1237 = vmul.u32.u64.compose %v1236, %v1235
    %v1238 = vextract.low.u32 %v1237
    %v1239 = vextract.high.u32 %v1237
    %v1240 = vmul.u32.u64.compose %v1236, %v1231
    %v1241 = vextract.low.u32 %v1240
    %v1242 = vextract.high.u32 %v1240
    %v1243 = vmul.u32 %v1236, %v1227
    %v1244 = vadd.s32 %v1239, %v1241
    %vm1245 = vc.u32 %v1239, %v1241
    %v1246 = vadd.s32 %v1242, 1
    %v1247 = vsel %vm1245, %v1246, %v1242
    %v1248 = vadd.s32 %v1243, %v1247
    %v1249 = vadd.s32 %v1248, 536870912
    %v1250 = vshrl.u32 %v1249, 30
    %v1251 = vshll.u32 %v1250, 30
    %v1252 = vsub.s32 %v1248, %v1251
    %vm1253 = vcmp.lt.s32.totalorder %v1252, 0
    %v1254 = vsub.s32 0, %v1252
    %v1255 = vsel %vm1253, %v1254, %v1252
    %v1256 = vclz %v1255
    %v1257 = vsub.s32 %v1256, 2
    %vm1258 = vcmp.gt.s32.totalorder 0, %v1257
    %v1259 = vsel %vm1258, 0, %v1257
    %v1260 = vsub.s32 32, %v1259
    %v1261 = vshll.u32 %v1252, %v1259
    %v1262 = vshrl.u32 %v1244, %v1260
    %v1263 = vor.u32 %v1261, %v1262
    %v1264 = vsub.s32 4294967266, %v1259
    %v1265 = vadd.s32 %v1264, 127
    %v1266 = vshll.u32 %v1265, 23
    %v1267 = vor.u32 4788187, %v1266
    %v1268 = vand.u32 2147483647, %v1267
    %v1270 = vcvt.s32.f32 %v1263
    %v1271 = vmul.f32 %v1270, %v1268
    %v1272 = vxor.u32 %v1271, 2147483648
    %v1273 = vsel %vm1190, %v1272, %v1271
    %v1274 = vsub.s32 4, %v1250
    %v1275 = vsel %vm1190, %v1274, %v1250
    %v1276 = vsel %vm1189, %v262, %v1273
    %v1277 = vsel %vm1189, 0, %v1275
    %v1278 = vcosq.f32.pop %v1276
    %v1279 = vsinq.f32.pop %v1276
    %vm1280 = vweird.f32 %v262
    %v1281 = vadd.s32 %v1277, 3
    %v1282 = vand.u32 %v1281, 3
    %vm1283 = vcmp.lt.s32.totalorder %v1282, 2
    %vm1284 = vcmp.eq.s32.totalorder %v1282, 0
    %v1285 = vxor.u32 %v1279, 2147483648
    %v1286 = vsel %vm1284, %v1278, %v1285
    %vm1287 = vcmp.eq.s32.totalorder %v1282, 2
    %v1288 = vxor.u32 %v1278, 2147483648
    %v1289 = vsel %vm1287, %v1288, %v1279
    %v1290 = vsel %vm1283, %v1286, %v1289
    %v1291 = vsel %vm1280, nan, %v1290
    %v1292 = vand.u32 2147483647, %v265
    %vm1293 = vcmp.le.f32.partialorder %v1292, 0.7853982
    %vm1294 = vcmp.lt.s32.totalorder %v265, 0
    %v1295 = vand.u32 %v265, 2139095040
    %v1296 = vshrl.u32 %v1295, 23
    %v1297 = vsub.s32 %v1296, 127
    %v1298 = vand.u32 2147483647, %v265
    %v1299 = vand.u32 %v1298, 8388607
    %v1300 = vor.u32 %v1299, 8388608
    %v1301 = vsub.s32 0, %v1300
    %v1302 = vadd.s32 %v1297, 1
    %vm1303 = vcmp.gt.s32.totalorder %v1302, 0
    %v1304 = vsel %vm1303, %v1302, 0
    %v1305 = vshrl.u32 %v1304, 5
    %v1306 = vand.u32 %v1304, 31
    %v1307 = vsub.s32 32, %v1306
    %v1308 = vshrl.u32 683565275, %v1307
    %v1309 = vshll.u32 683565275, %v1306
    %v1310 = vshrl.u32 2475754826, %v1307
    %v1311 = vor.u32 %v1309, %v1310
    %v1312 = vshll.u32 2475754826, %v1306
    %v1313 = vshrl.u32 2131351028, %v1307
    %v1314 = vor.u32 %v1312, %v1313
    %v1315 = vshll.u32 2131351028, %v1306
    %v1316 = vshrl.u32 2102212464, %v1307
    %v1317 = vor.u32 %v1315, %v1316
    %v1318 = vshll.u32 2102212464, %v1306
    %v1319 = vshrl.u32 920167782, %v1307
    %v1320 = vor.u32 %v1318, %v1319
    %v1321 = vshll.u32 920167782, %v1306
    %v1322 = vshrl.u32 1326507024, %v1307
    %v1323 = vor.u32 %v1321, %v1322
    %vm1324 = vcmp.lt.s32.totalorder %v1305, 1
    %vm1325 = vcmp.lt.s32.totalorder %v1305, 2
    %vm1326 = vcmp.lt.s32.totalorder %v1305, 3
    %vm1327 = vcmp.lt.s32.totalorder %v1305, 4
    %v1328 = vsel %vm1324, %v1308, %v1311
    %v1329 = vsel %vm1327, %v1317, 2102212464
    %v1330 = vsel %vm1326, %v1314, %v1329
    %v1331 = vsel %vm1325, %v1328, %v1330
    %v1332 = vsel %vm1324, %v1311, %v1314
    %v1333 = vsel %vm1327, %v1320, 920167782
    %v1334 = vsel %vm1326, %v1317, %v1333
    %v1335 = vsel %vm1325, %v1332, %v1334
    %v1336 = vsel %vm1324, %v1314, %v1317
    %v1337 = vsel %vm1327, %v1323, 1326507024
    %v1338 = vsel %vm1326, %v1320, %v1337
    %v1339 = vsel %vm1325, %v1336, %v1338
    %v1340 = vshll.u32 %v1300, 8
    %v1341 = vmul.u32.u64.compose %v1340, %v1339
    %v1342 = vextract.low.u32 %v1341
    %v1343 = vextract.high.u32 %v1341
    %v1344 = vmul.u32.u64.compose %v1340, %v1335
    %v1345 = vextract.low.u32 %v1344
    %v1346 = vextract.high.u32 %v1344
    %v1347 = vmul.u32 %v1340, %v1331
    %v1348 = vadd.s32 %v1343, %v1345
    %vm1349 = vc.u32 %v1343, %v1345
    %v1350 = vadd.s32 %v1346, 1
    %v1351 = vsel %vm1349, %v1350, %v1346
    %v1352 = vadd.s32 %v1347, %v1351
    %v1353 = vadd.s32 %v1352, 536870912
    %v1354 = vshrl.u32 %v1353, 30
    %v1355 = vshll.u32 %v1354, 30
    %v1356 = vsub.s32 %v1352, %v1355
    %vm1357 = vcmp.lt.s32.totalorder %v1356, 0
    %v1358 = vsub.s32 0, %v1356
    %v1359 = vsel %vm1357, %v1358, %v1356
    %v1360 = vclz %v1359
    %v1361 = vsub.s32 %v1360, 2
    %vm1362 = vcmp.gt.s32.totalorder 0, %v1361
    %v1363 = vsel %vm1362, 0, %v1361
    %v1364 = vsub.s32 32, %v1363
    %v1365 = vshll.u32 %v1356, %v1363
    %v1366 = vshrl.u32 %v1348, %v1364
    %v1367 = vor.u32 %v1365, %v1366
    %v1368 = vsub.s32 4294967266, %v1363
    %v1369 = vadd.s32 %v1368, 127
    %v1370 = vshll.u32 %v1369, 23
    %v1371 = vor.u32 4788187, %v1370
    %v1372 = vand.u32 2147483647, %v1371
    %v1374 = vcvt.s32.f32 %v1367
    %v1375 = vmul.f32 %v1374, %v1372
    %v1376 = vxor.u32 %v1375, 2147483648
    %v1377 = vsel %vm1294, %v1376, %v1375
    %v1378 = vsub.s32 4, %v1354
    %v1379 = vsel %vm1294, %v1378, %v1354
    %v1380 = vsel %vm1293, %v265, %v1377
    %v1381 = vsel %vm1293, 0, %v1379
    %v1382 = vcosq.f32.pop %v1380
    %v1383 = vsinq.f32.pop %v1380
    %vm1384 = vweird.f32 %v265
    %v1385 = vadd.s32 %v1381, 3
    %v1386 = vand.u32 %v1385, 3
    %vm1387 = vcmp.lt.s32.totalorder %v1386, 2
    %vm1388 = vcmp.eq.s32.totalorder %v1386, 0
    %v1389 = vxor.u32 %v1383, 2147483648
    %v1390 = vsel %vm1388, %v1382, %v1389
    %vm1391 = vcmp.eq.s32.totalorder %v1386, 2
    %v1392 = vxor.u32 %v1382, 2147483648
    %v1393 = vsel %vm1391, %v1392, %v1383
    %v1394 = vsel %vm1387, %v1390, %v1393
    %v1395 = vsel %vm1384, nan, %v1394
    %v1396 = vand.u32 2147483647, %v270
    %vm1397 = vcmp.le.f32.partialorder %v1396, 0.7853982
    %vm1398 = vcmp.lt.s32.totalorder %v270, 0
    %v1399 = vand.u32 %v270, 2139095040
    %v1400 = vshrl.u32 %v1399, 23
    %v1401 = vsub.s32 %v1400, 127
    %v1402 = vand.u32 2147483647, %v270
    %v1403 = vand.u32 %v1402, 8388607
    %v1404 = vor.u32 %v1403, 8388608
    %v1405 = vsub.s32 0, %v1404
    %v1406 = vadd.s32 %v1401, 1
    %vm1407 = vcmp.gt.s32.totalorder %v1406, 0
    %v1408 = vsel %vm1407, %v1406, 0
    %v1409 = vshrl.u32 %v1408, 5
    %v1410 = vand.u32 %v1408, 31
    %v1411 = vsub.s32 32, %v1410
    %v1412 = vshrl.u32 683565275, %v1411
    %v1413 = vshll.u32 683565275, %v1410
    %v1414 = vshrl.u32 2475754826, %v1411
    %v1415 = vor.u32 %v1413, %v1414
    %v1416 = vshll.u32 2475754826, %v1410
    %v1417 = vshrl.u32 2131351028, %v1411
    %v1418 = vor.u32 %v1416, %v1417
    %v1419 = vshll.u32 2131351028, %v1410
    %v1420 = vshrl.u32 2102212464, %v1411
    %v1421 = vor.u32 %v1419, %v1420
    %v1422 = vshll.u32 2102212464, %v1410
    %v1423 = vshrl.u32 920167782, %v1411
    %v1424 = vor.u32 %v1422, %v1423
    %v1425 = vshll.u32 920167782, %v1410
    %v1426 = vshrl.u32 1326507024, %v1411
    %v1427 = vor.u32 %v1425, %v1426
    %vm1428 = vcmp.lt.s32.totalorder %v1409, 1
    %vm1429 = vcmp.lt.s32.totalorder %v1409, 2
    %vm1430 = vcmp.lt.s32.totalorder %v1409, 3
    %vm1431 = vcmp.lt.s32.totalorder %v1409, 4
    %v1432 = vsel %vm1428, %v1412, %v1415
    %v1433 = vsel %vm1431, %v1421, 2102212464
    %v1434 = vsel %vm1430, %v1418, %v1433
    %v1435 = vsel %vm1429, %v1432, %v1434
    %v1436 = vsel %vm1428, %v1415, %v1418
    %v1437 = vsel %vm1431, %v1424, 920167782
    %v1438 = vsel %vm1430, %v1421, %v1437
    %v1439 = vsel %vm1429, %v1436, %v1438
    %v1440 = vsel %vm1428, %v1418, %v1421
    %v1441 = vsel %vm1431, %v1427, 1326507024
    %v1442 = vsel %vm1430, %v1424, %v1441
    %v1443 = vsel %vm1429, %v1440, %v1442
    %v1444 = vshll.u32 %v1404, 8
    %v1445 = vmul.u32.u64.compose %v1444, %v1443
    %v1446 = vextract.low.u32 %v1445
    %v1447 = vextract.high.u32 %v1445
    %v1448 = vmul.u32.u64.compose %v1444, %v1439
    %v1449 = vextract.low.u32 %v1448
    %v1450 = vextract.high.u32 %v1448
    %v1451 = vmul.u32 %v1444, %v1435
    %v1452 = vadd.s32 %v1447, %v1449
    %vm1453 = vc.u32 %v1447, %v1449
    %v1454 = vadd.s32 %v1450, 1
    %v1455 = vsel %vm1453, %v1454, %v1450
    %v1456 = vadd.s32 %v1451, %v1455
    %v1457 = vadd.s32 %v1456, 536870912
    %v1458 = vshrl.u32 %v1457, 30
    %v1459 = vshll.u32 %v1458, 30
    %v1460 = vsub.s32 %v1456, %v1459
    %vm1461 = vcmp.lt.s32.totalorder %v1460, 0
    %v1462 = vsub.s32 0, %v1460
    %v1463 = vsel %vm1461, %v1462, %v1460
    %v1464 = vclz %v1463
    %v1465 = vsub.s32 %v1464, 2
    %vm1466 = vcmp.gt.s32.totalorder 0, %v1465
    %v1467 = vsel %vm1466, 0, %v1465
    %v1468 = vsub.s32 32, %v1467
    %v1469 = vshll.u32 %v1460, %v1467
    %v1470 = vshrl.u32 %v1452, %v1468
    %v1471 = vor.u32 %v1469, %v1470
    %v1472 = vsub.s32 4294967266, %v1467
    %v1473 = vadd.s32 %v1472, 127
    %v1474 = vshll.u32 %v1473, 23
    %v1475 = vor.u32 4788187, %v1474
    %v1476 = vand.u32 2147483647, %v1475
    %v1478 = vcvt.s32.f32 %v1471
    %v1479 = vmul.f32 %v1478, %v1476
    %v1480 = vxor.u32 %v1479, 2147483648
    %v1481 = vsel %vm1398, %v1480, %v1479
    %v1482 = vsub.s32 4, %v1458
    %v1483 = vsel %vm1398, %v1482, %v1458
    %v1484 = vsel %vm1397, %v270, %v1481
    %v1485 = vsel %vm1397, 0, %v1483
    %v1486 = vcosq.f32.pop %v1484
    %v1487 = vsinq.f32.pop %v1484
    %vm1488 = vweird.f32 %v270
    %v1489 = vadd.s32 %v1485, 3
    %v1490 = vand.u32 %v1489, 3
    %vm1491 = vcmp.lt.s32.totalorder %v1490, 2
    %vm1492 = vcmp.eq.s32.totalorder %v1490, 0
    %v1493 = vxor.u32 %v1487, 2147483648
    %v1494 = vsel %vm1492, %v1486, %v1493
    %vm1495 = vcmp.eq.s32.totalorder %v1490, 2
    %v1496 = vxor.u32 %v1486, 2147483648
    %v1497 = vsel %vm1495, %v1496, %v1487
    %v1498 = vsel %vm1491, %v1494, %v1497
    %v1499 = vsel %vm1488, nan, %v1498
    %v1500 = vand.u32 2147483647, %v273
    %vm1501 = vcmp.le.f32.partialorder %v1500, 0.7853982
    %vm1502 = vcmp.lt.s32.totalorder %v273, 0
    %v1503 = vand.u32 %v273, 2139095040
    %v1504 = vshrl.u32 %v1503, 23
    %v1505 = vsub.s32 %v1504, 127
    %v1506 = vand.u32 2147483647, %v273
    %v1507 = vand.u32 %v1506, 8388607
    %v1508 = vor.u32 %v1507, 8388608
    %v1509 = vsub.s32 0, %v1508
    %v1510 = vadd.s32 %v1505, 1
    %vm1511 = vcmp.gt.s32.totalorder %v1510, 0
    %v1512 = vsel %vm1511, %v1510, 0
    %v1513 = vshrl.u32 %v1512, 5
    %v1514 = vand.u32 %v1512, 31
    %v1515 = vsub.s32 32, %v1514
    %v1516 = vshrl.u32 683565275, %v1515
    %v1517 = vshll.u32 683565275, %v1514
    %v1518 = vshrl.u32 2475754826, %v1515
    %v1519 = vor.u32 %v1517, %v1518
    %v1520 = vshll.u32 2475754826, %v1514
    %v1521 = vshrl.u32 2131351028, %v1515
    %v1522 = vor.u32 %v1520, %v1521
    %v1523 = vshll.u32 2131351028, %v1514
    %v1524 = vshrl.u32 2102212464, %v1515
    %v1525 = vor.u32 %v1523, %v1524
    %v1526 = vshll.u32 2102212464, %v1514
    %v1527 = vshrl.u32 920167782, %v1515
    %v1528 = vor.u32 %v1526, %v1527
    %v1529 = vshll.u32 920167782, %v1514
    %v1530 = vshrl.u32 1326507024, %v1515
    %v1531 = vor.u32 %v1529, %v1530
    %vm1532 = vcmp.lt.s32.totalorder %v1513, 1
    %vm1533 = vcmp.lt.s32.totalorder %v1513, 2
    %vm1534 = vcmp.lt.s32.totalorder %v1513, 3
    %vm1535 = vcmp.lt.s32.totalorder %v1513, 4
    %v1536 = vsel %vm1532, %v1516, %v1519
    %v1537 = vsel %vm1535, %v1525, 2102212464
    %v1538 = vsel %vm1534, %v1522, %v1537
    %v1539 = vsel %vm1533, %v1536, %v1538
    %v1540 = vsel %vm1532, %v1519, %v1522
    %v1541 = vsel %vm1535, %v1528, 920167782
    %v1542 = vsel %vm1534, %v1525, %v1541
    %v1543 = vsel %vm1533, %v1540, %v1542
    %v1544 = vsel %vm1532, %v1522, %v1525
    %v1545 = vsel %vm1535, %v1531, 1326507024
    %v1546 = vsel %vm1534, %v1528, %v1545
    %v1547 = vsel %vm1533, %v1544, %v1546
    %v1548 = vshll.u32 %v1508, 8
    %v1549 = vmul.u32.u64.compose %v1548, %v1547
    %v1550 = vextract.low.u32 %v1549
    %v1551 = vextract.high.u32 %v1549
    %v1552 = vmul.u32.u64.compose %v1548, %v1543
    %v1553 = vextract.low.u32 %v1552
    %v1554 = vextract.high.u32 %v1552
    %v1555 = vmul.u32 %v1548, %v1539
    %v1556 = vadd.s32 %v1551, %v1553
    %vm1557 = vc.u32 %v1551, %v1553
    %v1558 = vadd.s32 %v1554, 1
    %v1559 = vsel %vm1557, %v1558, %v1554
    %v1560 = vadd.s32 %v1555, %v1559
    %v1561 = vadd.s32 %v1560, 536870912
    %v1562 = vshrl.u32 %v1561, 30
    %v1563 = vshll.u32 %v1562, 30
    %v1564 = vsub.s32 %v1560, %v1563
    %vm1565 = vcmp.lt.s32.totalorder %v1564, 0
    %v1566 = vsub.s32 0, %v1564
    %v1567 = vsel %vm1565, %v1566, %v1564
    %v1568 = vclz %v1567
    %v1569 = vsub.s32 %v1568, 2
    %vm1570 = vcmp.gt.s32.totalorder 0, %v1569
    %v1571 = vsel %vm1570, 0, %v1569
    %v1572 = vsub.s32 32, %v1571
    %v1573 = vshll.u32 %v1564, %v1571
    %v1574 = vshrl.u32 %v1556, %v1572
    %v1575 = vor.u32 %v1573, %v1574
    %v1576 = vsub.s32 4294967266, %v1571
    %v1577 = vadd.s32 %v1576, 127
    %v1578 = vshll.u32 %v1577, 23
    %v1579 = vor.u32 4788187, %v1578
    %v1580 = vand.u32 2147483647, %v1579
    %v1582 = vcvt.s32.f32 %v1575
    %v1583 = vmul.f32 %v1582, %v1580
    %v1584 = vxor.u32 %v1583, 2147483648
    %v1585 = vsel %vm1502, %v1584, %v1583
    %v1586 = vsub.s32 4, %v1562
    %v1587 = vsel %vm1502, %v1586, %v1562
    %v1588 = vsel %vm1501, %v273, %v1585
    %v1589 = vsel %vm1501, 0, %v1587
    %v1590 = vcosq.f32.pop %v1588
    %v1591 = vsinq.f32.pop %v1588
    %vm1592 = vweird.f32 %v273
    %v1593 = vadd.s32 %v1589, 3
    %v1594 = vand.u32 %v1593, 3
    %vm1595 = vcmp.lt.s32.totalorder %v1594, 2
    %vm1596 = vcmp.eq.s32.totalorder %v1594, 0
    %v1597 = vxor.u32 %v1591, 2147483648
    %v1598 = vsel %vm1596, %v1590, %v1597
    %vm1599 = vcmp.eq.s32.totalorder %v1594, 2
    %v1600 = vxor.u32 %v1590, 2147483648
    %v1601 = vsel %vm1599, %v1600, %v1591
    %v1602 = vsel %vm1595, %v1598, %v1601
    %v1603 = vsel %vm1592, nan, %v1602
    %v1604 = vand.u32 2147483647, %v278
    %vm1605 = vcmp.le.f32.partialorder %v1604, 0.7853982
    %vm1606 = vcmp.lt.s32.totalorder %v278, 0
    %v1607 = vand.u32 %v278, 2139095040
    %v1608 = vshrl.u32 %v1607, 23
    %v1609 = vsub.s32 %v1608, 127
    %v1610 = vand.u32 2147483647, %v278
    %v1611 = vand.u32 %v1610, 8388607
    %v1612 = vor.u32 %v1611, 8388608
    %v1613 = vsub.s32 0, %v1612
    %v1614 = vadd.s32 %v1609, 1
    %vm1615 = vcmp.gt.s32.totalorder %v1614, 0
    %v1616 = vsel %vm1615, %v1614, 0
    %v1617 = vshrl.u32 %v1616, 5
    %v1618 = vand.u32 %v1616, 31
    %v1619 = vsub.s32 32, %v1618
    %v1620 = vshrl.u32 683565275, %v1619
    %v1621 = vshll.u32 683565275, %v1618
    %v1622 = vshrl.u32 2475754826, %v1619
    %v1623 = vor.u32 %v1621, %v1622
    %v1624 = vshll.u32 2475754826, %v1618
    %v1625 = vshrl.u32 2131351028, %v1619
    %v1626 = vor.u32 %v1624, %v1625
    %v1627 = vshll.u32 2131351028, %v1618
    %v1628 = vshrl.u32 2102212464, %v1619
    %v1629 = vor.u32 %v1627, %v1628
    %v1630 = vshll.u32 2102212464, %v1618
    %v1631 = vshrl.u32 920167782, %v1619
    %v1632 = vor.u32 %v1630, %v1631
    %v1633 = vshll.u32 920167782, %v1618
    %v1634 = vshrl.u32 1326507024, %v1619
    %v1635 = vor.u32 %v1633, %v1634
    %vm1636 = vcmp.lt.s32.totalorder %v1617, 1
    %vm1637 = vcmp.lt.s32.totalorder %v1617, 2
    %vm1638 = vcmp.lt.s32.totalorder %v1617, 3
    %vm1639 = vcmp.lt.s32.totalorder %v1617, 4
    %v1640 = vsel %vm1636, %v1620, %v1623
    %v1641 = vsel %vm1639, %v1629, 2102212464
    %v1642 = vsel %vm1638, %v1626, %v1641
    %v1643 = vsel %vm1637, %v1640, %v1642
    %v1644 = vsel %vm1636, %v1623, %v1626
    %v1645 = vsel %vm1639, %v1632, 920167782
    %v1646 = vsel %vm1638, %v1629, %v1645
    %v1647 = vsel %vm1637, %v1644, %v1646
    %v1648 = vsel %vm1636, %v1626, %v1629
    %v1649 = vsel %vm1639, %v1635, 1326507024
    %v1650 = vsel %vm1638, %v1632, %v1649
    %v1651 = vsel %vm1637, %v1648, %v1650
    %v1652 = vshll.u32 %v1612, 8
    %v1653 = vmul.u32.u64.compose %v1652, %v1651
    %v1654 = vextract.low.u32 %v1653
    %v1655 = vextract.high.u32 %v1653
    %v1656 = vmul.u32.u64.compose %v1652, %v1647
    %v1657 = vextract.low.u32 %v1656
    %v1658 = vextract.high.u32 %v1656
    %v1659 = vmul.u32 %v1652, %v1643
    %v1660 = vadd.s32 %v1655, %v1657
    %vm1661 = vc.u32 %v1655, %v1657
    %v1662 = vadd.s32 %v1658, 1
    %v1663 = vsel %vm1661, %v1662, %v1658
    %v1664 = vadd.s32 %v1659, %v1663
    %v1665 = vadd.s32 %v1664, 536870912
    %v1666 = vshrl.u32 %v1665, 30
    %v1667 = vshll.u32 %v1666, 30
    %v1668 = vsub.s32 %v1664, %v1667
    %vm1669 = vcmp.lt.s32.totalorder %v1668, 0
    %v1670 = vsub.s32 0, %v1668
    %v1671 = vsel %vm1669, %v1670, %v1668
    %v1672 = vclz %v1671
    %v1673 = vsub.s32 %v1672, 2
    %vm1674 = vcmp.gt.s32.totalorder 0, %v1673
    %v1675 = vsel %vm1674, 0, %v1673
    %v1676 = vsub.s32 32, %v1675
    %v1677 = vshll.u32 %v1668, %v1675
    %v1678 = vshrl.u32 %v1660, %v1676
    %v1679 = vor.u32 %v1677, %v1678
    %v1680 = vsub.s32 4294967266, %v1675
    %v1681 = vadd.s32 %v1680, 127
    %v1682 = vshll.u32 %v1681, 23
    %v1683 = vor.u32 4788187, %v1682
    %v1684 = vand.u32 2147483647, %v1683
    %v1686 = vcvt.s32.f32 %v1679
    %v1687 = vmul.f32 %v1686, %v1684
    %v1688 = vxor.u32 %v1687, 2147483648
    %v1689 = vsel %vm1606, %v1688, %v1687
    %v1690 = vsub.s32 4, %v1666
    %v1691 = vsel %vm1606, %v1690, %v1666
    %v1692 = vsel %vm1605, %v278, %v1689
    %v1693 = vsel %vm1605, 0, %v1691
    %v1694 = vcosq.f32.pop %v1692
    %v1695 = vsinq.f32.pop %v1692
    %vm1696 = vweird.f32 %v278
    %v1697 = vadd.s32 %v1693, 3
    %v1698 = vand.u32 %v1697, 3
    %vm1699 = vcmp.lt.s32.totalorder %v1698, 2
    %vm1700 = vcmp.eq.s32.totalorder %v1698, 0
    %v1701 = vxor.u32 %v1695, 2147483648
    %v1702 = vsel %vm1700, %v1694, %v1701
    %vm1703 = vcmp.eq.s32.totalorder %v1698, 2
    %v1704 = vxor.u32 %v1694, 2147483648
    %v1705 = vsel %vm1703, %v1704, %v1695
    %v1706 = vsel %vm1699, %v1702, %v1705
    %v1707 = vsel %vm1696, nan, %v1706
    %v1708 = vand.u32 2147483647, %v281
    %vm1709 = vcmp.le.f32.partialorder %v1708, 0.7853982
    %vm1710 = vcmp.lt.s32.totalorder %v281, 0
    %v1711 = vand.u32 %v281, 2139095040
    %v1712 = vshrl.u32 %v1711, 23
    %v1713 = vsub.s32 %v1712, 127
    %v1714 = vand.u32 2147483647, %v281
    %v1715 = vand.u32 %v1714, 8388607
    %v1716 = vor.u32 %v1715, 8388608
    %v1717 = vsub.s32 0, %v1716
    %v1718 = vadd.s32 %v1713, 1
    %vm1719 = vcmp.gt.s32.totalorder %v1718, 0
    %v1720 = vsel %vm1719, %v1718, 0
    %v1721 = vshrl.u32 %v1720, 5
    %v1722 = vand.u32 %v1720, 31
    %v1723 = vsub.s32 32, %v1722
    %v1724 = vshrl.u32 683565275, %v1723
    %v1725 = vshll.u32 683565275, %v1722
    %v1726 = vshrl.u32 2475754826, %v1723
    %v1727 = vor.u32 %v1725, %v1726
    %v1728 = vshll.u32 2475754826, %v1722
    %v1729 = vshrl.u32 2131351028, %v1723
    %v1730 = vor.u32 %v1728, %v1729
    %v1731 = vshll.u32 2131351028, %v1722
    %v1732 = vshrl.u32 2102212464, %v1723
    %v1733 = vor.u32 %v1731, %v1732
    %v1734 = vshll.u32 2102212464, %v1722
    %v1735 = vshrl.u32 920167782, %v1723
    %v1736 = vor.u32 %v1734, %v1735
    %v1737 = vshll.u32 920167782, %v1722
    %v1738 = vshrl.u32 1326507024, %v1723
    %v1739 = vor.u32 %v1737, %v1738
    %vm1740 = vcmp.lt.s32.totalorder %v1721, 1
    %vm1741 = vcmp.lt.s32.totalorder %v1721, 2
    %vm1742 = vcmp.lt.s32.totalorder %v1721, 3
    %vm1743 = vcmp.lt.s32.totalorder %v1721, 4
    %v1744 = vsel %vm1740, %v1724, %v1727
    %v1745 = vsel %vm1743, %v1733, 2102212464
    %v1746 = vsel %vm1742, %v1730, %v1745
    %v1747 = vsel %vm1741, %v1744, %v1746
    %v1748 = vsel %vm1740, %v1727, %v1730
    %v1749 = vsel %vm1743, %v1736, 920167782
    %v1750 = vsel %vm1742, %v1733, %v1749
    %v1751 = vsel %vm1741, %v1748, %v1750
    %v1752 = vsel %vm1740, %v1730, %v1733
    %v1753 = vsel %vm1743, %v1739, 1326507024
    %v1754 = vsel %vm1742, %v1736, %v1753
    %v1755 = vsel %vm1741, %v1752, %v1754
    %v1756 = vshll.u32 %v1716, 8
    %v1757 = vmul.u32.u64.compose %v1756, %v1755
    %v1758 = vextract.low.u32 %v1757
    %v1759 = vextract.high.u32 %v1757
    %v1760 = vmul.u32.u64.compose %v1756, %v1751
    %v1761 = vextract.low.u32 %v1760
    %v1762 = vextract.high.u32 %v1760
    %v1763 = vmul.u32 %v1756, %v1747
    %v1764 = vadd.s32 %v1759, %v1761
    %vm1765 = vc.u32 %v1759, %v1761
    %v1766 = vadd.s32 %v1762, 1
    %v1767 = vsel %vm1765, %v1766, %v1762
    %v1768 = vadd.s32 %v1763, %v1767
    %v1769 = vadd.s32 %v1768, 536870912
    %v1770 = vshrl.u32 %v1769, 30
    %v1771 = vshll.u32 %v1770, 30
    %v1772 = vsub.s32 %v1768, %v1771
    %vm1773 = vcmp.lt.s32.totalorder %v1772, 0
    %v1774 = vsub.s32 0, %v1772
    %v1775 = vsel %vm1773, %v1774, %v1772
    %v1776 = vclz %v1775
    %v1777 = vsub.s32 %v1776, 2
    %vm1778 = vcmp.gt.s32.totalorder 0, %v1777
    %v1779 = vsel %vm1778, 0, %v1777
    %v1780 = vsub.s32 32, %v1779
    %v1781 = vshll.u32 %v1772, %v1779
    %v1782 = vshrl.u32 %v1764, %v1780
    %v1783 = vor.u32 %v1781, %v1782
    %v1784 = vsub.s32 4294967266, %v1779
    %v1785 = vadd.s32 %v1784, 127
    %v1786 = vshll.u32 %v1785, 23
    %v1787 = vor.u32 4788187, %v1786
    %v1788 = vand.u32 2147483647, %v1787
    %v1790 = vcvt.s32.f32 %v1783
    %v1791 = vmul.f32 %v1790, %v1788
    %v1792 = vxor.u32 %v1791, 2147483648
    %v1793 = vsel %vm1710, %v1792, %v1791
    %v1794 = vsub.s32 4, %v1770
    %v1795 = vsel %vm1710, %v1794, %v1770
    %v1796 = vsel %vm1709, %v281, %v1793
    %v1797 = vsel %vm1709, 0, %v1795
    %v1798 = vcosq.f32.pop %v1796
    %v1799 = vsinq.f32.pop %v1796
    %vm1800 = vweird.f32 %v281
    %v1801 = vadd.s32 %v1797, 3
    %v1802 = vand.u32 %v1801, 3
    %vm1803 = vcmp.lt.s32.totalorder %v1802, 2
    %vm1804 = vcmp.eq.s32.totalorder %v1802, 0
    %v1805 = vxor.u32 %v1799, 2147483648
    %v1806 = vsel %vm1804, %v1798, %v1805
    %vm1807 = vcmp.eq.s32.totalorder %v1802, 2
    %v1808 = vxor.u32 %v1798, 2147483648
    %v1809 = vsel %vm1807, %v1808, %v1799
    %v1810 = vsel %vm1803, %v1806, %v1809
    %v1811 = vsel %vm1800, nan, %v1810
    %v1812 = vand.u32 2147483647, %v286
    %vm1813 = vcmp.le.f32.partialorder %v1812, 0.7853982
    %vm1814 = vcmp.lt.s32.totalorder %v286, 0
    %v1815 = vand.u32 %v286, 2139095040
    %v1816 = vshrl.u32 %v1815, 23
    %v1817 = vsub.s32 %v1816, 127
    %v1818 = vand.u32 2147483647, %v286
    %v1819 = vand.u32 %v1818, 8388607
    %v1820 = vor.u32 %v1819, 8388608
    %v1821 = vsub.s32 0, %v1820
    %v1822 = vadd.s32 %v1817, 1
    %vm1823 = vcmp.gt.s32.totalorder %v1822, 0
    %v1824 = vsel %vm1823, %v1822, 0
    %v1825 = vshrl.u32 %v1824, 5
    %v1826 = vand.u32 %v1824, 31
    %v1827 = vsub.s32 32, %v1826
    %v1828 = vshrl.u32 683565275, %v1827
    %v1829 = vshll.u32 683565275, %v1826
    %v1830 = vshrl.u32 2475754826, %v1827
    %v1831 = vor.u32 %v1829, %v1830
    %v1832 = vshll.u32 2475754826, %v1826
    %v1833 = vshrl.u32 2131351028, %v1827
    %v1834 = vor.u32 %v1832, %v1833
    %v1835 = vshll.u32 2131351028, %v1826
    %v1836 = vshrl.u32 2102212464, %v1827
    %v1837 = vor.u32 %v1835, %v1836
    %v1838 = vshll.u32 2102212464, %v1826
    %v1839 = vshrl.u32 920167782, %v1827
    %v1840 = vor.u32 %v1838, %v1839
    %v1841 = vshll.u32 920167782, %v1826
    %v1842 = vshrl.u32 1326507024, %v1827
    %v1843 = vor.u32 %v1841, %v1842
    %vm1844 = vcmp.lt.s32.totalorder %v1825, 1
    %vm1845 = vcmp.lt.s32.totalorder %v1825, 2
    %vm1846 = vcmp.lt.s32.totalorder %v1825, 3
    %vm1847 = vcmp.lt.s32.totalorder %v1825, 4
    %v1848 = vsel %vm1844, %v1828, %v1831
    %v1849 = vsel %vm1847, %v1837, 2102212464
    %v1850 = vsel %vm1846, %v1834, %v1849
    %v1851 = vsel %vm1845, %v1848, %v1850
    %v1852 = vsel %vm1844, %v1831, %v1834
    %v1853 = vsel %vm1847, %v1840, 920167782
    %v1854 = vsel %vm1846, %v1837, %v1853
    %v1855 = vsel %vm1845, %v1852, %v1854
    %v1856 = vsel %vm1844, %v1834, %v1837
    %v1857 = vsel %vm1847, %v1843, 1326507024
    %v1858 = vsel %vm1846, %v1840, %v1857
    %v1859 = vsel %vm1845, %v1856, %v1858
    %v1860 = vshll.u32 %v1820, 8
    %v1861 = vmul.u32.u64.compose %v1860, %v1859
    %v1862 = vextract.low.u32 %v1861
    %v1863 = vextract.high.u32 %v1861
    %v1864 = vmul.u32.u64.compose %v1860, %v1855
    %v1865 = vextract.low.u32 %v1864
    %v1866 = vextract.high.u32 %v1864
    %v1867 = vmul.u32 %v1860, %v1851
    %v1868 = vadd.s32 %v1863, %v1865
    %vm1869 = vc.u32 %v1863, %v1865
    %v1870 = vadd.s32 %v1866, 1
    %v1871 = vsel %vm1869, %v1870, %v1866
    %v1872 = vadd.s32 %v1867, %v1871
    %v1873 = vadd.s32 %v1872, 536870912
    %v1874 = vshrl.u32 %v1873, 30
    %v1875 = vshll.u32 %v1874, 30
    %v1876 = vsub.s32 %v1872, %v1875
    %vm1877 = vcmp.lt.s32.totalorder %v1876, 0
    %v1878 = vsub.s32 0, %v1876
    %v1879 = vsel %vm1877, %v1878, %v1876
    %v1880 = vclz %v1879
    %v1881 = vsub.s32 %v1880, 2
    %vm1882 = vcmp.gt.s32.totalorder 0, %v1881
    %v1883 = vsel %vm1882, 0, %v1881
    %v1884 = vsub.s32 32, %v1883
    %v1885 = vshll.u32 %v1876, %v1883
    %v1886 = vshrl.u32 %v1868, %v1884
    %v1887 = vor.u32 %v1885, %v1886
    %v1888 = vsub.s32 4294967266, %v1883
    %v1889 = vadd.s32 %v1888, 127
    %v1890 = vshll.u32 %v1889, 23
    %v1891 = vor.u32 4788187, %v1890
    %v1892 = vand.u32 2147483647, %v1891
    %v1894 = vcvt.s32.f32 %v1887
    %v1895 = vmul.f32 %v1894, %v1892
    %v1896 = vxor.u32 %v1895, 2147483648
    %v1897 = vsel %vm1814, %v1896, %v1895
    %v1898 = vsub.s32 4, %v1874
    %v1899 = vsel %vm1814, %v1898, %v1874
    %v1900 = vsel %vm1813, %v286, %v1897
    %v1901 = vsel %vm1813, 0, %v1899
    %v1902 = vcosq.f32.pop %v1900
    %v1903 = vsinq.f32.pop %v1900
    %vm1904 = vweird.f32 %v286
    %v1905 = vadd.s32 %v1901, 3
    %v1906 = vand.u32 %v1905, 3
    %vm1907 = vcmp.lt.s32.totalorder %v1906, 2
    %vm1908 = vcmp.eq.s32.totalorder %v1906, 0
    %v1909 = vxor.u32 %v1903, 2147483648
    %v1910 = vsel %vm1908, %v1902, %v1909
    %vm1911 = vcmp.eq.s32.totalorder %v1906, 2
    %v1912 = vxor.u32 %v1902, 2147483648
    %v1913 = vsel %vm1911, %v1912, %v1903
    %v1914 = vsel %vm1907, %v1910, %v1913
    %v1915 = vsel %vm1904, nan, %v1914
    %v1916 = vand.u32 2147483647, %v289
    %vm1917 = vcmp.le.f32.partialorder %v1916, 0.7853982
    %vm1918 = vcmp.lt.s32.totalorder %v289, 0
    %v1919 = vand.u32 %v289, 2139095040
    %v1920 = vshrl.u32 %v1919, 23
    %v1921 = vsub.s32 %v1920, 127
    %v1922 = vand.u32 2147483647, %v289
    %v1923 = vand.u32 %v1922, 8388607
    %v1924 = vor.u32 %v1923, 8388608
    %v1925 = vsub.s32 0, %v1924
    %v1926 = vadd.s32 %v1921, 1
    %vm1927 = vcmp.gt.s32.totalorder %v1926, 0
    %v1928 = vsel %vm1927, %v1926, 0
    %v1929 = vshrl.u32 %v1928, 5
    %v1930 = vand.u32 %v1928, 31
    %v1931 = vsub.s32 32, %v1930
    %v1932 = vshrl.u32 683565275, %v1931
    %v1933 = vshll.u32 683565275, %v1930
    %v1934 = vshrl.u32 2475754826, %v1931
    %v1935 = vor.u32 %v1933, %v1934
    %v1936 = vshll.u32 2475754826, %v1930
    %v1937 = vshrl.u32 2131351028, %v1931
    %v1938 = vor.u32 %v1936, %v1937
    %v1939 = vshll.u32 2131351028, %v1930
    %v1940 = vshrl.u32 2102212464, %v1931
    %v1941 = vor.u32 %v1939, %v1940
    %v1942 = vshll.u32 2102212464, %v1930
    %v1943 = vshrl.u32 920167782, %v1931
    %v1944 = vor.u32 %v1942, %v1943
    %v1945 = vshll.u32 920167782, %v1930
    %v1946 = vshrl.u32 1326507024, %v1931
    %v1947 = vor.u32 %v1945, %v1946
    %vm1948 = vcmp.lt.s32.totalorder %v1929, 1
    %vm1949 = vcmp.lt.s32.totalorder %v1929, 2
    %vm1950 = vcmp.lt.s32.totalorder %v1929, 3
    %vm1951 = vcmp.lt.s32.totalorder %v1929, 4
    %v1952 = vsel %vm1948, %v1932, %v1935
    %v1953 = vsel %vm1951, %v1941, 2102212464
    %v1954 = vsel %vm1950, %v1938, %v1953
    %v1955 = vsel %vm1949, %v1952, %v1954
    %v1956 = vsel %vm1948, %v1935, %v1938
    %v1957 = vsel %vm1951, %v1944, 920167782
    %v1958 = vsel %vm1950, %v1941, %v1957
    %v1959 = vsel %vm1949, %v1956, %v1958
    %v1960 = vsel %vm1948, %v1938, %v1941
    %v1961 = vsel %vm1951, %v1947, 1326507024
    %v1962 = vsel %vm1950, %v1944, %v1961
    %v1963 = vsel %vm1949, %v1960, %v1962
    %v1964 = vshll.u32 %v1924, 8
    %v1965 = vmul.u32.u64.compose %v1964, %v1963
    %v1966 = vextract.low.u32 %v1965
    %v1967 = vextract.high.u32 %v1965
    %v1968 = vmul.u32.u64.compose %v1964, %v1959
    %v1969 = vextract.low.u32 %v1968
    %v1970 = vextract.high.u32 %v1968
    %v1971 = vmul.u32 %v1964, %v1955
    %v1972 = vadd.s32 %v1967, %v1969
    %vm1973 = vc.u32 %v1967, %v1969
    %v1974 = vadd.s32 %v1970, 1
    %v1975 = vsel %vm1973, %v1974, %v1970
    %v1976 = vadd.s32 %v1971, %v1975
    %v1977 = vadd.s32 %v1976, 536870912
    %v1978 = vshrl.u32 %v1977, 30
    %v1979 = vshll.u32 %v1978, 30
    %v1980 = vsub.s32 %v1976, %v1979
    %vm1981 = vcmp.lt.s32.totalorder %v1980, 0
    %v1982 = vsub.s32 0, %v1980
    %v1983 = vsel %vm1981, %v1982, %v1980
    %v1984 = vclz %v1983
    %v1985 = vsub.s32 %v1984, 2
    %vm1986 = vcmp.gt.s32.totalorder 0, %v1985
    %v1987 = vsel %vm1986, 0, %v1985
    %v1988 = vsub.s32 32, %v1987
    %v1989 = vshll.u32 %v1980, %v1987
    %v1990 = vshrl.u32 %v1972, %v1988
    %v1991 = vor.u32 %v1989, %v1990
    %v1992 = vsub.s32 4294967266, %v1987
    %v1993 = vadd.s32 %v1992, 127
    %v1994 = vshll.u32 %v1993, 23
    %v1995 = vor.u32 4788187, %v1994
    %v1996 = vand.u32 2147483647, %v1995
    %v1998 = vcvt.s32.f32 %v1991
    %v1999 = vmul.f32 %v1998, %v1996
    %v2000 = vxor.u32 %v1999, 2147483648
    %v2001 = vsel %vm1918, %v2000, %v1999
    %v2002 = vsub.s32 4, %v1978
    %v2003 = vsel %vm1918, %v2002, %v1978
    %v2004 = vsel %vm1917, %v289, %v2001
    %v2005 = vsel %vm1917, 0, %v2003
    %v2006 = vcosq.f32.pop %v2004
    %v2007 = vsinq.f32.pop %v2004
    %vm2008 = vweird.f32 %v289
    %v2009 = vadd.s32 %v2005, 3
    %v2010 = vand.u32 %v2009, 3
    %vm2011 = vcmp.lt.s32.totalorder %v2010, 2
    %vm2012 = vcmp.eq.s32.totalorder %v2010, 0
    %v2013 = vxor.u32 %v2007, 2147483648
    %v2014 = vsel %vm2012, %v2006, %v2013
    %vm2015 = vcmp.eq.s32.totalorder %v2010, 2
    %v2016 = vxor.u32 %v2006, 2147483648
    %v2017 = vsel %vm2015, %v2016, %v2007
    %v2018 = vsel %vm2011, %v2014, %v2017
    %v2019 = vsel %vm2008, nan, %v2018
    %v2020 = vand.u32 2147483647, %v294
    %vm2021 = vcmp.le.f32.partialorder %v2020, 0.7853982
    %vm2022 = vcmp.lt.s32.totalorder %v294, 0
    %v2023 = vand.u32 %v294, 2139095040
    %v2024 = vshrl.u32 %v2023, 23
    %v2025 = vsub.s32 %v2024, 127
    %v2026 = vand.u32 2147483647, %v294
    %v2027 = vand.u32 %v2026, 8388607
    %v2028 = vor.u32 %v2027, 8388608
    %v2029 = vsub.s32 0, %v2028
    %v2030 = vadd.s32 %v2025, 1
    %vm2031 = vcmp.gt.s32.totalorder %v2030, 0
    %v2032 = vsel %vm2031, %v2030, 0
    %v2033 = vshrl.u32 %v2032, 5
    %v2034 = vand.u32 %v2032, 31
    %v2035 = vsub.s32 32, %v2034
    %v2036 = vshrl.u32 683565275, %v2035
    %v2037 = vshll.u32 683565275, %v2034
    %v2038 = vshrl.u32 2475754826, %v2035
    %v2039 = vor.u32 %v2037, %v2038
    %v2040 = vshll.u32 2475754826, %v2034
    %v2041 = vshrl.u32 2131351028, %v2035
    %v2042 = vor.u32 %v2040, %v2041
    %v2043 = vshll.u32 2131351028, %v2034
    %v2044 = vshrl.u32 2102212464, %v2035
    %v2045 = vor.u32 %v2043, %v2044
    %v2046 = vshll.u32 2102212464, %v2034
    %v2047 = vshrl.u32 920167782, %v2035
    %v2048 = vor.u32 %v2046, %v2047
    %v2049 = vshll.u32 920167782, %v2034
    %v2050 = vshrl.u32 1326507024, %v2035
    %v2051 = vor.u32 %v2049, %v2050
    %vm2052 = vcmp.lt.s32.totalorder %v2033, 1
    %vm2053 = vcmp.lt.s32.totalorder %v2033, 2
    %vm2054 = vcmp.lt.s32.totalorder %v2033, 3
    %vm2055 = vcmp.lt.s32.totalorder %v2033, 4
    %v2056 = vsel %vm2052, %v2036, %v2039
    %v2057 = vsel %vm2055, %v2045, 2102212464
    %v2058 = vsel %vm2054, %v2042, %v2057
    %v2059 = vsel %vm2053, %v2056, %v2058
    %v2060 = vsel %vm2052, %v2039, %v2042
    %v2061 = vsel %vm2055, %v2048, 920167782
    %v2062 = vsel %vm2054, %v2045, %v2061
    %v2063 = vsel %vm2053, %v2060, %v2062
    %v2064 = vsel %vm2052, %v2042, %v2045
    %v2065 = vsel %vm2055, %v2051, 1326507024
    %v2066 = vsel %vm2054, %v2048, %v2065
    %v2067 = vsel %vm2053, %v2064, %v2066
    %v2068 = vshll.u32 %v2028, 8
    %v2069 = vmul.u32.u64.compose %v2068, %v2067
    %v2070 = vextract.low.u32 %v2069
    %v2071 = vextract.high.u32 %v2069
    %v2072 = vmul.u32.u64.compose %v2068, %v2063
    %v2073 = vextract.low.u32 %v2072
    %v2074 = vextract.high.u32 %v2072
    %v2075 = vmul.u32 %v2068, %v2059
    %v2076 = vadd.s32 %v2071, %v2073
    %vm2077 = vc.u32 %v2071, %v2073
    %v2078 = vadd.s32 %v2074, 1
    %v2079 = vsel %vm2077, %v2078, %v2074
    %v2080 = vadd.s32 %v2075, %v2079
    %v2081 = vadd.s32 %v2080, 536870912
    %v2082 = vshrl.u32 %v2081, 30
    %v2083 = vshll.u32 %v2082, 30
    %v2084 = vsub.s32 %v2080, %v2083
    %vm2085 = vcmp.lt.s32.totalorder %v2084, 0
    %v2086 = vsub.s32 0, %v2084
    %v2087 = vsel %vm2085, %v2086, %v2084
    %v2088 = vclz %v2087
    %v2089 = vsub.s32 %v2088, 2
    %vm2090 = vcmp.gt.s32.totalorder 0, %v2089
    %v2091 = vsel %vm2090, 0, %v2089
    %v2092 = vsub.s32 32, %v2091
    %v2093 = vshll.u32 %v2084, %v2091
    %v2094 = vshrl.u32 %v2076, %v2092
    %v2095 = vor.u32 %v2093, %v2094
    %v2096 = vsub.s32 4294967266, %v2091
    %v2097 = vadd.s32 %v2096, 127
    %v2098 = vshll.u32 %v2097, 23
    %v2099 = vor.u32 4788187, %v2098
    %v2100 = vand.u32 2147483647, %v2099
    %v2102 = vcvt.s32.f32 %v2095
    %v2103 = vmul.f32 %v2102, %v2100
    %v2104 = vxor.u32 %v2103, 2147483648
    %v2105 = vsel %vm2022, %v2104, %v2103
    %v2106 = vsub.s32 4, %v2082
    %v2107 = vsel %vm2022, %v2106, %v2082
    %v2108 = vsel %vm2021, %v294, %v2105
    %v2109 = vsel %vm2021, 0, %v2107
    %v2110 = vcosq.f32.pop %v2108
    %v2111 = vsinq.f32.pop %v2108
    %vm2112 = vweird.f32 %v294
    %v2113 = vadd.s32 %v2109, 3
    %v2114 = vand.u32 %v2113, 3
    %vm2115 = vcmp.lt.s32.totalorder %v2114, 2
    %vm2116 = vcmp.eq.s32.totalorder %v2114, 0
    %v2117 = vxor.u32 %v2111, 2147483648
    %v2118 = vsel %vm2116, %v2110, %v2117
    %vm2119 = vcmp.eq.s32.totalorder %v2114, 2
    %v2120 = vxor.u32 %v2110, 2147483648
    %v2121 = vsel %vm2119, %v2120, %v2111
    %v2122 = vsel %vm2115, %v2118, %v2121
    %v2123 = vsel %vm2112, nan, %v2122
    %v2124 = vand.u32 2147483647, %v297
    %vm2125 = vcmp.le.f32.partialorder %v2124, 0.7853982
    %vm2126 = vcmp.lt.s32.totalorder %v297, 0
    %v2127 = vand.u32 %v297, 2139095040
    %v2128 = vshrl.u32 %v2127, 23
    %v2129 = vsub.s32 %v2128, 127
    %v2130 = vand.u32 2147483647, %v297
    %v2131 = vand.u32 %v2130, 8388607
    %v2132 = vor.u32 %v2131, 8388608
    %v2133 = vsub.s32 0, %v2132
    %v2134 = vadd.s32 %v2129, 1
    %vm2135 = vcmp.gt.s32.totalorder %v2134, 0
    %v2136 = vsel %vm2135, %v2134, 0
    %v2137 = vshrl.u32 %v2136, 5
    %v2138 = vand.u32 %v2136, 31
    %v2139 = vsub.s32 32, %v2138
    %v2140 = vshrl.u32 683565275, %v2139
    %v2141 = vshll.u32 683565275, %v2138
    %v2142 = vshrl.u32 2475754826, %v2139
    %v2143 = vor.u32 %v2141, %v2142
    %v2144 = vshll.u32 2475754826, %v2138
    %v2145 = vshrl.u32 2131351028, %v2139
    %v2146 = vor.u32 %v2144, %v2145
    %v2147 = vshll.u32 2131351028, %v2138
    %v2148 = vshrl.u32 2102212464, %v2139
    %v2149 = vor.u32 %v2147, %v2148
    %v2150 = vshll.u32 2102212464, %v2138
    %v2151 = vshrl.u32 920167782, %v2139
    %v2152 = vor.u32 %v2150, %v2151
    %v2153 = vshll.u32 920167782, %v2138
    %v2154 = vshrl.u32 1326507024, %v2139
    %v2155 = vor.u32 %v2153, %v2154
    %vm2156 = vcmp.lt.s32.totalorder %v2137, 1
    %vm2157 = vcmp.lt.s32.totalorder %v2137, 2
    %vm2158 = vcmp.lt.s32.totalorder %v2137, 3
    %vm2159 = vcmp.lt.s32.totalorder %v2137, 4
    %v2160 = vsel %vm2156, %v2140, %v2143
    %v2161 = vsel %vm2159, %v2149, 2102212464
    %v2162 = vsel %vm2158, %v2146, %v2161
    %v2163 = vsel %vm2157, %v2160, %v2162
    %v2164 = vsel %vm2156, %v2143, %v2146
    %v2165 = vsel %vm2159, %v2152, 920167782
    %v2166 = vsel %vm2158, %v2149, %v2165
    %v2167 = vsel %vm2157, %v2164, %v2166
    %v2168 = vsel %vm2156, %v2146, %v2149
    %v2169 = vsel %vm2159, %v2155, 1326507024
    %v2170 = vsel %vm2158, %v2152, %v2169
    %v2171 = vsel %vm2157, %v2168, %v2170
    %v2172 = vshll.u32 %v2132, 8
    %v2173 = vmul.u32.u64.compose %v2172, %v2171
    %v2174 = vextract.low.u32 %v2173
    %v2175 = vextract.high.u32 %v2173
    %v2176 = vmul.u32.u64.compose %v2172, %v2167
    %v2177 = vextract.low.u32 %v2176
    %v2178 = vextract.high.u32 %v2176
    %v2179 = vmul.u32 %v2172, %v2163
    %v2180 = vadd.s32 %v2175, %v2177
    %vm2181 = vc.u32 %v2175, %v2177
    %v2182 = vadd.s32 %v2178, 1
    %v2183 = vsel %vm2181, %v2182, %v2178
    %v2184 = vadd.s32 %v2179, %v2183
    %v2185 = vadd.s32 %v2184, 536870912
    %v2186 = vshrl.u32 %v2185, 30
    %v2187 = vshll.u32 %v2186, 30
    %v2188 = vsub.s32 %v2184, %v2187
    %vm2189 = vcmp.lt.s32.totalorder %v2188, 0
    %v2190 = vsub.s32 0, %v2188
    %v2191 = vsel %vm2189, %v2190, %v2188
    %v2192 = vclz %v2191
    %v2193 = vsub.s32 %v2192, 2
    %vm2194 = vcmp.gt.s32.totalorder 0, %v2193
    %v2195 = vsel %vm2194, 0, %v2193
    %v2196 = vsub.s32 32, %v2195
    %v2197 = vshll.u32 %v2188, %v2195
    %v2198 = vshrl.u32 %v2180, %v2196
    %v2199 = vor.u32 %v2197, %v2198
    %v2200 = vsub.s32 4294967266, %v2195
    %v2201 = vadd.s32 %v2200, 127
    %v2202 = vshll.u32 %v2201, 23
    %v2203 = vor.u32 4788187, %v2202
    %v2204 = vand.u32 2147483647, %v2203
    %v2206 = vcvt.s32.f32 %v2199
    %v2207 = vmul.f32 %v2206, %v2204
    %v2208 = vxor.u32 %v2207, 2147483648
    %v2209 = vsel %vm2126, %v2208, %v2207
    %v2210 = vsub.s32 4, %v2186
    %v2211 = vsel %vm2126, %v2210, %v2186
    %v2212 = vsel %vm2125, %v297, %v2209
    %v2213 = vsel %vm2125, 0, %v2211
    %v2214 = vcosq.f32.pop %v2212
    %v2215 = vsinq.f32.pop %v2212
    %vm2216 = vweird.f32 %v297
    %v2217 = vadd.s32 %v2213, 3
    %v2218 = vand.u32 %v2217, 3
    %vm2219 = vcmp.lt.s32.totalorder %v2218, 2
    %vm2220 = vcmp.eq.s32.totalorder %v2218, 0
    %v2221 = vxor.u32 %v2215, 2147483648
    %v2222 = vsel %vm2220, %v2214, %v2221
    %vm2223 = vcmp.eq.s32.totalorder %v2218, 2
    %v2224 = vxor.u32 %v2214, 2147483648
    %v2225 = vsel %vm2223, %v2224, %v2215
    %v2226 = vsel %vm2219, %v2222, %v2225
    %v2227 = vsel %vm2216, nan, %v2226
    %v2228 = vand.u32 2147483647, %v302
    %vm2229 = vcmp.le.f32.partialorder %v2228, 0.7853982
    %vm2230 = vcmp.lt.s32.totalorder %v302, 0
    %v2231 = vand.u32 %v302, 2139095040
    %v2232 = vshrl.u32 %v2231, 23
    %v2233 = vsub.s32 %v2232, 127
    %v2234 = vand.u32 2147483647, %v302
    %v2235 = vand.u32 %v2234, 8388607
    %v2236 = vor.u32 %v2235, 8388608
    %v2237 = vsub.s32 0, %v2236
    %v2238 = vadd.s32 %v2233, 1
    %vm2239 = vcmp.gt.s32.totalorder %v2238, 0
    %v2240 = vsel %vm2239, %v2238, 0
    %v2241 = vshrl.u32 %v2240, 5
    %v2242 = vand.u32 %v2240, 31
    %v2243 = vsub.s32 32, %v2242
    %v2244 = vshrl.u32 683565275, %v2243
    %v2245 = vshll.u32 683565275, %v2242
    %v2246 = vshrl.u32 2475754826, %v2243
    %v2247 = vor.u32 %v2245, %v2246
    %v2248 = vshll.u32 2475754826, %v2242
    %v2249 = vshrl.u32 2131351028, %v2243
    %v2250 = vor.u32 %v2248, %v2249
    %v2251 = vshll.u32 2131351028, %v2242
    %v2252 = vshrl.u32 2102212464, %v2243
    %v2253 = vor.u32 %v2251, %v2252
    %v2254 = vshll.u32 2102212464, %v2242
    %v2255 = vshrl.u32 920167782, %v2243
    %v2256 = vor.u32 %v2254, %v2255
    %v2257 = vshll.u32 920167782, %v2242
    %v2258 = vshrl.u32 1326507024, %v2243
    %v2259 = vor.u32 %v2257, %v2258
    %vm2260 = vcmp.lt.s32.totalorder %v2241, 1
    %vm2261 = vcmp.lt.s32.totalorder %v2241, 2
    %vm2262 = vcmp.lt.s32.totalorder %v2241, 3
    %vm2263 = vcmp.lt.s32.totalorder %v2241, 4
    %v2264 = vsel %vm2260, %v2244, %v2247
    %v2265 = vsel %vm2263, %v2253, 2102212464
    %v2266 = vsel %vm2262, %v2250, %v2265
    %v2267 = vsel %vm2261, %v2264, %v2266
    %v2268 = vsel %vm2260, %v2247, %v2250
    %v2269 = vsel %vm2263, %v2256, 920167782
    %v2270 = vsel %vm2262, %v2253, %v2269
    %v2271 = vsel %vm2261, %v2268, %v2270
    %v2272 = vsel %vm2260, %v2250, %v2253
    %v2273 = vsel %vm2263, %v2259, 1326507024
    %v2274 = vsel %vm2262, %v2256, %v2273
    %v2275 = vsel %vm2261, %v2272, %v2274
    %v2276 = vshll.u32 %v2236, 8
    %v2277 = vmul.u32.u64.compose %v2276, %v2275
    %v2278 = vextract.low.u32 %v2277
    %v2279 = vextract.high.u32 %v2277
    %v2280 = vmul.u32.u64.compose %v2276, %v2271
    %v2281 = vextract.low.u32 %v2280
    %v2282 = vextract.high.u32 %v2280
    %v2283 = vmul.u32 %v2276, %v2267
    %v2284 = vadd.s32 %v2279, %v2281
    %vm2285 = vc.u32 %v2279, %v2281
    %v2286 = vadd.s32 %v2282, 1
    %v2287 = vsel %vm2285, %v2286, %v2282
    %v2288 = vadd.s32 %v2283, %v2287
    %v2289 = vadd.s32 %v2288, 536870912
    %v2290 = vshrl.u32 %v2289, 30
    %v2291 = vshll.u32 %v2290, 30
    %v2292 = vsub.s32 %v2288, %v2291
    %vm2293 = vcmp.lt.s32.totalorder %v2292, 0
    %v2294 = vsub.s32 0, %v2292
    %v2295 = vsel %vm2293, %v2294, %v2292
    %v2296 = vclz %v2295
    %v2297 = vsub.s32 %v2296, 2
    %vm2298 = vcmp.gt.s32.totalorder 0, %v2297
    %v2299 = vsel %vm2298, 0, %v2297
    %v2300 = vsub.s32 32, %v2299
    %v2301 = vshll.u32 %v2292, %v2299
    %v2302 = vshrl.u32 %v2284, %v2300
    %v2303 = vor.u32 %v2301, %v2302
    %v2304 = vsub.s32 4294967266, %v2299
    %v2305 = vadd.s32 %v2304, 127
    %v2306 = vshll.u32 %v2305, 23
    %v2307 = vor.u32 4788187, %v2306
    %v2308 = vand.u32 2147483647, %v2307
    %v2310 = vcvt.s32.f32 %v2303
    %v2311 = vmul.f32 %v2310, %v2308
    %v2312 = vxor.u32 %v2311, 2147483648
    %v2313 = vsel %vm2230, %v2312, %v2311
    %v2314 = vsub.s32 4, %v2290
    %v2315 = vsel %vm2230, %v2314, %v2290
    %v2316 = vsel %vm2229, %v302, %v2313
    %v2317 = vsel %vm2229, 0, %v2315
    %v2318 = vcosq.f32.pop %v2316
    %v2319 = vsinq.f32.pop %v2316
    %vm2320 = vweird.f32 %v302
    %v2321 = vadd.s32 %v2317, 3
    %v2322 = vand.u32 %v2321, 3
    %vm2323 = vcmp.lt.s32.totalorder %v2322, 2
    %vm2324 = vcmp.eq.s32.totalorder %v2322, 0
    %v2325 = vxor.u32 %v2319, 2147483648
    %v2326 = vsel %vm2324, %v2318, %v2325
    %vm2327 = vcmp.eq.s32.totalorder %v2322, 2
    %v2328 = vxor.u32 %v2318, 2147483648
    %v2329 = vsel %vm2327, %v2328, %v2319
    %v2330 = vsel %vm2323, %v2326, %v2329
    %v2331 = vsel %vm2320, nan, %v2330
    %v2332 = vand.u32 2147483647, %v305
    %vm2333 = vcmp.le.f32.partialorder %v2332, 0.7853982
    %vm2334 = vcmp.lt.s32.totalorder %v305, 0
    %v2335 = vand.u32 %v305, 2139095040
    %v2336 = vshrl.u32 %v2335, 23
    %v2337 = vsub.s32 %v2336, 127
    %v2338 = vand.u32 2147483647, %v305
    %v2339 = vand.u32 %v2338, 8388607
    %v2340 = vor.u32 %v2339, 8388608
    %v2341 = vsub.s32 0, %v2340
    %v2342 = vadd.s32 %v2337, 1
    %vm2343 = vcmp.gt.s32.totalorder %v2342, 0
    %v2344 = vsel %vm2343, %v2342, 0
    %v2345 = vshrl.u32 %v2344, 5
    %v2346 = vand.u32 %v2344, 31
    %v2347 = vsub.s32 32, %v2346
    %v2348 = vshrl.u32 683565275, %v2347
    %v2349 = vshll.u32 683565275, %v2346
    %v2350 = vshrl.u32 2475754826, %v2347
    %v2351 = vor.u32 %v2349, %v2350
    %v2352 = vshll.u32 2475754826, %v2346
    %v2353 = vshrl.u32 2131351028, %v2347
    %v2354 = vor.u32 %v2352, %v2353
    %v2355 = vshll.u32 2131351028, %v2346
    %v2356 = vshrl.u32 2102212464, %v2347
    %v2357 = vor.u32 %v2355, %v2356
    %v2358 = vshll.u32 2102212464, %v2346
    %v2359 = vshrl.u32 920167782, %v2347
    %v2360 = vor.u32 %v2358, %v2359
    %v2361 = vshll.u32 920167782, %v2346
    %v2362 = vshrl.u32 1326507024, %v2347
    %v2363 = vor.u32 %v2361, %v2362
    %vm2364 = vcmp.lt.s32.totalorder %v2345, 1
    %vm2365 = vcmp.lt.s32.totalorder %v2345, 2
    %vm2366 = vcmp.lt.s32.totalorder %v2345, 3
    %vm2367 = vcmp.lt.s32.totalorder %v2345, 4
    %v2368 = vsel %vm2364, %v2348, %v2351
    %v2369 = vsel %vm2367, %v2357, 2102212464
    %v2370 = vsel %vm2366, %v2354, %v2369
    %v2371 = vsel %vm2365, %v2368, %v2370
    %v2372 = vsel %vm2364, %v2351, %v2354
    %v2373 = vsel %vm2367, %v2360, 920167782
    %v2374 = vsel %vm2366, %v2357, %v2373
    %v2375 = vsel %vm2365, %v2372, %v2374
    %v2376 = vsel %vm2364, %v2354, %v2357
    %v2377 = vsel %vm2367, %v2363, 1326507024
    %v2378 = vsel %vm2366, %v2360, %v2377
    %v2379 = vsel %vm2365, %v2376, %v2378
    %v2380 = vshll.u32 %v2340, 8
    %v2381 = vmul.u32.u64.compose %v2380, %v2379
    %v2382 = vextract.low.u32 %v2381
    %v2383 = vextract.high.u32 %v2381
    %v2384 = vmul.u32.u64.compose %v2380, %v2375
    %v2385 = vextract.low.u32 %v2384
    %v2386 = vextract.high.u32 %v2384
    %v2387 = vmul.u32 %v2380, %v2371
    %v2388 = vadd.s32 %v2383, %v2385
    %vm2389 = vc.u32 %v2383, %v2385
    %v2390 = vadd.s32 %v2386, 1
    %v2391 = vsel %vm2389, %v2390, %v2386
    %v2392 = vadd.s32 %v2387, %v2391
    %v2393 = vadd.s32 %v2392, 536870912
    %v2394 = vshrl.u32 %v2393, 30
    %v2395 = vshll.u32 %v2394, 30
    %v2396 = vsub.s32 %v2392, %v2395
    %vm2397 = vcmp.lt.s32.totalorder %v2396, 0
    %v2398 = vsub.s32 0, %v2396
    %v2399 = vsel %vm2397, %v2398, %v2396
    %v2400 = vclz %v2399
    %v2401 = vsub.s32 %v2400, 2
    %vm2402 = vcmp.gt.s32.totalorder 0, %v2401
    %v2403 = vsel %vm2402, 0, %v2401
    %v2404 = vsub.s32 32, %v2403
    %v2405 = vshll.u32 %v2396, %v2403
    %v2406 = vshrl.u32 %v2388, %v2404
    %v2407 = vor.u32 %v2405, %v2406
    %v2408 = vsub.s32 4294967266, %v2403
    %v2409 = vadd.s32 %v2408, 127
    %v2410 = vshll.u32 %v2409, 23
    %v2411 = vor.u32 4788187, %v2410
    %v2412 = vand.u32 2147483647, %v2411
    %v2414 = vcvt.s32.f32 %v2407
    %v2415 = vmul.f32 %v2414, %v2412
    %v2416 = vxor.u32 %v2415, 2147483648
    %v2417 = vsel %vm2334, %v2416, %v2415
    %v2418 = vsub.s32 4, %v2394
    %v2419 = vsel %vm2334, %v2418, %v2394
    %v2420 = vsel %vm2333, %v305, %v2417
    %v2421 = vsel %vm2333, 0, %v2419
    %v2422 = vcosq.f32.pop %v2420
    %v2423 = vsinq.f32.pop %v2420
    %vm2424 = vweird.f32 %v305
    %v2425 = vadd.s32 %v2421, 3
    %v2426 = vand.u32 %v2425, 3
    %vm2427 = vcmp.lt.s32.totalorder %v2426, 2
    %vm2428 = vcmp.eq.s32.totalorder %v2426, 0
    %v2429 = vxor.u32 %v2423, 2147483648
    %v2430 = vsel %vm2428, %v2422, %v2429
    %vm2431 = vcmp.eq.s32.totalorder %v2426, 2
    %v2432 = vxor.u32 %v2422, 2147483648
    %v2433 = vsel %vm2431, %v2432, %v2423
    %v2434 = vsel %vm2427, %v2430, %v2433
    %v2435 = vsel %vm2424, nan, %v2434
    %v2436 = vand.u32 2147483647, %v310
    %vm2437 = vcmp.le.f32.partialorder %v2436, 0.7853982
    %vm2438 = vcmp.lt.s32.totalorder %v310, 0
    %v2439 = vand.u32 %v310, 2139095040
    %v2440 = vshrl.u32 %v2439, 23
    %v2441 = vsub.s32 %v2440, 127
    %v2442 = vand.u32 2147483647, %v310
    %v2443 = vand.u32 %v2442, 8388607
    %v2444 = vor.u32 %v2443, 8388608
    %v2445 = vsub.s32 0, %v2444
    %v2446 = vadd.s32 %v2441, 1
    %vm2447 = vcmp.gt.s32.totalorder %v2446, 0
    %v2448 = vsel %vm2447, %v2446, 0
    %v2449 = vshrl.u32 %v2448, 5
    %v2450 = vand.u32 %v2448, 31
    %v2451 = vsub.s32 32, %v2450
    %v2452 = vshrl.u32 683565275, %v2451
    %v2453 = vshll.u32 683565275, %v2450
    %v2454 = vshrl.u32 2475754826, %v2451
    %v2455 = vor.u32 %v2453, %v2454
    %v2456 = vshll.u32 2475754826, %v2450
    %v2457 = vshrl.u32 2131351028, %v2451
    %v2458 = vor.u32 %v2456, %v2457
    %v2459 = vshll.u32 2131351028, %v2450
    %v2460 = vshrl.u32 2102212464, %v2451
    %v2461 = vor.u32 %v2459, %v2460
    %v2462 = vshll.u32 2102212464, %v2450
    %v2463 = vshrl.u32 920167782, %v2451
    %v2464 = vor.u32 %v2462, %v2463
    %v2465 = vshll.u32 920167782, %v2450
    %v2466 = vshrl.u32 1326507024, %v2451
    %v2467 = vor.u32 %v2465, %v2466
    %vm2468 = vcmp.lt.s32.totalorder %v2449, 1
    %vm2469 = vcmp.lt.s32.totalorder %v2449, 2
    %vm2470 = vcmp.lt.s32.totalorder %v2449, 3
    %vm2471 = vcmp.lt.s32.totalorder %v2449, 4
    %v2472 = vsel %vm2468, %v2452, %v2455
    %v2473 = vsel %vm2471, %v2461, 2102212464
    %v2474 = vsel %vm2470, %v2458, %v2473
    %v2475 = vsel %vm2469, %v2472, %v2474
    %v2476 = vsel %vm2468, %v2455, %v2458
    %v2477 = vsel %vm2471, %v2464, 920167782
    %v2478 = vsel %vm2470, %v2461, %v2477
    %v2479 = vsel %vm2469, %v2476, %v2478
    %v2480 = vsel %vm2468, %v2458, %v2461
    %v2481 = vsel %vm2471, %v2467, 1326507024
    %v2482 = vsel %vm2470, %v2464, %v2481
    %v2483 = vsel %vm2469, %v2480, %v2482
    %v2484 = vshll.u32 %v2444, 8
    %v2485 = vmul.u32.u64.compose %v2484, %v2483
    %v2486 = vextract.low.u32 %v2485
    %v2487 = vextract.high.u32 %v2485
    %v2488 = vmul.u32.u64.compose %v2484, %v2479
    %v2489 = vextract.low.u32 %v2488
    %v2490 = vextract.high.u32 %v2488
    %v2491 = vmul.u32 %v2484, %v2475
    %v2492 = vadd.s32 %v2487, %v2489
    %vm2493 = vc.u32 %v2487, %v2489
    %v2494 = vadd.s32 %v2490, 1
    %v2495 = vsel %vm2493, %v2494, %v2490
    %v2496 = vadd.s32 %v2491, %v2495
    %v2497 = vadd.s32 %v2496, 536870912
    %v2498 = vshrl.u32 %v2497, 30
    %v2499 = vshll.u32 %v2498, 30
    %v2500 = vsub.s32 %v2496, %v2499
    %vm2501 = vcmp.lt.s32.totalorder %v2500, 0
    %v2502 = vsub.s32 0, %v2500
    %v2503 = vsel %vm2501, %v2502, %v2500
    %v2504 = vclz %v2503
    %v2505 = vsub.s32 %v2504, 2
    %vm2506 = vcmp.gt.s32.totalorder 0, %v2505
    %v2507 = vsel %vm2506, 0, %v2505
    %v2508 = vsub.s32 32, %v2507
    %v2509 = vshll.u32 %v2500, %v2507
    %v2510 = vshrl.u32 %v2492, %v2508
    %v2511 = vor.u32 %v2509, %v2510
    %v2512 = vsub.s32 4294967266, %v2507
    %v2513 = vadd.s32 %v2512, 127
    %v2514 = vshll.u32 %v2513, 23
    %v2515 = vor.u32 4788187, %v2514
    %v2516 = vand.u32 2147483647, %v2515
    %v2518 = vcvt.s32.f32 %v2511
    %v2519 = vmul.f32 %v2518, %v2516
    %v2520 = vxor.u32 %v2519, 2147483648
    %v2521 = vsel %vm2438, %v2520, %v2519
    %v2522 = vsub.s32 4, %v2498
    %v2523 = vsel %vm2438, %v2522, %v2498
    %v2524 = vsel %vm2437, %v310, %v2521
    %v2525 = vsel %vm2437, 0, %v2523
    %v2526 = vcosq.f32.pop %v2524
    %v2527 = vsinq.f32.pop %v2524
    %vm2528 = vweird.f32 %v310
    %v2529 = vadd.s32 %v2525, 3
    %v2530 = vand.u32 %v2529, 3
    %vm2531 = vcmp.lt.s32.totalorder %v2530, 2
    %vm2532 = vcmp.eq.s32.totalorder %v2530, 0
    %v2533 = vxor.u32 %v2527, 2147483648
    %v2534 = vsel %vm2532, %v2526, %v2533
    %vm2535 = vcmp.eq.s32.totalorder %v2530, 2
    %v2536 = vxor.u32 %v2526, 2147483648
    %v2537 = vsel %vm2535, %v2536, %v2527
    %v2538 = vsel %vm2531, %v2534, %v2537
    %v2539 = vsel %vm2528, nan, %v2538
    %v2540 = vand.u32 2147483647, %v313
    %vm2541 = vcmp.le.f32.partialorder %v2540, 0.7853982
    %vm2542 = vcmp.lt.s32.totalorder %v313, 0
    %v2543 = vand.u32 %v313, 2139095040
    %v2544 = vshrl.u32 %v2543, 23
    %v2545 = vsub.s32 %v2544, 127
    %v2546 = vand.u32 2147483647, %v313
    %v2547 = vand.u32 %v2546, 8388607
    %v2548 = vor.u32 %v2547, 8388608
    %v2549 = vsub.s32 0, %v2548
    %v2550 = vadd.s32 %v2545, 1
    %vm2551 = vcmp.gt.s32.totalorder %v2550, 0
    %v2552 = vsel %vm2551, %v2550, 0
    %v2553 = vshrl.u32 %v2552, 5
    %v2554 = vand.u32 %v2552, 31
    %v2555 = vsub.s32 32, %v2554
    %v2556 = vshrl.u32 683565275, %v2555
    %v2557 = vshll.u32 683565275, %v2554
    %v2558 = vshrl.u32 2475754826, %v2555
    %v2559 = vor.u32 %v2557, %v2558
    %v2560 = vshll.u32 2475754826, %v2554
    %v2561 = vshrl.u32 2131351028, %v2555
    %v2562 = vor.u32 %v2560, %v2561
    %v2563 = vshll.u32 2131351028, %v2554
    %v2564 = vshrl.u32 2102212464, %v2555
    %v2565 = vor.u32 %v2563, %v2564
    %v2566 = vshll.u32 2102212464, %v2554
    %v2567 = vshrl.u32 920167782, %v2555
    %v2568 = vor.u32 %v2566, %v2567
    %v2569 = vshll.u32 920167782, %v2554
    %v2570 = vshrl.u32 1326507024, %v2555
    %v2571 = vor.u32 %v2569, %v2570
    %vm2572 = vcmp.lt.s32.totalorder %v2553, 1
    %vm2573 = vcmp.lt.s32.totalorder %v2553, 2
    %vm2574 = vcmp.lt.s32.totalorder %v2553, 3
    %vm2575 = vcmp.lt.s32.totalorder %v2553, 4
    %v2576 = vsel %vm2572, %v2556, %v2559
    %v2577 = vsel %vm2575, %v2565, 2102212464
    %v2578 = vsel %vm2574, %v2562, %v2577
    %v2579 = vsel %vm2573, %v2576, %v2578
    %v2580 = vsel %vm2572, %v2559, %v2562
    %v2581 = vsel %vm2575, %v2568, 920167782
    %v2582 = vsel %vm2574, %v2565, %v2581
    %v2583 = vsel %vm2573, %v2580, %v2582
    %v2584 = vsel %vm2572, %v2562, %v2565
    %v2585 = vsel %vm2575, %v2571, 1326507024
    %v2586 = vsel %vm2574, %v2568, %v2585
    %v2587 = vsel %vm2573, %v2584, %v2586
    %v2588 = vshll.u32 %v2548, 8
    %v2589 = vmul.u32.u64.compose %v2588, %v2587
    %v2590 = vextract.low.u32 %v2589
    %v2591 = vextract.high.u32 %v2589
    %v2592 = vmul.u32.u64.compose %v2588, %v2583
    %v2593 = vextract.low.u32 %v2592
    %v2594 = vextract.high.u32 %v2592
    %v2595 = vmul.u32 %v2588, %v2579
    %v2596 = vadd.s32 %v2591, %v2593
    %vm2597 = vc.u32 %v2591, %v2593
    %v2598 = vadd.s32 %v2594, 1
    %v2599 = vsel %vm2597, %v2598, %v2594
    %v2600 = vadd.s32 %v2595, %v2599
    %v2601 = vadd.s32 %v2600, 536870912
    %v2602 = vshrl.u32 %v2601, 30
    %v2603 = vshll.u32 %v2602, 30
    %v2604 = vsub.s32 %v2600, %v2603
    %vm2605 = vcmp.lt.s32.totalorder %v2604, 0
    %v2606 = vsub.s32 0, %v2604
    %v2607 = vsel %vm2605, %v2606, %v2604
    %v2608 = vclz %v2607
    %v2609 = vsub.s32 %v2608, 2
    %vm2610 = vcmp.gt.s32.totalorder 0, %v2609
    %v2611 = vsel %vm2610, 0, %v2609
    %v2612 = vsub.s32 32, %v2611
    %v2613 = vshll.u32 %v2604, %v2611
    %v2614 = vshrl.u32 %v2596, %v2612
    %v2615 = vor.u32 %v2613, %v2614
    %v2616 = vsub.s32 4294967266, %v2611
    %v2617 = vadd.s32 %v2616, 127
    %v2618 = vshll.u32 %v2617, 23
    %v2619 = vor.u32 4788187, %v2618
    %v2620 = vand.u32 2147483647, %v2619
    %v2622 = vcvt.s32.f32 %v2615
    %v2623 = vmul.f32 %v2622, %v2620
    %v2624 = vxor.u32 %v2623, 2147483648
    %v2625 = vsel %vm2542, %v2624, %v2623
    %v2626 = vsub.s32 4, %v2602
    %v2627 = vsel %vm2542, %v2626, %v2602
    %v2628 = vsel %vm2541, %v313, %v2625
    %v2629 = vsel %vm2541, 0, %v2627
    %v2630 = vcosq.f32.pop %v2628
    %v2631 = vsinq.f32.pop %v2628
    %vm2632 = vweird.f32 %v313
    %v2633 = vadd.s32 %v2629, 3
    %v2634 = vand.u32 %v2633, 3
    %vm2635 = vcmp.lt.s32.totalorder %v2634, 2
    %vm2636 = vcmp.eq.s32.totalorder %v2634, 0
    %v2637 = vxor.u32 %v2631, 2147483648
    %v2638 = vsel %vm2636, %v2630, %v2637
    %vm2639 = vcmp.eq.s32.totalorder %v2634, 2
    %v2640 = vxor.u32 %v2630, 2147483648
    %v2641 = vsel %vm2639, %v2640, %v2631
    %v2642 = vsel %vm2635, %v2638, %v2641
    %v2643 = vsel %vm2632, nan, %v2642
    %v2644 = vand.u32 2147483647, %v318
    %vm2645 = vcmp.le.f32.partialorder %v2644, 0.7853982
    %vm2646 = vcmp.lt.s32.totalorder %v318, 0
    %v2647 = vand.u32 %v318, 2139095040
    %v2648 = vshrl.u32 %v2647, 23
    %v2649 = vsub.s32 %v2648, 127
    %v2650 = vand.u32 2147483647, %v318
    %v2651 = vand.u32 %v2650, 8388607
    %v2652 = vor.u32 %v2651, 8388608
    %v2653 = vsub.s32 0, %v2652
    %v2654 = vadd.s32 %v2649, 1
    %vm2655 = vcmp.gt.s32.totalorder %v2654, 0
    %v2656 = vsel %vm2655, %v2654, 0
    %v2657 = vshrl.u32 %v2656, 5
    %v2658 = vand.u32 %v2656, 31
    %v2659 = vsub.s32 32, %v2658
    %v2660 = vshrl.u32 683565275, %v2659
    %v2661 = vshll.u32 683565275, %v2658
    %v2662 = vshrl.u32 2475754826, %v2659
    %v2663 = vor.u32 %v2661, %v2662
    %v2664 = vshll.u32 2475754826, %v2658
    %v2665 = vshrl.u32 2131351028, %v2659
    %v2666 = vor.u32 %v2664, %v2665
    %v2667 = vshll.u32 2131351028, %v2658
    %v2668 = vshrl.u32 2102212464, %v2659
    %v2669 = vor.u32 %v2667, %v2668
    %v2670 = vshll.u32 2102212464, %v2658
    %v2671 = vshrl.u32 920167782, %v2659
    %v2672 = vor.u32 %v2670, %v2671
    %v2673 = vshll.u32 920167782, %v2658
    %v2674 = vshrl.u32 1326507024, %v2659
    %v2675 = vor.u32 %v2673, %v2674
    %vm2676 = vcmp.lt.s32.totalorder %v2657, 1
    %vm2677 = vcmp.lt.s32.totalorder %v2657, 2
    %vm2678 = vcmp.lt.s32.totalorder %v2657, 3
    %vm2679 = vcmp.lt.s32.totalorder %v2657, 4
    %v2680 = vsel %vm2676, %v2660, %v2663
    %v2681 = vsel %vm2679, %v2669, 2102212464
    %v2682 = vsel %vm2678, %v2666, %v2681
    %v2683 = vsel %vm2677, %v2680, %v2682
    %v2684 = vsel %vm2676, %v2663, %v2666
    %v2685 = vsel %vm2679, %v2672, 920167782
    %v2686 = vsel %vm2678, %v2669, %v2685
    %v2687 = vsel %vm2677, %v2684, %v2686
    %v2688 = vsel %vm2676, %v2666, %v2669
    %v2689 = vsel %vm2679, %v2675, 1326507024
    %v2690 = vsel %vm2678, %v2672, %v2689
    %v2691 = vsel %vm2677, %v2688, %v2690
    %v2692 = vshll.u32 %v2652, 8
    %v2693 = vmul.u32.u64.compose %v2692, %v2691
    %v2694 = vextract.low.u32 %v2693
    %v2695 = vextract.high.u32 %v2693
    %v2696 = vmul.u32.u64.compose %v2692, %v2687
    %v2697 = vextract.low.u32 %v2696
    %v2698 = vextract.high.u32 %v2696
    %v2699 = vmul.u32 %v2692, %v2683
    %v2700 = vadd.s32 %v2695, %v2697
    %vm2701 = vc.u32 %v2695, %v2697
    %v2702 = vadd.s32 %v2698, 1
    %v2703 = vsel %vm2701, %v2702, %v2698
    %v2704 = vadd.s32 %v2699, %v2703
    %v2705 = vadd.s32 %v2704, 536870912
    %v2706 = vshrl.u32 %v2705, 30
    %v2707 = vshll.u32 %v2706, 30
    %v2708 = vsub.s32 %v2704, %v2707
    %vm2709 = vcmp.lt.s32.totalorder %v2708, 0
    %v2710 = vsub.s32 0, %v2708
    %v2711 = vsel %vm2709, %v2710, %v2708
    %v2712 = vclz %v2711
    %v2713 = vsub.s32 %v2712, 2
    %vm2714 = vcmp.gt.s32.totalorder 0, %v2713
    %v2715 = vsel %vm2714, 0, %v2713
    %v2716 = vsub.s32 32, %v2715
    %v2717 = vshll.u32 %v2708, %v2715
    %v2718 = vshrl.u32 %v2700, %v2716
    %v2719 = vor.u32 %v2717, %v2718
    %v2720 = vsub.s32 4294967266, %v2715
    %v2721 = vadd.s32 %v2720, 127
    %v2722 = vshll.u32 %v2721, 23
    %v2723 = vor.u32 4788187, %v2722
    %v2724 = vand.u32 2147483647, %v2723
    %v2726 = vcvt.s32.f32 %v2719
    %v2727 = vmul.f32 %v2726, %v2724
    %v2728 = vxor.u32 %v2727, 2147483648
    %v2729 = vsel %vm2646, %v2728, %v2727
    %v2730 = vsub.s32 4, %v2706
    %v2731 = vsel %vm2646, %v2730, %v2706
    %v2732 = vsel %vm2645, %v318, %v2729
    %v2733 = vsel %vm2645, 0, %v2731
    %v2734 = vcosq.f32.pop %v2732
    %v2735 = vsinq.f32.pop %v2732
    %vm2736 = vweird.f32 %v318
    %v2737 = vadd.s32 %v2733, 3
    %v2738 = vand.u32 %v2737, 3
    %vm2739 = vcmp.lt.s32.totalorder %v2738, 2
    %vm2740 = vcmp.eq.s32.totalorder %v2738, 0
    %v2741 = vxor.u32 %v2735, 2147483648
    %v2742 = vsel %vm2740, %v2734, %v2741
    %vm2743 = vcmp.eq.s32.totalorder %v2738, 2
    %v2744 = vxor.u32 %v2734, 2147483648
    %v2745 = vsel %vm2743, %v2744, %v2735
    %v2746 = vsel %vm2739, %v2742, %v2745
    %v2747 = vsel %vm2736, nan, %v2746
    %v2748 = vand.u32 2147483647, %v321
    %vm2749 = vcmp.le.f32.partialorder %v2748, 0.7853982
    %vm2750 = vcmp.lt.s32.totalorder %v321, 0
    %v2751 = vand.u32 %v321, 2139095040
    %v2752 = vshrl.u32 %v2751, 23
    %v2753 = vsub.s32 %v2752, 127
    %v2754 = vand.u32 2147483647, %v321
    %v2755 = vand.u32 %v2754, 8388607
    %v2756 = vor.u32 %v2755, 8388608
    %v2757 = vsub.s32 0, %v2756
    %v2758 = vadd.s32 %v2753, 1
    %vm2759 = vcmp.gt.s32.totalorder %v2758, 0
    %v2760 = vsel %vm2759, %v2758, 0
    %v2761 = vshrl.u32 %v2760, 5
    %v2762 = vand.u32 %v2760, 31
    %v2763 = vsub.s32 32, %v2762
    %v2764 = vshrl.u32 683565275, %v2763
    %v2765 = vshll.u32 683565275, %v2762
    %v2766 = vshrl.u32 2475754826, %v2763
    %v2767 = vor.u32 %v2765, %v2766
    %v2768 = vshll.u32 2475754826, %v2762
    %v2769 = vshrl.u32 2131351028, %v2763
    %v2770 = vor.u32 %v2768, %v2769
    %v2771 = vshll.u32 2131351028, %v2762
    %v2772 = vshrl.u32 2102212464, %v2763
    %v2773 = vor.u32 %v2771, %v2772
    %v2774 = vshll.u32 2102212464, %v2762
    %v2775 = vshrl.u32 920167782, %v2763
    %v2776 = vor.u32 %v2774, %v2775
    %v2777 = vshll.u32 920167782, %v2762
    %v2778 = vshrl.u32 1326507024, %v2763
    %v2779 = vor.u32 %v2777, %v2778
    %vm2780 = vcmp.lt.s32.totalorder %v2761, 1
    %vm2781 = vcmp.lt.s32.totalorder %v2761, 2
    %vm2782 = vcmp.lt.s32.totalorder %v2761, 3
    %vm2783 = vcmp.lt.s32.totalorder %v2761, 4
    %v2784 = vsel %vm2780, %v2764, %v2767
    %v2785 = vsel %vm2783, %v2773, 2102212464
    %v2786 = vsel %vm2782, %v2770, %v2785
    %v2787 = vsel %vm2781, %v2784, %v2786
    %v2788 = vsel %vm2780, %v2767, %v2770
    %v2789 = vsel %vm2783, %v2776, 920167782
    %v2790 = vsel %vm2782, %v2773, %v2789
    %v2791 = vsel %vm2781, %v2788, %v2790
    %v2792 = vsel %vm2780, %v2770, %v2773
    %v2793 = vsel %vm2783, %v2779, 1326507024
    %v2794 = vsel %vm2782, %v2776, %v2793
    %v2795 = vsel %vm2781, %v2792, %v2794
    %v2796 = vshll.u32 %v2756, 8
    %v2797 = vmul.u32.u64.compose %v2796, %v2795
    %v2798 = vextract.low.u32 %v2797
    %v2799 = vextract.high.u32 %v2797
    %v2800 = vmul.u32.u64.compose %v2796, %v2791
    %v2801 = vextract.low.u32 %v2800
    %v2802 = vextract.high.u32 %v2800
    %v2803 = vmul.u32 %v2796, %v2787
    %v2804 = vadd.s32 %v2799, %v2801
    %vm2805 = vc.u32 %v2799, %v2801
    %v2806 = vadd.s32 %v2802, 1
    %v2807 = vsel %vm2805, %v2806, %v2802
    %v2808 = vadd.s32 %v2803, %v2807
    %v2809 = vadd.s32 %v2808, 536870912
    %v2810 = vshrl.u32 %v2809, 30
    %v2811 = vshll.u32 %v2810, 30
    %v2812 = vsub.s32 %v2808, %v2811
    %vm2813 = vcmp.lt.s32.totalorder %v2812, 0
    %v2814 = vsub.s32 0, %v2812
    %v2815 = vsel %vm2813, %v2814, %v2812
    %v2816 = vclz %v2815
    %v2817 = vsub.s32 %v2816, 2
    %vm2818 = vcmp.gt.s32.totalorder 0, %v2817
    %v2819 = vsel %vm2818, 0, %v2817
    %v2820 = vsub.s32 32, %v2819
    %v2821 = vshll.u32 %v2812, %v2819
    %v2822 = vshrl.u32 %v2804, %v2820
    %v2823 = vor.u32 %v2821, %v2822
    %v2824 = vsub.s32 4294967266, %v2819
    %v2825 = vadd.s32 %v2824, 127
    %v2826 = vshll.u32 %v2825, 23
    %v2827 = vor.u32 4788187, %v2826
    %v2828 = vand.u32 2147483647, %v2827
    %v2830 = vcvt.s32.f32 %v2823
    %v2831 = vmul.f32 %v2830, %v2828
    %v2832 = vxor.u32 %v2831, 2147483648
    %v2833 = vsel %vm2750, %v2832, %v2831
    %v2834 = vsub.s32 4, %v2810
    %v2835 = vsel %vm2750, %v2834, %v2810
    %v2836 = vsel %vm2749, %v321, %v2833
    %v2837 = vsel %vm2749, 0, %v2835
    %v2838 = vcosq.f32.pop %v2836
    %v2839 = vsinq.f32.pop %v2836
    %vm2840 = vweird.f32 %v321
    %v2841 = vadd.s32 %v2837, 3
    %v2842 = vand.u32 %v2841, 3
    %vm2843 = vcmp.lt.s32.totalorder %v2842, 2
    %vm2844 = vcmp.eq.s32.totalorder %v2842, 0
    %v2845 = vxor.u32 %v2839, 2147483648
    %v2846 = vsel %vm2844, %v2838, %v2845
    %vm2847 = vcmp.eq.s32.totalorder %v2842, 2
    %v2848 = vxor.u32 %v2838, 2147483648
    %v2849 = vsel %vm2847, %v2848, %v2839
    %v2850 = vsel %vm2843, %v2846, %v2849
    %v2851 = vsel %vm2840, nan, %v2850
    %v2852 = vand.u32 2147483647, %v326
    %vm2853 = vcmp.le.f32.partialorder %v2852, 0.7853982
    %vm2854 = vcmp.lt.s32.totalorder %v326, 0
    %v2855 = vand.u32 %v326, 2139095040
    %v2856 = vshrl.u32 %v2855, 23
    %v2857 = vsub.s32 %v2856, 127
    %v2858 = vand.u32 2147483647, %v326
    %v2859 = vand.u32 %v2858, 8388607
    %v2860 = vor.u32 %v2859, 8388608
    %v2861 = vsub.s32 0, %v2860
    %v2862 = vadd.s32 %v2857, 1
    %vm2863 = vcmp.gt.s32.totalorder %v2862, 0
    %v2864 = vsel %vm2863, %v2862, 0
    %v2865 = vshrl.u32 %v2864, 5
    %v2866 = vand.u32 %v2864, 31
    %v2867 = vsub.s32 32, %v2866
    %v2868 = vshrl.u32 683565275, %v2867
    %v2869 = vshll.u32 683565275, %v2866
    %v2870 = vshrl.u32 2475754826, %v2867
    %v2871 = vor.u32 %v2869, %v2870
    %v2872 = vshll.u32 2475754826, %v2866
    %v2873 = vshrl.u32 2131351028, %v2867
    %v2874 = vor.u32 %v2872, %v2873
    %v2875 = vshll.u32 2131351028, %v2866
    %v2876 = vshrl.u32 2102212464, %v2867
    %v2877 = vor.u32 %v2875, %v2876
    %v2878 = vshll.u32 2102212464, %v2866
    %v2879 = vshrl.u32 920167782, %v2867
    %v2880 = vor.u32 %v2878, %v2879
    %v2881 = vshll.u32 920167782, %v2866
    %v2882 = vshrl.u32 1326507024, %v2867
    %v2883 = vor.u32 %v2881, %v2882
    %vm2884 = vcmp.lt.s32.totalorder %v2865, 1
    %vm2885 = vcmp.lt.s32.totalorder %v2865, 2
    %vm2886 = vcmp.lt.s32.totalorder %v2865, 3
    %vm2887 = vcmp.lt.s32.totalorder %v2865, 4
    %v2888 = vsel %vm2884, %v2868, %v2871
    %v2889 = vsel %vm2887, %v2877, 2102212464
    %v2890 = vsel %vm2886, %v2874, %v2889
    %v2891 = vsel %vm2885, %v2888, %v2890
    %v2892 = vsel %vm2884, %v2871, %v2874
    %v2893 = vsel %vm2887, %v2880, 920167782
    %v2894 = vsel %vm2886, %v2877, %v2893
    %v2895 = vsel %vm2885, %v2892, %v2894
    %v2896 = vsel %vm2884, %v2874, %v2877
    %v2897 = vsel %vm2887, %v2883, 1326507024
    %v2898 = vsel %vm2886, %v2880, %v2897
    %v2899 = vsel %vm2885, %v2896, %v2898
    %v2900 = vshll.u32 %v2860, 8
    %v2901 = vmul.u32.u64.compose %v2900, %v2899
    %v2902 = vextract.low.u32 %v2901
    %v2903 = vextract.high.u32 %v2901
    %v2904 = vmul.u32.u64.compose %v2900, %v2895
    %v2905 = vextract.low.u32 %v2904
    %v2906 = vextract.high.u32 %v2904
    %v2907 = vmul.u32 %v2900, %v2891
    %v2908 = vadd.s32 %v2903, %v2905
    %vm2909 = vc.u32 %v2903, %v2905
    %v2910 = vadd.s32 %v2906, 1
    %v2911 = vsel %vm2909, %v2910, %v2906
    %v2912 = vadd.s32 %v2907, %v2911
    %v2913 = vadd.s32 %v2912, 536870912
    %v2914 = vshrl.u32 %v2913, 30
    %v2915 = vshll.u32 %v2914, 30
    %v2916 = vsub.s32 %v2912, %v2915
    %vm2917 = vcmp.lt.s32.totalorder %v2916, 0
    %v2918 = vsub.s32 0, %v2916
    %v2919 = vsel %vm2917, %v2918, %v2916
    %v2920 = vclz %v2919
    %v2921 = vsub.s32 %v2920, 2
    %vm2922 = vcmp.gt.s32.totalorder 0, %v2921
    %v2923 = vsel %vm2922, 0, %v2921
    %v2924 = vsub.s32 32, %v2923
    %v2925 = vshll.u32 %v2916, %v2923
    %v2926 = vshrl.u32 %v2908, %v2924
    %v2927 = vor.u32 %v2925, %v2926
    %v2928 = vsub.s32 4294967266, %v2923
    %v2929 = vadd.s32 %v2928, 127
    %v2930 = vshll.u32 %v2929, 23
    %v2931 = vor.u32 4788187, %v2930
    %v2932 = vand.u32 2147483647, %v2931
    %v2934 = vcvt.s32.f32 %v2927
    %v2935 = vmul.f32 %v2934, %v2932
    %v2936 = vxor.u32 %v2935, 2147483648
    %v2937 = vsel %vm2854, %v2936, %v2935
    %v2938 = vsub.s32 4, %v2914
    %v2939 = vsel %vm2854, %v2938, %v2914
    %v2940 = vsel %vm2853, %v326, %v2937
    %v2941 = vsel %vm2853, 0, %v2939
    %v2942 = vcosq.f32.pop %v2940
    %v2943 = vsinq.f32.pop %v2940
    %vm2944 = vweird.f32 %v326
    %v2945 = vadd.s32 %v2941, 3
    %v2946 = vand.u32 %v2945, 3
    %vm2947 = vcmp.lt.s32.totalorder %v2946, 2
    %vm2948 = vcmp.eq.s32.totalorder %v2946, 0
    %v2949 = vxor.u32 %v2943, 2147483648
    %v2950 = vsel %vm2948, %v2942, %v2949
    %vm2951 = vcmp.eq.s32.totalorder %v2946, 2
    %v2952 = vxor.u32 %v2942, 2147483648
    %v2953 = vsel %vm2951, %v2952, %v2943
    %v2954 = vsel %vm2947, %v2950, %v2953
    %v2955 = vsel %vm2944, nan, %v2954
    %v2956 = vand.u32 2147483647, %v329
    %vm2957 = vcmp.le.f32.partialorder %v2956, 0.7853982
    %vm2958 = vcmp.lt.s32.totalorder %v329, 0
    %v2959 = vand.u32 %v329, 2139095040
    %v2960 = vshrl.u32 %v2959, 23
    %v2961 = vsub.s32 %v2960, 127
    %v2962 = vand.u32 2147483647, %v329
    %v2963 = vand.u32 %v2962, 8388607
    %v2964 = vor.u32 %v2963, 8388608
    %v2965 = vsub.s32 0, %v2964
    %v2966 = vadd.s32 %v2961, 1
    %vm2967 = vcmp.gt.s32.totalorder %v2966, 0
    %v2968 = vsel %vm2967, %v2966, 0
    %v2969 = vshrl.u32 %v2968, 5
    %v2970 = vand.u32 %v2968, 31
    %v2971 = vsub.s32 32, %v2970
    %v2972 = vshrl.u32 683565275, %v2971
    %v2973 = vshll.u32 683565275, %v2970
    %v2974 = vshrl.u32 2475754826, %v2971
    %v2975 = vor.u32 %v2973, %v2974
    %v2976 = vshll.u32 2475754826, %v2970
    %v2977 = vshrl.u32 2131351028, %v2971
    %v2978 = vor.u32 %v2976, %v2977
    %v2979 = vshll.u32 2131351028, %v2970
    %v2980 = vshrl.u32 2102212464, %v2971
    %v2981 = vor.u32 %v2979, %v2980
    %v2982 = vshll.u32 2102212464, %v2970
    %v2983 = vshrl.u32 920167782, %v2971
    %v2984 = vor.u32 %v2982, %v2983
    %v2985 = vshll.u32 920167782, %v2970
    %v2986 = vshrl.u32 1326507024, %v2971
    %v2987 = vor.u32 %v2985, %v2986
    %vm2988 = vcmp.lt.s32.totalorder %v2969, 1
    %vm2989 = vcmp.lt.s32.totalorder %v2969, 2
    %vm2990 = vcmp.lt.s32.totalorder %v2969, 3
    %vm2991 = vcmp.lt.s32.totalorder %v2969, 4
    %v2992 = vsel %vm2988, %v2972, %v2975
    %v2993 = vsel %vm2991, %v2981, 2102212464
    %v2994 = vsel %vm2990, %v2978, %v2993
    %v2995 = vsel %vm2989, %v2992, %v2994
    %v2996 = vsel %vm2988, %v2975, %v2978
    %v2997 = vsel %vm2991, %v2984, 920167782
    %v2998 = vsel %vm2990, %v2981, %v2997
    %v2999 = vsel %vm2989, %v2996, %v2998
    %v3000 = vsel %vm2988, %v2978, %v2981
    %v3001 = vsel %vm2991, %v2987, 1326507024
    %v3002 = vsel %vm2990, %v2984, %v3001
    %v3003 = vsel %vm2989, %v3000, %v3002
    %v3004 = vshll.u32 %v2964, 8
    %v3005 = vmul.u32.u64.compose %v3004, %v3003
    %v3006 = vextract.low.u32 %v3005
    %v3007 = vextract.high.u32 %v3005
    %v3008 = vmul.u32.u64.compose %v3004, %v2999
    %v3009 = vextract.low.u32 %v3008
    %v3010 = vextract.high.u32 %v3008
    %v3011 = vmul.u32 %v3004, %v2995
    %v3012 = vadd.s32 %v3007, %v3009
    %vm3013 = vc.u32 %v3007, %v3009
    %v3014 = vadd.s32 %v3010, 1
    %v3015 = vsel %vm3013, %v3014, %v3010
    %v3016 = vadd.s32 %v3011, %v3015
    %v3017 = vadd.s32 %v3016, 536870912
    %v3018 = vshrl.u32 %v3017, 30
    %v3019 = vshll.u32 %v3018, 30
    %v3020 = vsub.s32 %v3016, %v3019
    %vm3021 = vcmp.lt.s32.totalorder %v3020, 0
    %v3022 = vsub.s32 0, %v3020
    %v3023 = vsel %vm3021, %v3022, %v3020
    %v3024 = vclz %v3023
    %v3025 = vsub.s32 %v3024, 2
    %vm3026 = vcmp.gt.s32.totalorder 0, %v3025
    %v3027 = vsel %vm3026, 0, %v3025
    %v3028 = vsub.s32 32, %v3027
    %v3029 = vshll.u32 %v3020, %v3027
    %v3030 = vshrl.u32 %v3012, %v3028
    %v3031 = vor.u32 %v3029, %v3030
    %v3032 = vsub.s32 4294967266, %v3027
    %v3033 = vadd.s32 %v3032, 127
    %v3034 = vshll.u32 %v3033, 23
    %v3035 = vor.u32 4788187, %v3034
    %v3036 = vand.u32 2147483647, %v3035
    %v3038 = vcvt.s32.f32 %v3031
    %v3039 = vmul.f32 %v3038, %v3036
    %v3040 = vxor.u32 %v3039, 2147483648
    %v3041 = vsel %vm2958, %v3040, %v3039
    %v3042 = vsub.s32 4, %v3018
    %v3043 = vsel %vm2958, %v3042, %v3018
    %v3044 = vsel %vm2957, %v329, %v3041
    %v3045 = vsel %vm2957, 0, %v3043
    %v3046 = vcosq.f32.pop %v3044
    %v3047 = vsinq.f32.pop %v3044
    %vm3048 = vweird.f32 %v329
    %v3049 = vadd.s32 %v3045, 3
    %v3050 = vand.u32 %v3049, 3
    %vm3051 = vcmp.lt.s32.totalorder %v3050, 2
    %vm3052 = vcmp.eq.s32.totalorder %v3050, 0
    %v3053 = vxor.u32 %v3047, 2147483648
    %v3054 = vsel %vm3052, %v3046, %v3053
    %vm3055 = vcmp.eq.s32.totalorder %v3050, 2
    %v3056 = vxor.u32 %v3046, 2147483648
    %v3057 = vsel %vm3055, %v3056, %v3047
    %v3058 = vsel %vm3051, %v3054, %v3057
    %v3059 = vsel %vm3048, nan, %v3058
    %v3060 = vand.u32 2147483647, %v334
    %vm3061 = vcmp.le.f32.partialorder %v3060, 0.7853982
    %vm3062 = vcmp.lt.s32.totalorder %v334, 0
    %v3063 = vand.u32 %v334, 2139095040
    %v3064 = vshrl.u32 %v3063, 23
    %v3065 = vsub.s32 %v3064, 127
    %v3066 = vand.u32 2147483647, %v334
    %v3067 = vand.u32 %v3066, 8388607
    %v3068 = vor.u32 %v3067, 8388608
    %v3069 = vsub.s32 0, %v3068
    %v3070 = vadd.s32 %v3065, 1
    %vm3071 = vcmp.gt.s32.totalorder %v3070, 0
    %v3072 = vsel %vm3071, %v3070, 0
    %v3073 = vshrl.u32 %v3072, 5
    %v3074 = vand.u32 %v3072, 31
    %v3075 = vsub.s32 32, %v3074
    %v3076 = vshrl.u32 683565275, %v3075
    %v3077 = vshll.u32 683565275, %v3074
    %v3078 = vshrl.u32 2475754826, %v3075
    %v3079 = vor.u32 %v3077, %v3078
    %v3080 = vshll.u32 2475754826, %v3074
    %v3081 = vshrl.u32 2131351028, %v3075
    %v3082 = vor.u32 %v3080, %v3081
    %v3083 = vshll.u32 2131351028, %v3074
    %v3084 = vshrl.u32 2102212464, %v3075
    %v3085 = vor.u32 %v3083, %v3084
    %v3086 = vshll.u32 2102212464, %v3074
    %v3087 = vshrl.u32 920167782, %v3075
    %v3088 = vor.u32 %v3086, %v3087
    %v3089 = vshll.u32 920167782, %v3074
    %v3090 = vshrl.u32 1326507024, %v3075
    %v3091 = vor.u32 %v3089, %v3090
    %vm3092 = vcmp.lt.s32.totalorder %v3073, 1
    %vm3093 = vcmp.lt.s32.totalorder %v3073, 2
    %vm3094 = vcmp.lt.s32.totalorder %v3073, 3
    %vm3095 = vcmp.lt.s32.totalorder %v3073, 4
    %v3096 = vsel %vm3092, %v3076, %v3079
    %v3097 = vsel %vm3095, %v3085, 2102212464
    %v3098 = vsel %vm3094, %v3082, %v3097
    %v3099 = vsel %vm3093, %v3096, %v3098
    %v3100 = vsel %vm3092, %v3079, %v3082
    %v3101 = vsel %vm3095, %v3088, 920167782
    %v3102 = vsel %vm3094, %v3085, %v3101
    %v3103 = vsel %vm3093, %v3100, %v3102
    %v3104 = vsel %vm3092, %v3082, %v3085
    %v3105 = vsel %vm3095, %v3091, 1326507024
    %v3106 = vsel %vm3094, %v3088, %v3105
    %v3107 = vsel %vm3093, %v3104, %v3106
    %v3108 = vshll.u32 %v3068, 8
    %v3109 = vmul.u32.u64.compose %v3108, %v3107
    %v3110 = vextract.low.u32 %v3109
    %v3111 = vextract.high.u32 %v3109
    %v3112 = vmul.u32.u64.compose %v3108, %v3103
    %v3113 = vextract.low.u32 %v3112
    %v3114 = vextract.high.u32 %v3112
    %v3115 = vmul.u32 %v3108, %v3099
    %v3116 = vadd.s32 %v3111, %v3113
    %vm3117 = vc.u32 %v3111, %v3113
    %v3118 = vadd.s32 %v3114, 1
    %v3119 = vsel %vm3117, %v3118, %v3114
    %v3120 = vadd.s32 %v3115, %v3119
    %v3121 = vadd.s32 %v3120, 536870912
    %v3122 = vshrl.u32 %v3121, 30
    %v3123 = vshll.u32 %v3122, 30
    %v3124 = vsub.s32 %v3120, %v3123
    %vm3125 = vcmp.lt.s32.totalorder %v3124, 0
    %v3126 = vsub.s32 0, %v3124
    %v3127 = vsel %vm3125, %v3126, %v3124
    %v3128 = vclz %v3127
    %v3129 = vsub.s32 %v3128, 2
    %vm3130 = vcmp.gt.s32.totalorder 0, %v3129
    %v3131 = vsel %vm3130, 0, %v3129
    %v3132 = vsub.s32 32, %v3131
    %v3133 = vshll.u32 %v3124, %v3131
    %v3134 = vshrl.u32 %v3116, %v3132
    %v3135 = vor.u32 %v3133, %v3134
    %v3136 = vsub.s32 4294967266, %v3131
    %v3137 = vadd.s32 %v3136, 127
    %v3138 = vshll.u32 %v3137, 23
    %v3139 = vor.u32 4788187, %v3138
    %v3140 = vand.u32 2147483647, %v3139
    %v3142 = vcvt.s32.f32 %v3135
    %v3143 = vmul.f32 %v3142, %v3140
    %v3144 = vxor.u32 %v3143, 2147483648
    %v3145 = vsel %vm3062, %v3144, %v3143
    %v3146 = vsub.s32 4, %v3122
    %v3147 = vsel %vm3062, %v3146, %v3122
    %v3148 = vsel %vm3061, %v334, %v3145
    %v3149 = vsel %vm3061, 0, %v3147
    %v3150 = vcosq.f32.pop %v3148
    %v3151 = vsinq.f32.pop %v3148
    %vm3152 = vweird.f32 %v334
    %v3153 = vadd.s32 %v3149, 3
    %v3154 = vand.u32 %v3153, 3
    %vm3155 = vcmp.lt.s32.totalorder %v3154, 2
    %vm3156 = vcmp.eq.s32.totalorder %v3154, 0
    %v3157 = vxor.u32 %v3151, 2147483648
    %v3158 = vsel %vm3156, %v3150, %v3157
    %vm3159 = vcmp.eq.s32.totalorder %v3154, 2
    %v3160 = vxor.u32 %v3150, 2147483648
    %v3161 = vsel %vm3159, %v3160, %v3151
    %v3162 = vsel %vm3155, %v3158, %v3161
    %v3163 = vsel %vm3152, nan, %v3162
    %v3164 = vand.u32 2147483647, %v337
    %vm3165 = vcmp.le.f32.partialorder %v3164, 0.7853982
    %vm3166 = vcmp.lt.s32.totalorder %v337, 0
    %v3167 = vand.u32 %v337, 2139095040
    %v3168 = vshrl.u32 %v3167, 23
    %v3169 = vsub.s32 %v3168, 127
    %v3170 = vand.u32 2147483647, %v337
    %v3171 = vand.u32 %v3170, 8388607
    %v3172 = vor.u32 %v3171, 8388608
    %v3173 = vsub.s32 0, %v3172
    %v3174 = vadd.s32 %v3169, 1
    %vm3175 = vcmp.gt.s32.totalorder %v3174, 0
    %v3176 = vsel %vm3175, %v3174, 0
    %v3177 = vshrl.u32 %v3176, 5
    %v3178 = vand.u32 %v3176, 31
    %v3179 = vsub.s32 32, %v3178
    %v3180 = vshrl.u32 683565275, %v3179
    %v3181 = vshll.u32 683565275, %v3178
    %v3182 = vshrl.u32 2475754826, %v3179
    %v3183 = vor.u32 %v3181, %v3182
    %v3184 = vshll.u32 2475754826, %v3178
    %v3185 = vshrl.u32 2131351028, %v3179
    %v3186 = vor.u32 %v3184, %v3185
    %v3187 = vshll.u32 2131351028, %v3178
    %v3188 = vshrl.u32 2102212464, %v3179
    %v3189 = vor.u32 %v3187, %v3188
    %v3190 = vshll.u32 2102212464, %v3178
    %v3191 = vshrl.u32 920167782, %v3179
    %v3192 = vor.u32 %v3190, %v3191
    %v3193 = vshll.u32 920167782, %v3178
    %v3194 = vshrl.u32 1326507024, %v3179
    %v3195 = vor.u32 %v3193, %v3194
    %vm3196 = vcmp.lt.s32.totalorder %v3177, 1
    %vm3197 = vcmp.lt.s32.totalorder %v3177, 2
    %vm3198 = vcmp.lt.s32.totalorder %v3177, 3
    %vm3199 = vcmp.lt.s32.totalorder %v3177, 4
    %v3200 = vsel %vm3196, %v3180, %v3183
    %v3201 = vsel %vm3199, %v3189, 2102212464
    %v3202 = vsel %vm3198, %v3186, %v3201
    %v3203 = vsel %vm3197, %v3200, %v3202
    %v3204 = vsel %vm3196, %v3183, %v3186
    %v3205 = vsel %vm3199, %v3192, 920167782
    %v3206 = vsel %vm3198, %v3189, %v3205
    %v3207 = vsel %vm3197, %v3204, %v3206
    %v3208 = vsel %vm3196, %v3186, %v3189
    %v3209 = vsel %vm3199, %v3195, 1326507024
    %v3210 = vsel %vm3198, %v3192, %v3209
    %v3211 = vsel %vm3197, %v3208, %v3210
    %v3212 = vshll.u32 %v3172, 8
    %v3213 = vmul.u32.u64.compose %v3212, %v3211
    %v3214 = vextract.low.u32 %v3213
    %v3215 = vextract.high.u32 %v3213
    %v3216 = vmul.u32.u64.compose %v3212, %v3207
    %v3217 = vextract.low.u32 %v3216
    %v3218 = vextract.high.u32 %v3216
    %v3219 = vmul.u32 %v3212, %v3203
    %v3220 = vadd.s32 %v3215, %v3217
    %vm3221 = vc.u32 %v3215, %v3217
    %v3222 = vadd.s32 %v3218, 1
    %v3223 = vsel %vm3221, %v3222, %v3218
    %v3224 = vadd.s32 %v3219, %v3223
    %v3225 = vadd.s32 %v3224, 536870912
    %v3226 = vshrl.u32 %v3225, 30
    %v3227 = vshll.u32 %v3226, 30
    %v3228 = vsub.s32 %v3224, %v3227
    %vm3229 = vcmp.lt.s32.totalorder %v3228, 0
    %v3230 = vsub.s32 0, %v3228
    %v3231 = vsel %vm3229, %v3230, %v3228
    %v3232 = vclz %v3231
    %v3233 = vsub.s32 %v3232, 2
    %vm3234 = vcmp.gt.s32.totalorder 0, %v3233
    %v3235 = vsel %vm3234, 0, %v3233
    %v3236 = vsub.s32 32, %v3235
    %v3237 = vshll.u32 %v3228, %v3235
    %v3238 = vshrl.u32 %v3220, %v3236
    %v3239 = vor.u32 %v3237, %v3238
    %v3240 = vsub.s32 4294967266, %v3235
    %v3241 = vadd.s32 %v3240, 127
    %v3242 = vshll.u32 %v3241, 23
    %v3243 = vor.u32 4788187, %v3242
    %v3244 = vand.u32 2147483647, %v3243
    %v3246 = vcvt.s32.f32 %v3239
    %v3247 = vmul.f32 %v3246, %v3244
    %v3248 = vxor.u32 %v3247, 2147483648
    %v3249 = vsel %vm3166, %v3248, %v3247
    %v3250 = vsub.s32 4, %v3226
    %v3251 = vsel %vm3166, %v3250, %v3226
    %v3252 = vsel %vm3165, %v337, %v3249
    %v3253 = vsel %vm3165, 0, %v3251
    %v3254 = vcosq.f32.pop %v3252
    %v3255 = vsinq.f32.pop %v3252
    %vm3256 = vweird.f32 %v337
    %v3257 = vadd.s32 %v3253, 3
    %v3258 = vand.u32 %v3257, 3
    %vm3259 = vcmp.lt.s32.totalorder %v3258, 2
    %vm3260 = vcmp.eq.s32.totalorder %v3258, 0
    %v3261 = vxor.u32 %v3255, 2147483648
    %v3262 = vsel %vm3260, %v3254, %v3261
    %vm3263 = vcmp.eq.s32.totalorder %v3258, 2
    %v3264 = vxor.u32 %v3254, 2147483648
    %v3265 = vsel %vm3263, %v3264, %v3255
    %v3266 = vsel %vm3259, %v3262, %v3265
    %v3267 = vsel %vm3256, nan, %v3266
    %v3268 = vand.u32 2147483647, %v342
    %vm3269 = vcmp.le.f32.partialorder %v3268, 0.7853982
    %vm3270 = vcmp.lt.s32.totalorder %v342, 0
    %v3271 = vand.u32 %v342, 2139095040
    %v3272 = vshrl.u32 %v3271, 23
    %v3273 = vsub.s32 %v3272, 127
    %v3274 = vand.u32 2147483647, %v342
    %v3275 = vand.u32 %v3274, 8388607
    %v3276 = vor.u32 %v3275, 8388608
    %v3277 = vsub.s32 0, %v3276
    %v3278 = vadd.s32 %v3273, 1
    %vm3279 = vcmp.gt.s32.totalorder %v3278, 0
    %v3280 = vsel %vm3279, %v3278, 0
    %v3281 = vshrl.u32 %v3280, 5
    %v3282 = vand.u32 %v3280, 31
    %v3283 = vsub.s32 32, %v3282
    %v3284 = vshrl.u32 683565275, %v3283
    %v3285 = vshll.u32 683565275, %v3282
    %v3286 = vshrl.u32 2475754826, %v3283
    %v3287 = vor.u32 %v3285, %v3286
    %v3288 = vshll.u32 2475754826, %v3282
    %v3289 = vshrl.u32 2131351028, %v3283
    %v3290 = vor.u32 %v3288, %v3289
    %v3291 = vshll.u32 2131351028, %v3282
    %v3292 = vshrl.u32 2102212464, %v3283
    %v3293 = vor.u32 %v3291, %v3292
    %v3294 = vshll.u32 2102212464, %v3282
    %v3295 = vshrl.u32 920167782, %v3283
    %v3296 = vor.u32 %v3294, %v3295
    %v3297 = vshll.u32 920167782, %v3282
    %v3298 = vshrl.u32 1326507024, %v3283
    %v3299 = vor.u32 %v3297, %v3298
    %vm3300 = vcmp.lt.s32.totalorder %v3281, 1
    %vm3301 = vcmp.lt.s32.totalorder %v3281, 2
    %vm3302 = vcmp.lt.s32.totalorder %v3281, 3
    %vm3303 = vcmp.lt.s32.totalorder %v3281, 4
    %v3304 = vsel %vm3300, %v3284, %v3287
    %v3305 = vsel %vm3303, %v3293, 2102212464
    %v3306 = vsel %vm3302, %v3290, %v3305
    %v3307 = vsel %vm3301, %v3304, %v3306
    %v3308 = vsel %vm3300, %v3287, %v3290
    %v3309 = vsel %vm3303, %v3296, 920167782
    %v3310 = vsel %vm3302, %v3293, %v3309
    %v3311 = vsel %vm3301, %v3308, %v3310
    %v3312 = vsel %vm3300, %v3290, %v3293
    %v3313 = vsel %vm3303, %v3299, 1326507024
    %v3314 = vsel %vm3302, %v3296, %v3313
    %v3315 = vsel %vm3301, %v3312, %v3314
    %v3316 = vshll.u32 %v3276, 8
    %v3317 = vmul.u32.u64.compose %v3316, %v3315
    %v3318 = vextract.low.u32 %v3317
    %v3319 = vextract.high.u32 %v3317
    %v3320 = vmul.u32.u64.compose %v3316, %v3311
    %v3321 = vextract.low.u32 %v3320
    %v3322 = vextract.high.u32 %v3320
    %v3323 = vmul.u32 %v3316, %v3307
    %v3324 = vadd.s32 %v3319, %v3321
    %vm3325 = vc.u32 %v3319, %v3321
    %v3326 = vadd.s32 %v3322, 1
    %v3327 = vsel %vm3325, %v3326, %v3322
    %v3328 = vadd.s32 %v3323, %v3327
    %v3329 = vadd.s32 %v3328, 536870912
    %v3330 = vshrl.u32 %v3329, 30
    %v3331 = vshll.u32 %v3330, 30
    %v3332 = vsub.s32 %v3328, %v3331
    %vm3333 = vcmp.lt.s32.totalorder %v3332, 0
    %v3334 = vsub.s32 0, %v3332
    %v3335 = vsel %vm3333, %v3334, %v3332
    %v3336 = vclz %v3335
    %v3337 = vsub.s32 %v3336, 2
    %vm3338 = vcmp.gt.s32.totalorder 0, %v3337
    %v3339 = vsel %vm3338, 0, %v3337
    %v3340 = vsub.s32 32, %v3339
    %v3341 = vshll.u32 %v3332, %v3339
    %v3342 = vshrl.u32 %v3324, %v3340
    %v3343 = vor.u32 %v3341, %v3342
    %v3344 = vsub.s32 4294967266, %v3339
    %v3345 = vadd.s32 %v3344, 127
    %v3346 = vshll.u32 %v3345, 23
    %v3347 = vor.u32 4788187, %v3346
    %v3348 = vand.u32 2147483647, %v3347
    %v3350 = vcvt.s32.f32 %v3343
    %v3351 = vmul.f32 %v3350, %v3348
    %v3352 = vxor.u32 %v3351, 2147483648
    %v3353 = vsel %vm3270, %v3352, %v3351
    %v3354 = vsub.s32 4, %v3330
    %v3355 = vsel %vm3270, %v3354, %v3330
    %v3356 = vsel %vm3269, %v342, %v3353
    %v3357 = vsel %vm3269, 0, %v3355
    %v3358 = vcosq.f32.pop %v3356
    %v3359 = vsinq.f32.pop %v3356
    %vm3360 = vweird.f32 %v342
    %v3361 = vadd.s32 %v3357, 3
    %v3362 = vand.u32 %v3361, 3
    %vm3363 = vcmp.lt.s32.totalorder %v3362, 2
    %vm3364 = vcmp.eq.s32.totalorder %v3362, 0
    %v3365 = vxor.u32 %v3359, 2147483648
    %v3366 = vsel %vm3364, %v3358, %v3365
    %vm3367 = vcmp.eq.s32.totalorder %v3362, 2
    %v3368 = vxor.u32 %v3358, 2147483648
    %v3369 = vsel %vm3367, %v3368, %v3359
    %v3370 = vsel %vm3363, %v3366, %v3369
    %v3371 = vsel %vm3360, nan, %v3370
    %v3372 = vand.u32 2147483647, %v345
    %vm3373 = vcmp.le.f32.partialorder %v3372, 0.7853982
    %vm3374 = vcmp.lt.s32.totalorder %v345, 0
    %v3375 = vand.u32 %v345, 2139095040
    %v3376 = vshrl.u32 %v3375, 23
    %v3377 = vsub.s32 %v3376, 127
    %v3378 = vand.u32 2147483647, %v345
    %v3379 = vand.u32 %v3378, 8388607
    %v3380 = vor.u32 %v3379, 8388608
    %v3381 = vsub.s32 0, %v3380
    %v3382 = vadd.s32 %v3377, 1
    %vm3383 = vcmp.gt.s32.totalorder %v3382, 0
    %v3384 = vsel %vm3383, %v3382, 0
    %v3385 = vshrl.u32 %v3384, 5
    %v3386 = vand.u32 %v3384, 31
    %v3387 = vsub.s32 32, %v3386
    %v3388 = vshrl.u32 683565275, %v3387
    %v3389 = vshll.u32 683565275, %v3386
    %v3390 = vshrl.u32 2475754826, %v3387
    %v3391 = vor.u32 %v3389, %v3390
    %v3392 = vshll.u32 2475754826, %v3386
    %v3393 = vshrl.u32 2131351028, %v3387
    %v3394 = vor.u32 %v3392, %v3393
    %v3395 = vshll.u32 2131351028, %v3386
    %v3396 = vshrl.u32 2102212464, %v3387
    %v3397 = vor.u32 %v3395, %v3396
    %v3398 = vshll.u32 2102212464, %v3386
    %v3399 = vshrl.u32 920167782, %v3387
    %v3400 = vor.u32 %v3398, %v3399
    %v3401 = vshll.u32 920167782, %v3386
    %v3402 = vshrl.u32 1326507024, %v3387
    %v3403 = vor.u32 %v3401, %v3402
    %vm3404 = vcmp.lt.s32.totalorder %v3385, 1
    %vm3405 = vcmp.lt.s32.totalorder %v3385, 2
    %vm3406 = vcmp.lt.s32.totalorder %v3385, 3
    %vm3407 = vcmp.lt.s32.totalorder %v3385, 4
    %v3408 = vsel %vm3404, %v3388, %v3391
    %v3409 = vsel %vm3407, %v3397, 2102212464
    %v3410 = vsel %vm3406, %v3394, %v3409
    %v3411 = vsel %vm3405, %v3408, %v3410
    %v3412 = vsel %vm3404, %v3391, %v3394
    %v3413 = vsel %vm3407, %v3400, 920167782
    %v3414 = vsel %vm3406, %v3397, %v3413
    %v3415 = vsel %vm3405, %v3412, %v3414
    %v3416 = vsel %vm3404, %v3394, %v3397
    %v3417 = vsel %vm3407, %v3403, 1326507024
    %v3418 = vsel %vm3406, %v3400, %v3417
    %v3419 = vsel %vm3405, %v3416, %v3418
    %v3420 = vshll.u32 %v3380, 8
    %v3421 = vmul.u32.u64.compose %v3420, %v3419
    %v3422 = vextract.low.u32 %v3421
    %v3423 = vextract.high.u32 %v3421
    %v3424 = vmul.u32.u64.compose %v3420, %v3415
    %v3425 = vextract.low.u32 %v3424
    %v3426 = vextract.high.u32 %v3424
    %v3427 = vmul.u32 %v3420, %v3411
    %v3428 = vadd.s32 %v3423, %v3425
    %vm3429 = vc.u32 %v3423, %v3425
    %v3430 = vadd.s32 %v3426, 1
    %v3431 = vsel %vm3429, %v3430, %v3426
    %v3432 = vadd.s32 %v3427, %v3431
    %v3433 = vadd.s32 %v3432, 536870912
    %v3434 = vshrl.u32 %v3433, 30
    %v3435 = vshll.u32 %v3434, 30
    %v3436 = vsub.s32 %v3432, %v3435
    %vm3437 = vcmp.lt.s32.totalorder %v3436, 0
    %v3438 = vsub.s32 0, %v3436
    %v3439 = vsel %vm3437, %v3438, %v3436
    %v3440 = vclz %v3439
    %v3441 = vsub.s32 %v3440, 2
    %vm3442 = vcmp.gt.s32.totalorder 0, %v3441
    %v3443 = vsel %vm3442, 0, %v3441
    %v3444 = vsub.s32 32, %v3443
    %v3445 = vshll.u32 %v3436, %v3443
    %v3446 = vshrl.u32 %v3428, %v3444
    %v3447 = vor.u32 %v3445, %v3446
    %v3448 = vsub.s32 4294967266, %v3443
    %v3449 = vadd.s32 %v3448, 127
    %v3450 = vshll.u32 %v3449, 23
    %v3451 = vor.u32 4788187, %v3450
    %v3452 = vand.u32 2147483647, %v3451
    %v3454 = vcvt.s32.f32 %v3447
    %v3455 = vmul.f32 %v3454, %v3452
    %v3456 = vxor.u32 %v3455, 2147483648
    %v3457 = vsel %vm3374, %v3456, %v3455
    %v3458 = vsub.s32 4, %v3434
    %v3459 = vsel %vm3374, %v3458, %v3434
    %v3460 = vsel %vm3373, %v345, %v3457
    %v3461 = vsel %vm3373, 0, %v3459
    %v3462 = vcosq.f32.pop %v3460
    %v3463 = vsinq.f32.pop %v3460
    %vm3464 = vweird.f32 %v345
    %v3465 = vadd.s32 %v3461, 3
    %v3466 = vand.u32 %v3465, 3
    %vm3467 = vcmp.lt.s32.totalorder %v3466, 2
    %vm3468 = vcmp.eq.s32.totalorder %v3466, 0
    %v3469 = vxor.u32 %v3463, 2147483648
    %v3470 = vsel %vm3468, %v3462, %v3469
    %vm3471 = vcmp.eq.s32.totalorder %v3466, 2
    %v3472 = vxor.u32 %v3462, 2147483648
    %v3473 = vsel %vm3471, %v3472, %v3463
    %v3474 = vsel %vm3467, %v3470, %v3473
    %v3475 = vsel %vm3464, nan, %v3474
    %v3476 = vand.u32 2147483647, %v350
    %vm3477 = vcmp.le.f32.partialorder %v3476, 0.7853982
    %vm3478 = vcmp.lt.s32.totalorder %v350, 0
    %v3479 = vand.u32 %v350, 2139095040
    %v3480 = vshrl.u32 %v3479, 23
    %v3481 = vsub.s32 %v3480, 127
    %v3482 = vand.u32 2147483647, %v350
    %v3483 = vand.u32 %v3482, 8388607
    %v3484 = vor.u32 %v3483, 8388608
    %v3485 = vsub.s32 0, %v3484
    %v3486 = vadd.s32 %v3481, 1
    %vm3487 = vcmp.gt.s32.totalorder %v3486, 0
    %v3488 = vsel %vm3487, %v3486, 0
    %v3489 = vshrl.u32 %v3488, 5
    %v3490 = vand.u32 %v3488, 31
    %v3491 = vsub.s32 32, %v3490
    %v3492 = vshrl.u32 683565275, %v3491
    %v3493 = vshll.u32 683565275, %v3490
    %v3494 = vshrl.u32 2475754826, %v3491
    %v3495 = vor.u32 %v3493, %v3494
    %v3496 = vshll.u32 2475754826, %v3490
    %v3497 = vshrl.u32 2131351028, %v3491
    %v3498 = vor.u32 %v3496, %v3497
    %v3499 = vshll.u32 2131351028, %v3490
    %v3500 = vshrl.u32 2102212464, %v3491
    %v3501 = vor.u32 %v3499, %v3500
    %v3502 = vshll.u32 2102212464, %v3490
    %v3503 = vshrl.u32 920167782, %v3491
    %v3504 = vor.u32 %v3502, %v3503
    %v3505 = vshll.u32 920167782, %v3490
    %v3506 = vshrl.u32 1326507024, %v3491
    %v3507 = vor.u32 %v3505, %v3506
    %vm3508 = vcmp.lt.s32.totalorder %v3489, 1
    %vm3509 = vcmp.lt.s32.totalorder %v3489, 2
    %vm3510 = vcmp.lt.s32.totalorder %v3489, 3
    %vm3511 = vcmp.lt.s32.totalorder %v3489, 4
    %v3512 = vsel %vm3508, %v3492, %v3495
    %v3513 = vsel %vm3511, %v3501, 2102212464
    %v3514 = vsel %vm3510, %v3498, %v3513
    %v3515 = vsel %vm3509, %v3512, %v3514
    %v3516 = vsel %vm3508, %v3495, %v3498
    %v3517 = vsel %vm3511, %v3504, 920167782
    %v3518 = vsel %vm3510, %v3501, %v3517
    %v3519 = vsel %vm3509, %v3516, %v3518
    %v3520 = vsel %vm3508, %v3498, %v3501
    %v3521 = vsel %vm3511, %v3507, 1326507024
    %v3522 = vsel %vm3510, %v3504, %v3521
    %v3523 = vsel %vm3509, %v3520, %v3522
    %v3524 = vshll.u32 %v3484, 8
    %v3525 = vmul.u32.u64.compose %v3524, %v3523
    %v3526 = vextract.low.u32 %v3525
    %v3527 = vextract.high.u32 %v3525
    %v3528 = vmul.u32.u64.compose %v3524, %v3519
    %v3529 = vextract.low.u32 %v3528
    %v3530 = vextract.high.u32 %v3528
    %v3531 = vmul.u32 %v3524, %v3515
    %v3532 = vadd.s32 %v3527, %v3529
    %vm3533 = vc.u32 %v3527, %v3529
    %v3534 = vadd.s32 %v3530, 1
    %v3535 = vsel %vm3533, %v3534, %v3530
    %v3536 = vadd.s32 %v3531, %v3535
    %v3537 = vadd.s32 %v3536, 536870912
    %v3538 = vshrl.u32 %v3537, 30
    %v3539 = vshll.u32 %v3538, 30
    %v3540 = vsub.s32 %v3536, %v3539
    %vm3541 = vcmp.lt.s32.totalorder %v3540, 0
    %v3542 = vsub.s32 0, %v3540
    %v3543 = vsel %vm3541, %v3542, %v3540
    %v3544 = vclz %v3543
    %v3545 = vsub.s32 %v3544, 2
    %vm3546 = vcmp.gt.s32.totalorder 0, %v3545
    %v3547 = vsel %vm3546, 0, %v3545
    %v3548 = vsub.s32 32, %v3547
    %v3549 = vshll.u32 %v3540, %v3547
    %v3550 = vshrl.u32 %v3532, %v3548
    %v3551 = vor.u32 %v3549, %v3550
    %v3552 = vsub.s32 4294967266, %v3547
    %v3553 = vadd.s32 %v3552, 127
    %v3554 = vshll.u32 %v3553, 23
    %v3555 = vor.u32 4788187, %v3554
    %v3556 = vand.u32 2147483647, %v3555
    %v3558 = vcvt.s32.f32 %v3551
    %v3559 = vmul.f32 %v3558, %v3556
    %v3560 = vxor.u32 %v3559, 2147483648
    %v3561 = vsel %vm3478, %v3560, %v3559
    %v3562 = vsub.s32 4, %v3538
    %v3563 = vsel %vm3478, %v3562, %v3538
    %v3564 = vsel %vm3477, %v350, %v3561
    %v3565 = vsel %vm3477, 0, %v3563
    %v3566 = vcosq.f32.pop %v3564
    %v3567 = vsinq.f32.pop %v3564
    %vm3568 = vweird.f32 %v350
    %v3569 = vadd.s32 %v3565, 3
    %v3570 = vand.u32 %v3569, 3
    %vm3571 = vcmp.lt.s32.totalorder %v3570, 2
    %vm3572 = vcmp.eq.s32.totalorder %v3570, 0
    %v3573 = vxor.u32 %v3567, 2147483648
    %v3574 = vsel %vm3572, %v3566, %v3573
    %vm3575 = vcmp.eq.s32.totalorder %v3570, 2
    %v3576 = vxor.u32 %v3566, 2147483648
    %v3577 = vsel %vm3575, %v3576, %v3567
    %v3578 = vsel %vm3571, %v3574, %v3577
    %v3579 = vsel %vm3568, nan, %v3578
    %v3580 = vand.u32 2147483647, %v353
    %vm3581 = vcmp.le.f32.partialorder %v3580, 0.7853982
    %vm3582 = vcmp.lt.s32.totalorder %v353, 0
    %v3583 = vand.u32 %v353, 2139095040
    %v3584 = vshrl.u32 %v3583, 23
    %v3585 = vsub.s32 %v3584, 127
    %v3586 = vand.u32 2147483647, %v353
    %v3587 = vand.u32 %v3586, 8388607
    %v3588 = vor.u32 %v3587, 8388608
    %v3589 = vsub.s32 0, %v3588
    %v3590 = vadd.s32 %v3585, 1
    %vm3591 = vcmp.gt.s32.totalorder %v3590, 0
    %v3592 = vsel %vm3591, %v3590, 0
    %v3593 = vshrl.u32 %v3592, 5
    %v3594 = vand.u32 %v3592, 31
    %v3595 = vsub.s32 32, %v3594
    %v3596 = vshrl.u32 683565275, %v3595
    %v3597 = vshll.u32 683565275, %v3594
    %v3598 = vshrl.u32 2475754826, %v3595
    %v3599 = vor.u32 %v3597, %v3598
    %v3600 = vshll.u32 2475754826, %v3594
    %v3601 = vshrl.u32 2131351028, %v3595
    %v3602 = vor.u32 %v3600, %v3601
    %v3603 = vshll.u32 2131351028, %v3594
    %v3604 = vshrl.u32 2102212464, %v3595
    %v3605 = vor.u32 %v3603, %v3604
    %v3606 = vshll.u32 2102212464, %v3594
    %v3607 = vshrl.u32 920167782, %v3595
    %v3608 = vor.u32 %v3606, %v3607
    %v3609 = vshll.u32 920167782, %v3594
    %v3610 = vshrl.u32 1326507024, %v3595
    %v3611 = vor.u32 %v3609, %v3610
    %vm3612 = vcmp.lt.s32.totalorder %v3593, 1
    %vm3613 = vcmp.lt.s32.totalorder %v3593, 2
    %vm3614 = vcmp.lt.s32.totalorder %v3593, 3
    %vm3615 = vcmp.lt.s32.totalorder %v3593, 4
    %v3616 = vsel %vm3612, %v3596, %v3599
    %v3617 = vsel %vm3615, %v3605, 2102212464
    %v3618 = vsel %vm3614, %v3602, %v3617
    %v3619 = vsel %vm3613, %v3616, %v3618
    %v3620 = vsel %vm3612, %v3599, %v3602
    %v3621 = vsel %vm3615, %v3608, 920167782
    %v3622 = vsel %vm3614, %v3605, %v3621
    %v3623 = vsel %vm3613, %v3620, %v3622
    %v3624 = vsel %vm3612, %v3602, %v3605
    %v3625 = vsel %vm3615, %v3611, 1326507024
    %v3626 = vsel %vm3614, %v3608, %v3625
    %v3627 = vsel %vm3613, %v3624, %v3626
    %v3628 = vshll.u32 %v3588, 8
    %v3629 = vmul.u32.u64.compose %v3628, %v3627
    %v3630 = vextract.low.u32 %v3629
    %v3631 = vextract.high.u32 %v3629
    %v3632 = vmul.u32.u64.compose %v3628, %v3623
    %v3633 = vextract.low.u32 %v3632
    %v3634 = vextract.high.u32 %v3632
    %v3635 = vmul.u32 %v3628, %v3619
    %v3636 = vadd.s32 %v3631, %v3633
    %vm3637 = vc.u32 %v3631, %v3633
    %v3638 = vadd.s32 %v3634, 1
    %v3639 = vsel %vm3637, %v3638, %v3634
    %v3640 = vadd.s32 %v3635, %v3639
    %v3641 = vadd.s32 %v3640, 536870912
    %v3642 = vshrl.u32 %v3641, 30
    %v3643 = vshll.u32 %v3642, 30
    %v3644 = vsub.s32 %v3640, %v3643
    %vm3645 = vcmp.lt.s32.totalorder %v3644, 0
    %v3646 = vsub.s32 0, %v3644
    %v3647 = vsel %vm3645, %v3646, %v3644
    %v3648 = vclz %v3647
    %v3649 = vsub.s32 %v3648, 2
    %vm3650 = vcmp.gt.s32.totalorder 0, %v3649
    %v3651 = vsel %vm3650, 0, %v3649
    %v3652 = vsub.s32 32, %v3651
    %v3653 = vshll.u32 %v3644, %v3651
    %v3654 = vshrl.u32 %v3636, %v3652
    %v3655 = vor.u32 %v3653, %v3654
    %v3656 = vsub.s32 4294967266, %v3651
    %v3657 = vadd.s32 %v3656, 127
    %v3658 = vshll.u32 %v3657, 23
    %v3659 = vor.u32 4788187, %v3658
    %v3660 = vand.u32 2147483647, %v3659
    %v3662 = vcvt.s32.f32 %v3655
    %v3663 = vmul.f32 %v3662, %v3660
    %v3664 = vxor.u32 %v3663, 2147483648
    %v3665 = vsel %vm3582, %v3664, %v3663
    %v3666 = vsub.s32 4, %v3642
    %v3667 = vsel %vm3582, %v3666, %v3642
    %v3668 = vsel %vm3581, %v353, %v3665
    %v3669 = vsel %vm3581, 0, %v3667
    %v3670 = vcosq.f32.pop %v3668
    %v3671 = vsinq.f32.pop %v3668
    %vm3672 = vweird.f32 %v353
    %v3673 = vadd.s32 %v3669, 3
    %v3674 = vand.u32 %v3673, 3
    %vm3675 = vcmp.lt.s32.totalorder %v3674, 2
    %vm3676 = vcmp.eq.s32.totalorder %v3674, 0
    %v3677 = vxor.u32 %v3671, 2147483648
    %v3678 = vsel %vm3676, %v3670, %v3677
    %vm3679 = vcmp.eq.s32.totalorder %v3674, 2
    %v3680 = vxor.u32 %v3670, 2147483648
    %v3681 = vsel %vm3679, %v3680, %v3671
    %v3682 = vsel %vm3675, %v3678, %v3681
    %v3683 = vsel %vm3672, nan, %v3682
    %v3684 = vpack.c.bf16 %v563, %v459
    %v3685 = vpack.c.bf16 %v771, %v667
    %v3686 = vpack.c.bf16 %v979, %v875
    %v3687 = vpack.c.bf16 %v1187, %v1083
    %v3688 = vpack.c.bf16 %v1395, %v1291
    %v3689 = vpack.c.bf16 %v1603, %v1499
    %v3690 = vpack.c.bf16 %v1811, %v1707
    %v3691 = vpack.c.bf16 %v2019, %v1915
    %v3692 = vpack.c.bf16 %v2227, %v2123
    %v3693 = vpack.c.bf16 %v2435, %v2331
    %v3694 = vpack.c.bf16 %v2643, %v2539
    %v3695 = vpack.c.bf16 %v2851, %v2747
    %v3696 = vpack.c.bf16 %v3059, %v2955
    %v3697 = vpack.c.bf16 %v3267, %v3163
    %v3698 = vpack.c.bf16 %v3475, %v3371
    %v3699 = vpack.c.bf16 %v3683, %v3579
    %v3700 = vld [vmem:[%s3] sm:$0xf]
    %v3701 = vld [vmem:[%s3 + $0x4] sm:$0xf]
    %v3702 = vld [vmem:[%s3 + $0x8] sm:$0xf]
    %v3703 = vld [vmem:[%s3 + $0xc] sm:$0xf]
    %v3704 = vld [vmem:[%s3 + $0x10] sm:$0xf]
    %v3705 = vld [vmem:[%s3 + $0x14] sm:$0xf]
    %v3706 = vld [vmem:[%s3 + $0x18] sm:$0xf]
    %v3707 = vld [vmem:[%s3 + $0x1c] sm:$0xf]
    %v3708 = vld [vmem:[%s3 + $0x20] sm:$0xf]
    %v3709 = vld [vmem:[%s3 + $0x24] sm:$0xf]
    %v3710 = vld [vmem:[%s3 + $0x28] sm:$0xf]
    %v3711 = vld [vmem:[%s3 + $0x2c] sm:$0xf]
    %v3712 = vld [vmem:[%s3 + $0x30] sm:$0xf]
    %v3713 = vld [vmem:[%s3 + $0x34] sm:$0xf]
    %v3714 = vld [vmem:[%s3 + $0x38] sm:$0xf]
    %v3715 = vld [vmem:[%s3 + $0x3c] sm:$0xf]
    %v3732 = vunpack.c.l.b16 %v3700
    %v3733 = vunpack.c.l.b16 %v3701
    %v3734 = vunpack.c.l.b16 %v3702
    %v3735 = vunpack.c.l.b16 %v3703
    %v3736 = vunpack.c.l.b16 %v3704
    %v3737 = vunpack.c.l.b16 %v3705
    %v3738 = vunpack.c.l.b16 %v3706
    %v3739 = vunpack.c.l.b16 %v3707
    %v3740 = vunpack.c.l.b16 %v3708
    %v3741 = vunpack.c.l.b16 %v3709
    %v3742 = vunpack.c.l.b16 %v3710
    %v3743 = vunpack.c.l.b16 %v3711
    %v3744 = vunpack.c.l.b16 %v3712
    %v3745 = vunpack.c.l.b16 %v3713
    %v3746 = vunpack.c.l.b16 %v3714
    %v3747 = vunpack.c.l.b16 %v3715
    %v3748 = vpack.c.b16 %v3733, %v3732
    %v3749 = vpack.c.b16 %v3735, %v3734
    %v3750 = vpack.c.b16 %v3737, %v3736
    %v3751 = vpack.c.b16 %v3739, %v3738
    %v3752 = vpack.c.b16 %v3741, %v3740
    %v3753 = vpack.c.b16 %v3743, %v3742
    %v3754 = vpack.c.b16 %v3745, %v3744
    %v3755 = vpack.c.b16 %v3747, %v3746
    %3764 = vmatprep.subr.bf16.mxu0 0
    %3765 = vmatpush1.bf16.msra.mxu0 %v3748
    %3766 = vmatprep.subr.bf16.mxu0 0
    %3767 = vmatpush1.bf16.msra.mxu0 %v3749
    %3768 = vmatprep.subr.bf16.mxu0 0
    %3769 = vmatpush1.bf16.msra.mxu0 %v3750
    %3770 = vmatprep.subr.bf16.mxu0 0
    %3771 = vmatpush1.bf16.msra.mxu0 %v3751
    %3772 = vmatprep.subr.bf16.mxu0 0
    %3773 = vmatpush1.bf16.msra.mxu0 %v3752
    %3774 = vmatprep.subr.bf16.mxu0 0
    %3775 = vmatpush1.bf16.msra.mxu0 %v3753
    %3776 = vmatprep.subr.bf16.mxu0 0
    %3777 = vmatpush1.bf16.msra.mxu0 %v3754
    %3778 = vmatprep.subr.bf16.mxu0 0
    %3779 = vmatpush1.bf16.msra.mxu0 %v3755
    %3780 = vmatprep.subr.bf16.mxu0 0
    %3781 = vmatpush1.bf16.msra.mxu0 0
    %3782 = vmatprep.subr.bf16.mxu0 0
    %3783 = vmatpush1.bf16.msra.mxu0 0
    %3784 = vmatprep.subr.bf16.mxu0 0
    %3785 = vmatpush1.bf16.msra.mxu0 0
    %3786 = vmatprep.subr.bf16.mxu0 0
    %3787 = vmatpush1.bf16.msra.mxu0 0
    %3788 = vmatprep.subr.bf16.mxu0 0
    %3789 = vmatpush1.bf16.msra.mxu0 0
    %3790 = vmatprep.subr.bf16.mxu0 0
    %3791 = vmatpush1.bf16.msra.mxu0 0
    %3792 = vmatprep.subr.bf16.mxu0 0
    %3793 = vmatpush1.bf16.msra.mxu0 0
    %3794 = vmatprep.subr.bf16.mxu0 0
    %3795 = vmatpush1.bf16.msra.mxu0 0
    %3796 = vmatprep.mubr.bf16.mxu0 0
    %3797 = vmatmul.mubr.bf16.gmra.mrb[0].mxu0 %v3684
    %v3798 = vpop.f32.mrb[0].mxu0
    %v3799 = vadd.f32 0.0, %v3798
    %v3800 = vpop.f32.mrb[0].mxu0
    %v3801 = vpop.f32.mrb[0].mxu0
    %v3802 = vadd.f32 0.0, %v3801
    %v3803 = vpop.f32.mrb[0].mxu0
    %3804 = vmatprep.mubr.bf16.mxu0 0
    %3805 = vmatmul.mubr.bf16.gmra.mrb[0].mxu0 %v3685
    %v3806 = vpop.f32.mrb[0].mxu0
    %v3807 = vadd.f32 0.0, %v3806
    %v3808 = vpop.f32.mrb[0].mxu0
    %v3809 = vpop.f32.mrb[0].mxu0
    %v3810 = vadd.f32 0.0, %v3809
    %v3811 = vpop.f32.mrb[0].mxu0
    %3812 = vmatprep.mubr.bf16.mxu0 0
    %3813 = vmatmul.mubr.bf16.gmra.mrb[0].mxu0 %v3686
    %v3814 = vpop.f32.mrb[0].mxu0
    %v3815 = vadd.f32 0.0, %v3814
    %v3816 = vpop.f32.mrb[0].mxu0
    %v3817 = vpop.f32.mrb[0].mxu0
    %v3818 = vadd.f32 0.0, %v3817
    %v3819 = vpop.f32.mrb[0].mxu0
    %3820 = vmatprep.mubr.bf16.mxu0 0
    %3821 = vmatmul.mubr.bf16.gmra.mrb[0].mxu0 %v3687
    %v3822 = vpop.f32.mrb[0].mxu0
    %v3823 = vadd.f32 0.0, %v3822
    %v3824 = vpop.f32.mrb[0].mxu0
    %v3825 = vpop.f32.mrb[0].mxu0
    %v3826 = vadd.f32 0.0, %v3825
    %v3827 = vpop.f32.mrb[0].mxu0
    %3828 = vmatprep.mubr.bf16.mxu0 0
    %3829 = vmatmul.mubr.bf16.gmra.mrb[0].mxu0 %v3688
    %v3830 = vpop.f32.mrb[0].mxu0
    %v3831 = vadd.f32 0.0, %v3830
    %v3832 = vpop.f32.mrb[0].mxu0
    %v3833 = vpop.f32.mrb[0].mxu0
    %v3834 = vadd.f32 0.0, %v3833
    %v3835 = vpop.f32.mrb[0].mxu0
    %3836 = vmatprep.mubr.bf16.mxu0 0
    %3837 = vmatmul.mubr.bf16.gmra.mrb[0].mxu0 %v3689
    %v3838 = vpop.f32.mrb[0].mxu0
    %v3839 = vadd.f32 0.0, %v3838
    %v3840 = vpop.f32.mrb[0].mxu0
    %v3841 = vpop.f32.mrb[0].mxu0
    %v3842 = vadd.f32 0.0, %v3841
    %v3843 = vpop.f32.mrb[0].mxu0
    %3844 = vmatprep.mubr.bf16.mxu0 0
    %3845 = vmatmul.mubr.bf16.gmra.mrb[0].mxu0 %v3690
    %v3846 = vpop.f32.mrb[0].mxu0
    %v3847 = vadd.f32 0.0, %v3846
    %v3848 = vpop.f32.mrb[0].mxu0
    %v3849 = vpop.f32.mrb[0].mxu0
    %v3850 = vadd.f32 0.0, %v3849
    %v3851 = vpop.f32.mrb[0].mxu0
    %3852 = vmatprep.mubr.bf16.mxu0 0
    %3853 = vmatmul.mubr.bf16.gmra.mrb[0].mxu0 %v3691
    %v3854 = vpop.f32.mrb[0].mxu0
    %v3855 = vadd.f32 0.0, %v3854
    %v3856 = vpop.f32.mrb[0].mxu0
    %v3857 = vpop.f32.mrb[0].mxu0
    %v3858 = vadd.f32 0.0, %v3857
    %v3859 = vpop.f32.mrb[0].mxu0
    %3860 = vmatprep.mubr.bf16.mxu0 0
    %3861 = vmatmul.mubr.bf16.gmra.mrb[0].mxu0 %v3692
    %v3862 = vpop.f32.mrb[0].mxu0
    %v3863 = vadd.f32 0.0, %v3862
    %v3864 = vpop.f32.mrb[0].mxu0
    %v3865 = vpop.f32.mrb[0].mxu0
    %v3866 = vadd.f32 0.0, %v3865
    %v3867 = vpop.f32.mrb[0].mxu0
    %3868 = vmatprep.mubr.bf16.mxu0 0
    %3869 = vmatmul.mubr.bf16.gmra.mrb[0].mxu0 %v3693
    %v3870 = vpop.f32.mrb[0].mxu0
    %v3871 = vadd.f32 0.0, %v3870
    %v3872 = vpop.f32.mrb[0].mxu0
    %v3873 = vpop.f32.mrb[0].mxu0
    %v3874 = vadd.f32 0.0, %v3873
    %v3875 = vpop.f32.mrb[0].mxu0
    %3876 = vmatprep.mubr.bf16.mxu0 0
    %3877 = vmatmul.mubr.bf16.gmra.mrb[0].mxu0 %v3694
    %v3878 = vpop.f32.mrb[0].mxu0
    %v3879 = vadd.f32 0.0, %v3878
    %v3880 = vpop.f32.mrb[0].mxu0
    %v3881 = vpop.f32.mrb[0].mxu0
    %v3882 = vadd.f32 0.0, %v3881
    %v3883 = vpop.f32.mrb[0].mxu0
    %3884 = vmatprep.mubr.bf16.mxu0 0
    %3885 = vmatmul.mubr.bf16.gmra.mrb[0].mxu0 %v3695
    %v3886 = vpop.f32.mrb[0].mxu0
    %v3887 = vadd.f32 0.0, %v3886
    %v3888 = vpop.f32.mrb[0].mxu0
    %v3889 = vpop.f32.mrb[0].mxu0
    %v3890 = vadd.f32 0.0, %v3889
    %v3891 = vpop.f32.mrb[0].mxu0
    %3892 = vmatprep.mubr.bf16.mxu0 0
    %3893 = vmatmul.mubr.bf16.gmra.mrb[0].mxu0 %v3696
    %v3894 = vpop.f32.mrb[0].mxu0
    %v3895 = vadd.f32 0.0, %v3894
    %v3896 = vpop.f32.mrb[0].mxu0
    %v3897 = vpop.f32.mrb[0].mxu0
    %v3898 = vadd.f32 0.0, %v3897
    %v3899 = vpop.f32.mrb[0].mxu0
    %3900 = vmatprep.mubr.bf16.mxu0 0
    %3901 = vmatmul.mubr.bf16.gmra.mrb[0].mxu0 %v3697
    %v3902 = vpop.f32.mrb[0].mxu0
    %v3903 = vadd.f32 0.0, %v3902
    %v3904 = vpop.f32.mrb[0].mxu0
    %v3905 = vpop.f32.mrb[0].mxu0
    %v3906 = vadd.f32 0.0, %v3905
    %v3907 = vpop.f32.mrb[0].mxu0
    %3908 = vmatprep.mubr.bf16.mxu0 0
    %3909 = vmatmul.mubr.bf16.gmra.mrb[0].mxu0 %v3698
    %v3910 = vpop.f32.mrb[0].mxu0
    %v3911 = vadd.f32 0.0, %v3910
    %v3912 = vpop.f32.mrb[0].mxu0
    %v3913 = vpop.f32.mrb[0].mxu0
    %v3914 = vadd.f32 0.0, %v3913
    %v3915 = vpop.f32.mrb[0].mxu0
    %3916 = vmatprep.mubr.bf16.mxu0 0
    %3917 = vmatmul.mubr.bf16.gmra.mrb[0].mxu0 %v3699
    %v3918 = vpop.f32.mrb[0].mxu0
    %v3919 = vadd.f32 0.0, %v3918
    %v3920 = vpop.f32.mrb[0].mxu0
    %v3921 = vpop.f32.mrb[0].mxu0
    %v3922 = vadd.f32 0.0, %v3921
    %v3923 = vpop.f32.mrb[0].mxu0
    %3924 = vdwg.mxu0
    %v3925 = vpack.c.bf16 %v3802, %v3799
    %v3926 = vpack.c.bf16 %v3810, %v3807
    %v3927 = vpack.c.bf16 %v3818, %v3815
    %v3928 = vpack.c.bf16 %v3826, %v3823
    %v3929 = vpack.c.bf16 %v3834, %v3831
    %v3930 = vpack.c.bf16 %v3842, %v3839
    %v3931 = vpack.c.bf16 %v3850, %v3847
    %v3932 = vpack.c.bf16 %v3858, %v3855
    %v3933 = vpack.c.bf16 %v3866, %v3863
    %v3934 = vpack.c.bf16 %v3874, %v3871
    %v3935 = vpack.c.bf16 %v3882, %v3879
    %v3936 = vpack.c.bf16 %v3890, %v3887
    %v3937 = vpack.c.bf16 %v3898, %v3895
    %v3938 = vpack.c.bf16 %v3906, %v3903
    %v3939 = vpack.c.bf16 %v3914, %v3911
    %v3940 = vpack.c.bf16 %v3922, %v3919
    %v3957 = vunpack.c.l.b16 %v3925
    %v3958 = vunpack.c.h.b16 %v3925
    %v3959 = vunpack.c.l.b16 %v3926
    %v3960 = vunpack.c.h.b16 %v3926
    %v3961 = vunpack.c.l.b16 %v3927
    %v3962 = vunpack.c.h.b16 %v3927
    %v3963 = vunpack.c.l.b16 %v3928
    %v3964 = vunpack.c.h.b16 %v3928
    %v3965 = vunpack.c.l.b16 %v3929
    %v3966 = vunpack.c.h.b16 %v3929
    %v3967 = vunpack.c.l.b16 %v3930
    %v3968 = vunpack.c.h.b16 %v3930
    %v3969 = vunpack.c.l.b16 %v3931
    %v3970 = vunpack.c.h.b16 %v3931
    %v3971 = vunpack.c.l.b16 %v3932
    %v3972 = vunpack.c.h.b16 %v3932
    %v3973 = vunpack.c.l.b16 %v3933
    %v3974 = vunpack.c.h.b16 %v3933
    %v3975 = vunpack.c.l.b16 %v3934
    %v3976 = vunpack.c.h.b16 %v3934
    %v3977 = vunpack.c.l.b16 %v3935
    %v3978 = vunpack.c.h.b16 %v3935
    %v3979 = vunpack.c.l.b16 %v3936
    %v3980 = vunpack.c.h.b16 %v3936
    %v3981 = vunpack.c.l.b16 %v3937
    %v3982 = vunpack.c.h.b16 %v3937
    %v3983 = vunpack.c.l.b16 %v3938
    %v3984 = vunpack.c.h.b16 %v3938
    %v3985 = vunpack.c.l.b16 %v3939
    %v3986 = vunpack.c.h.b16 %v3939
    %v3987 = vunpack.c.l.b16 %v3940
    %v3988 = vunpack.c.h.b16 %v3940
    %v3989 = vpack.c.b16 %v3957, %v3957
    %v3990 = vpack.c.b16 %v3958, %v3958
    %v3991 = vpack.c.b16 %v3959, %v3959
    %v3992 = vpack.c.b16 %v3960, %v3960
    %v3993 = vpack.c.b16 %v3961, %v3961
    %v3994 = vpack.c.b16 %v3962, %v3962
    %v3995 = vpack.c.b16 %v3963, %v3963
    %v3996 = vpack.c.b16 %v3964, %v3964
    %v3997 = vpack.c.b16 %v3965, %v3965
    %v3998 = vpack.c.b16 %v3966, %v3966
    %v3999 = vpack.c.b16 %v3967, %v3967
    %v4000 = vpack.c.b16 %v3968, %v3968
    %v4001 = vpack.c.b16 %v3969, %v3969
    %v4002 = vpack.c.b16 %v3970, %v3970
    %v4003 = vpack.c.b16 %v3971, %v3971
    %v4004 = vpack.c.b16 %v3972, %v3972
    %v4005 = vpack.c.b16 %v3973, %v3973
    %v4006 = vpack.c.b16 %v3974, %v3974
    %v4007 = vpack.c.b16 %v3975, %v3975
    %v4008 = vpack.c.b16 %v3976, %v3976
    %v4009 = vpack.c.b16 %v3977, %v3977
    %v4010 = vpack.c.b16 %v3978, %v3978
    %v4011 = vpack.c.b16 %v3979, %v3979
    %v4012 = vpack.c.b16 %v3980, %v3980
    %v4013 = vpack.c.b16 %v3981, %v3981
    %v4014 = vpack.c.b16 %v3982, %v3982
    %v4015 = vpack.c.b16 %v3983, %v3983
    %v4016 = vpack.c.b16 %v3984, %v3984
    %v4017 = vpack.c.b16 %v3985, %v3985
    %v4018 = vpack.c.b16 %v3986, %v3986
    %v4019 = vpack.c.b16 %v3987, %v3987
    %v4020 = vpack.c.b16 %v3988, %v3988
    %4053 = vst [vmem:[#allocation2] sm:$0xf] %v3989
    %4054 = vst [vmem:[#allocation2 + $0x4] sm:$0xf] %v3990
    %4055 = vst [vmem:[#allocation2 + $0x8] sm:$0xf] %v3991
    %4056 = vst [vmem:[#allocation2 + $0xc] sm:$0xf] %v3992
    %4057 = vst [vmem:[#allocation2 + $0x10] sm:$0xf] %v3993
    %4058 = vst [vmem:[#allocation2 + $0x14] sm:$0xf] %v3994
    %4059 = vst [vmem:[#allocation2 + $0x18] sm:$0xf] %v3995
    %4060 = vst [vmem:[#allocation2 + $0x1c] sm:$0xf] %v3996
    %4061 = vst [vmem:[#allocation2 + $0x20] sm:$0xf] %v3997
    %4062 = vst [vmem:[#allocation2 + $0x24] sm:$0xf] %v3998
    %4063 = vst [vmem:[#allocation2 + $0x28] sm:$0xf] %v3999
    %4064 = vst [vmem:[#allocation2 + $0x2c] sm:$0xf] %v4000
    %4065 = vst [vmem:[#allocation2 + $0x30] sm:$0xf] %v4001
    %4066 = vst [vmem:[#allocation2 + $0x34] sm:$0xf] %v4002
    %4067 = vst [vmem:[#allocation2 + $0x38] sm:$0xf] %v4003
    %4068 = vst [vmem:[#allocation2 + $0x3c] sm:$0xf] %v4004
    %4069 = vst [vmem:[#allocation2 + $0x40] sm:$0xf] %v4005
    %4070 = vst [vmem:[#allocation2 + $0x44] sm:$0xf] %v4006
    %4071 = vst [vmem:[#allocation2 + $0x48] sm:$0xf] %v4007
    %4072 = vst [vmem:[#allocation2 + $0x4c] sm:$0xf] %v4008
    %4073 = vst [vmem:[#allocation2 + $0x50] sm:$0xf] %v4009
    %4074 = vst [vmem:[#allocation2 + $0x54] sm:$0xf] %v4010
    %4075 = vst [vmem:[#allocation2 + $0x58] sm:$0xf] %v4011
    %4076 = vst [vmem:[#allocation2 + $0x5c] sm:$0xf] %v4012
    %4077 = vst [vmem:[#allocation2 + $0x60] sm:$0xf] %v4013
    %4078 = vst [vmem:[#allocation2 + $0x64] sm:$0xf] %v4014
    %4079 = vst [vmem:[#allocation2 + $0x68] sm:$0xf] %v4015
    %4080 = vst [vmem:[#allocation2 + $0x6c] sm:$0xf] %v4016
    %4081 = vst [vmem:[#allocation2 + $0x70] sm:$0xf] %v4017
    %4082 = vst [vmem:[#allocation2 + $0x74] sm:$0xf] %v4018
    %4083 = vst [vmem:[#allocation2 + $0x78] sm:$0xf] %v4019
    %4084 = vst [vmem:[#allocation2 + $0x7c] sm:$0xf] %v4020
    // Predicated region
    $region18: #{tpu_custom_call.1} parent=1 // pred_check
      _
    $region19: #{tpu_custom_call.1} parent=1 // pred_check_branch
      %4086 = sbr.rel (0) target = $region21
    $region20: #{tpu_custom_call.1} parent=1 // pred_region
      %s4088 = ssub.s32 2048, 2048
      %4089 = vsyncadd [#allocation3], %s4088
      %s4090 = sshll.u32 [#allocation2], 4
      %s4091 = int_to_ptr.vmem [resolvable:$true] %s4090
      %4096 = dma.vmem_to_hbm [thread:$0]  %s4091, 2048, %s4, [#allocation3], 64, 64, 4
    $region21: #{tpu_custom_call.1} parent=1 // pred_fallthru
      _
    // Predicated region
    $region22: #{tpu_custom_call.1} parent=1 // pred_check
      _
    $region23: #{tpu_custom_call.1} parent=1 // pred_check_branch
      %4098 = sbr.rel (0) target = $region25
    $region24: #{tpu_custom_call.1} parent=1 // pred_region
      %4099 = dma.done [#allocation3], 2048
    $region25: #{tpu_custom_call.1} parent=1 // pred_fallthru
      _
    %4100 = vsyncpa [#allocation3], 1

</llo_original>
